<compile_context>
chip_gen: v7x
topology: tpu7x:2x2x1
jax: 0.10.0
libtpu: 0.0.40
codegen_flags: <defaults>
</compile_context>

<pallas_src>
import functools

import jax
import jax.numpy as jnp
import numpy as np
from jax import lax
from jax.experimental import pallas as pl
from jax.experimental.pallas import tpu as pltpu


def _tree_sum_terms(n_terms, term_fn, group=4):
    """Sum term_fn(i), i in [0, n_terms), using `group` independent accumulators
    plus a final tree add -- avoids one long serialized MXU-pop -> VPU-add chain."""
    partials = []
    for g0 in range(0, n_terms, group):
        acc = term_fn(g0)
        for t in range(g0 + 1, min(g0 + group, n_terms)):
            acc = acc + term_fn(t)
        partials.append(acc)
    while len(partials) > 1:
        nxt = [partials[i] + partials[i + 1] for i in range(0, len(partials) - 1, 2)]
        if len(partials) % 2:
            nxt.append(partials[-1])
        partials = nxt
    return partials[0]


# ---------------------------------------------------------------------------
# Fused forward-pass kernel (single invocation, everything VMEM-resident)
# ---------------------------------------------------------------------------
def _bc_fused_kernel(
    cols1_ref,   # (n_off*n_pos*B, kkc+1) bf16  conv1 patches in conv2-im2col order
    slabw_ref,   # (max(n_off,n_pos)*hidden, 2*hidden) bf16  [conv2 blocks | fc blocks]
    slabm_ref,   # (rows_m, LANES) bf16  misc weights / biases / padded head weights
    state_ref,   # (B, state_dim) f32
    out_ref,     # (B, LANES) f32  lanes = [action | std_image | std_state | 0...]
    *, batch, hidden, state_dim, action_dim, n_off, n_pos, kkc, lanes,
    off_wst1, off_wst2, off_whi, off_whs,
    off_b2, off_bfc, off_bst1, off_bst2, off_bhi, off_bhs,
):
    f32 = jnp.float32
    bf16 = jnp.bfloat16

    def relu(v):
        return jnp.maximum(v, 0.0)

    def softplus(v):
        # numerically-stable softplus: max(v, 0) + log(1 + exp(-|v|))
        return jnp.maximum(v, 0.0) + jnp.log(1.0 + jnp.exp(-jnp.abs(v)))

    def mm(a_, b_):
        # bf16 operands (single-pass MXU), f32 accumulation.
        return jnp.dot(a_, b_, preferred_element_type=f32)

    # ------------------------- image branch -------------------------
    # conv1 + bias + ReLU.  Patch rows are pre-duplicated into conv2's im2col
    # order (offset, out-pos, batch).  Conv2's zero padding is handled by
    # all-zero patch rows WITH a zero mask column; the conv1 bias is folded in
    # as weight row `kkc` against that mask column, so padded rows stay exactly
    # zero after bias+ReLU.  Do NOT "simplify" this back to a post-matmul bias.
    w1aug = slabm_ref[0:kkc + 1, 0:hidden]                       # (kkc+1, hidden)
    h1 = relu(mm(cols1_ref[...], w1aug)).astype(bf16)            # (n_off*n_pos*B, hidden)

    rows2 = n_pos * batch
    # conv2 + ReLU: no gather matmul -- each kernel offset is a static row slice.
    y2pre = _tree_sum_terms(
        n_off,
        lambda s: mm(h1[s * rows2:(s + 1) * rows2, :],
                     slabw_ref[s * hidden:(s + 1) * hidden, 0:hidden]))
    y2 = relu(y2pre + slabm_ref[off_b2:off_b2 + 1, 0:hidden]).astype(bf16)   # (rows2, hidden)

    # fc + ReLU: the PyTorch NCHW flatten is a static B-row slice per position.
    featpre = _tree_sum_terms(
        n_pos,
        lambda p: mm(y2[p * batch:(p + 1) * batch, :],
                     slabw_ref[p * hidden:(p + 1) * hidden, hidden:2 * hidden]))
    feat = relu(featpre + slabm_ref[off_bfc:off_bfc + 1, 0:hidden]).astype(bf16)

    # merged mu/std image head, already padded to LANES output columns.
    heads_i = (mm(feat, slabm_ref[off_whi:off_whi + hidden, :])
               + slabm_ref[off_bhi:off_bhi + 1, :].astype(f32))              # (B, LANES)

    # ------------------------- state branch -------------------------
    st = state_ref[...].astype(bf16)
    g = relu(mm(st, slabm_ref[off_wst1:off_wst1 + state_dim, 0:hidden])
             + slabm_ref[off_bst1:off_bst1 + 1, 0:hidden]).astype(bf16)
    g = relu(mm(g, slabm_ref[off_wst2:off_wst2 + hidden, 0:hidden])
             + slabm_ref[off_bst2:off_bst2 + 1, 0:hidden]).astype(bf16)
    heads_s = (mm(g, slabm_ref[off_whs:off_whs + hidden, :])
               + slabm_ref[off_bhs:off_bhs + 1, :].astype(f32))              # (B, LANES)

    # --------------- merged heads + deterministic select -------------
    # heads_i lanes: [mu_image | std_image_raw | 0         | 0...]
    # heads_s lanes: [mu_state | 0             | std_state_raw | 0...]
    a = action_dim
    col = lax.broadcasted_iota(jnp.int32, heads_i.shape, 1)
    m_mu = col < a
    m_si = (col >= a) & (col < 2 * a)
    m_ss = (col >= 2 * a) & (col < 3 * a)

    sp_i = softplus(heads_i)
    sp_s = softplus(heads_s)
    neg_inf = jnp.full_like(sp_i, -jnp.inf)
    max_i = jnp.max(jnp.where(m_si, sp_i, neg_inf), axis=-1, keepdims=True)
    max_s = jnp.max(jnp.where(m_ss, sp_s, neg_inf), axis=-1, keepdims=True)
    # PyTorch: idx = (std_image.max(-1) > std_state.max(-1)); idx==1 -> mu_state.
    pick_state = max_i > max_s                                   # (B, 1)

    mu_sel = jnp.where(pick_state, heads_s, heads_i)
    # Single dense lane-wide store of the whole output ref (no zero-fill WAW).
    out_ref[...] = (jnp.where(m_mu, mu_sel, 0.0)
                    + jnp.where(m_si, sp_i, 0.0)
                    + jnp.where(m_ss, sp_s, 0.0))


# ---------------------------------------------------------------------------
# Host-side layout glue (pure data movement in the jitted wrapper)
# ---------------------------------------------------------------------------
def _conv1_patches_in_conv2_order(x, k, stride, pad, h1, w1, h2, w2):
    """(B,C,H,W) -> (k*k*h2*w2*B, k*k*C+1) bf16.

    Rows ordered (conv2 offset, conv2 out-pos, batch); features ordered
    (kh1, kw1, c) plus a trailing validity column (1 valid / 0 = conv2 zero pad).
    """
    b, c = x.shape[0], x.shape[1]
    xp = jnp.pad(x, ((0, 0), (0, 0), (pad, pad), (pad, pad)))
    pats = jnp.stack(
        [xp[:, :, kh:kh + stride * h1:stride, kw:kw + stride * w1:stride]
         for kh in range(k) for kw in range(k)], axis=1)          # (B, kk, C, h1, w1)
    cols1 = pats.transpose(0, 3, 4, 1, 2).reshape(b, h1, w1, k * k * c)
    cols1 = jnp.concatenate([cols1, jnp.ones((b, h1, w1, 1), cols1.dtype)], axis=-1)
    cols1 = jnp.pad(cols1, ((0, 0), (pad, pad), (pad, pad), (0, 0)))
    blocks = [cols1[:, kh:kh + stride * h2:stride, kw:kw + stride * w2:stride, :]
              for kh in range(k) for kw in range(k)]              # each (B, h2, w2, kkc+1)
    cols = jnp.stack(blocks, axis=0).transpose(0, 2, 3, 1, 4)     # (kk, h2, w2, B, F)
    return cols.reshape(k * k * h2 * w2 * b, k * k * c + 1).astype(jnp.bfloat16)


def build_bc_agent_forward(params, *, batch, img_hw):
    """Returns a jitted forward(s_image, s_state) -> (action, std) for a fixed batch."""
    k, stride, pad = 4, 2, 1
    pi, ps = params["image"], params["state"]
    hidden = int(pi["conv1_w"].shape[0])
    nc = int(pi["conv1_w"].shape[1])
    a = int(pi["mu_w"].shape[1])
    state_dim = int(ps["fc1_w"].shape[0])
    h1 = (img_hw + 2 * pad - k) // stride + 1
    h2 = (h1 + 2 * pad - k) // stride + 1
    n_pos, n_off = h2 * h2, k * k
    kkc = k * k * nc
    LANES = 128
    assert 3 * a <= LANES and hidden <= LANES

    # ------- one-time weight prepacking into two lane-dense bf16 slabs -------
    w1p = pi["conv1_w"].transpose(2, 3, 1, 0).reshape(kkc, hidden)
    w1aug = jnp.concatenate([w1p, pi["conv1_b"][None, :]], axis=0)   # bias as row kkc
    w2all = pi["conv2_w"].transpose(2, 3, 1, 0).reshape(n_off * hidden, hidden)
    wfcall = (pi["fc_w"].reshape(hidden, n_pos, hidden)
              .transpose(1, 0, 2).reshape(n_pos * hidden, hidden))

    rows_w = max(n_off, n_pos) * hidden
    slabw = np.zeros((rows_w, 2 * hidden), np.float32)
    slabw[0:n_off * hidden, 0:hidden] = np.asarray(w2all)
    slabw[0:n_pos * hidden, hidden:2 * hidden] = np.asarray(wfcall)

    def align16(v):
        return ((v + 15) // 16) * 16

    off_wst2 = align16(kkc + 1)
    off_wst1 = align16(off_wst2 + hidden)
    off_whi = align16(off_wst1 + state_dim)
    off_whs = align16(off_whi + hidden)
    off_bias = align16(off_whs + hidden)
    off_b2, off_bfc, off_bst1, off_bst2, off_bhi, off_bhs = (off_bias + i for i in range(6))
    rows_m = off_bias + 6

    whi = np.zeros((hidden, LANES), np.float32)
    whi[:, 0:a] = np.asarray(pi["mu_w"])
    whi[:, a:2 * a] = np.asarray(pi["std_w"])
    whs = np.zeros((hidden, LANES), np.float32)
    whs[:, 0:a] = np.asarray(ps["mu_w"])
    whs[:, 2 * a:3 * a] = np.asarray(ps["std_w"])
    bhi = np.zeros((LANES,), np.float32)
    bhi[0:a] = np.asarray(pi["mu_b"])
    bhi[a:2 * a] = np.asarray(pi["std_b"])
    bhs = np.zeros((LANES,), np.float32)
    bhs[0:a] = np.asarray(ps["mu_b"])
    bhs[2 * a:3 * a] = np.asarray(ps["std_b"])

    slabm = np.zeros((rows_m, LANES), np.float32)
    slabm[0:kkc + 1, 0:hidden] = np.asarray(w1aug)
    slabm[off_wst2:off_wst2 + hidden, 0:hidden] = np.asarray(ps["fc2_w"])
    slabm[off_wst1:off_wst1 + state_dim, 0:hidden] = np.asarray(ps["fc1_w"])
    slabm[off_whi:off_whi + hidden, :] = whi
    slabm[off_whs:off_whs + hidden, :] = whs
    slabm[off_b2, 0:hidden] = np.asarray(pi["conv2_b"])
    slabm[off_bfc, 0:hidden] = np.asarray(pi["fc_b"])
    slabm[off_bst1, 0:hidden] = np.asarray(ps["fc1_b"])
    slabm[off_bst2, 0:hidden] = np.asarray(ps["fc2_b"])
    slabm[off_bhi, :] = bhi
    slabm[off_bhs, :] = bhs

    slab_w = jnp.asarray(slabw, jnp.bfloat16)     # dense (512, 64) conv2/fc weight blocks
    slab_m = jnp.asarray(slabm, jnp.bfloat16)     # everything else, one slab

    fused = pl.pallas_call(
        functools.partial(
            _bc_fused_kernel, batch=batch, hidden=hidden, state_dim=state_dim,
            action_dim=a, n_off=n_off, n_pos=n_pos, kkc=kkc, lanes=LANES,
            off_wst1=off_wst1, off_wst2=off_wst2, off_whi=off_whi, off_whs=off_whs,
            off_b2=off_b2, off_bfc=off_bfc, off_bst1=off_bst1, off_bst2=off_bst2,
            off_bhi=off_bhi, off_bhs=off_bhs),
        out_shape=jax.ShapeDtypeStruct((batch, LANES), jnp.float32),
        in_specs=[pl.BlockSpec(memory_space=pltpu.MemorySpace.VMEM)] * 4,
        out_specs=pl.BlockSpec(memory_space=pltpu.MemorySpace.VMEM),
    )

    @jax.jit
    def forward(s_image, s_state):
        # conv1 im2col (duplicated into conv2's im2col order): XLA glue feeding a
        # single pre-packed patch tile so conv1+conv2 need no in-kernel gather.
        cols1 = _conv1_patches_in_conv2_order(s_image, k, stride, pad, h1, h1, h2, h2)
        slab = fused(cols1, slab_w, slab_m, s_state)
        action = slab[:, :a]
        std = jnp.stack([slab[:, a:2 * a], slab[:, 2 * a:3 * a]], axis=1)
        return action, std

    return forward


# ---------------------------------------------------------------------------
# Deterministic parameter initialization (PyTorch-style layouts)
# ---------------------------------------------------------------------------
def _init(key, shape):
    fan_in = shape[0] if len(shape) == 2 else int(np.prod(shape[1:]))
    return (jax.random.normal(key, shape, jnp.float32) / np.sqrt(fan_in)).astype(
        jnp.float32)


def init_params(key, hidden_dim, action_dim, nc, state_dim, img_hw):
    ks = jax.random.split(key, 9)
    flat = hidden_dim * (img_hw // 4) * (img_hw // 4)
    image = {
        "conv1_w": _init(ks[0], (hidden_dim, nc, 4, 4)),
        "conv1_b": jnp.zeros((hidden_dim,), jnp.float32),
        "conv2_w": _init(ks[1], (hidden_dim, hidden_dim, 4, 4)),
        "conv2_b": jnp.zeros((hidden_dim,), jnp.float32),
        "fc_w": _init(ks[2], (flat, hidden_dim)),
        "fc_b": jnp.zeros((hidden_dim,), jnp.float32),
        "mu_w": _init(ks[3], (hidden_dim, action_dim)),
        "mu_b": jnp.zeros((action_dim,), jnp.float32),
        "std_w": _init(ks[4], (hidden_dim, action_dim)),
        "std_b": jnp.zeros((action_dim,), jnp.float32),
    }
    state = {
        "fc1_w": _init(ks[5], (state_dim, hidden_dim)),
        "fc1_b": jnp.zeros((hidden_dim,), jnp.float32),
        "fc2_w": _init(ks[6], (hidden_dim, hidden_dim)),
        "fc2_b": jnp.zeros((hidden_dim,), jnp.float32),
        "mu_w": _init(ks[7], (hidden_dim, action_dim)),
        "mu_b": jnp.zeros((action_dim,), jnp.float32),
        "std_w": _init(ks[8], (hidden_dim, action_dim)),
        "std_b": jnp.zeros((action_dim,), jnp.float32),
    }
    return {"image": image, "state": state}


# ---------------------------------------------------------------------------
# Pure-JAX reference (same assumed encoder architecture)
# ---------------------------------------------------------------------------
def _reference_forward(params, s_image, s_state):
    pi, ps = params["image"], params["state"]
    prec = lax.Precision.HIGHEST

    def softplus(x):
        return jnp.maximum(x, 0.0) + jnp.log(1.0 + jnp.exp(-jnp.abs(x)))

    def conv(x, w, b):
        y = lax.conv_general_dilated(
            x, w, (2, 2), [(1, 1), (1, 1)],
            dimension_numbers=("NCHW", "OIHW", "NCHW"), precision=prec)
        return jnp.maximum(y + b[None, :, None, None], 0.0)

    h = conv(s_image, pi["conv1_w"], pi["conv1_b"])
    h = conv(h, pi["conv2_w"], pi["conv2_b"])
    h = h.reshape(h.shape[0], -1)                       # PyTorch-style NCHW flatten
    feat = jnp.maximum(jnp.dot(h, pi["fc_w"], precision=prec) + pi["fc_b"], 0.0)
    mu_i = jnp.dot(feat, pi["mu_w"], precision=prec) + pi["mu_b"]
    std_i = softplus(jnp.dot(feat, pi["std_w"], precision=prec) + pi["std_b"])
    g = jnp.maximum(jnp.dot(s_state, ps["fc1_w"], precision=prec) + ps["fc1_b"], 0.0)
    g = jnp.maximum(jnp.dot(g, ps["fc2_w"], precision=prec) + ps["fc2_b"], 0.0)
    mu_s = jnp.dot(g, ps["mu_w"], precision=prec) + ps["mu_b"]
    std_s = softplus(jnp.dot(g, ps["std_w"], precision=prec) + ps["std_b"])
    return mu_i, std_i, mu_s, std_s


if __name__ == "__main__":
    key = jax.random.PRNGKey(0)
    k_param, k_img, k_state = jax.random.split(key, 3)

    B, NC, HW, STATE_DIM = 2, 3, 16, 8
    HIDDEN, ACTION = 32, 2

    params = init_params(k_param, HIDDEN, ACTION, NC, STATE_DIM, HW)
    s_image = jax.random.normal(k_img, (B, NC, HW, HW), jnp.float32)
    s_state = jax.random.normal(k_state, (B, STATE_DIM), jnp.float32)

    forward = build_bc_agent_forward(params, batch=B, img_hw=HW)
    action, std = forward(s_image, s_state)
    jax.block_until_ready((action, std))

    assert action.shape == (B, ACTION)
    assert std.shape == (B, 2, ACTION)
    assert bool(jnp.all(std > 0.0))

    # Correctness check against the f32 HIGHEST-precision pure-JAX reference.
    # The kernel uses bf16 MXU operands (f32 accumulate), hence the 3e-2 band.
    mu_i, std_i, mu_s, std_s = _reference_forward(params, s_image, s_state)
    np.testing.assert_allclose(np.asarray(std[:, 0]), np.asarray(std_i),
                               rtol=3e-2, atol=3e-2)
    np.testing.assert_allclose(np.asarray(std[:, 1]), np.asarray(std_s),
                               rtol=3e-2, atol=3e-2)
    pick = (np.asarray(std[:, 0]).max(-1, keepdims=True)
            > np.asarray(std[:, 1]).max(-1, keepdims=True))
    expected_action = np.where(pick, np.asarray(mu_s), np.asarray(mu_i))
    np.testing.assert_allclose(np.asarray(action), expected_action,
                               rtol=3e-2, atol=3e-2)

    print("KERNEL_OK")
</pallas_src>

<mosaic_0001>
module attributes {stable_mosaic.version = 11 : i64} {
  func.func @_bc_fused_kernel(%arg0: memref<512x49xbf16, #tpu.memory_space<vmem>>, %arg1: memref<512x64xbf16, #tpu.memory_space<vmem>>, %arg2: memref<182x128xbf16, #tpu.memory_space<vmem>>, %arg3: memref<2x8xf32, #tpu.memory_space<vmem>>, %arg4: memref<2x128xf32, #tpu.memory_space<vmem>>) attributes {dimension_semantics = [], scalar_prefetch = 0 : i64, scratch_operands = 0 : i64, tpu.core_type = #tpu.core_type<tc>} {
    %c0 = arith.constant 0 : index
    %c0_0 = arith.constant 0 : index
    %0 = vector.load %arg2[%c0, %c0_0] : memref<182x128xbf16, #tpu.memory_space<vmem>>, vector<49x32xbf16>
    %c0_1 = arith.constant 0 : index
    %c0_2 = arith.constant 0 : index
    %1 = vector.load %arg0[%c0_1, %c0_2] : memref<512x49xbf16, #tpu.memory_space<vmem>>, vector<512x49xbf16>
    %cst = arith.constant dense<0.000000e+00> : vector<512x32xf32>
    %2 = tpu.matmul %1, %0, %cst {dimension_numbers = #tpu.dot_dimension_numbers<[1], [0], [0], [1], [0, 0, 1, 1], [], []>} : vector<512x49xbf16>, vector<49x32xbf16>, vector<512x32xf32> -> vector<512x32xf32>
    %cst_3 = arith.constant 0.000000e+00 : f32
    %3 = vector.broadcast %cst_3 : f32 to vector<512x32xf32>
    %4 = arith.maximumf %2, %3 : vector<512x32xf32>
    %5 = arith.truncf %4 : vector<512x32xf32> to vector<512x32xbf16>
    %6 = vector.extract_strided_slice %5 {offsets = [0, 0], sizes = [32, 32], strides = [1, 1]} : vector<512x32xbf16> to vector<32x32xbf16>
    %c0_4 = arith.constant 0 : index
    %c0_5 = arith.constant 0 : index
    %7 = vector.load %arg1[%c0_4, %c0_5] : memref<512x64xbf16, #tpu.memory_space<vmem>>, vector<32x32xbf16>
    %cst_6 = arith.constant dense<0.000000e+00> : vector<32x32xf32>
    %8 = tpu.matmul %6, %7, %cst_6 {dimension_numbers = #tpu.dot_dimension_numbers<[1], [0], [0], [1], [0, 0, 1, 1], [], []>} : vector<32x32xbf16>, vector<32x32xbf16>, vector<32x32xf32> -> vector<32x32xf32>
    %9 = vector.extract_strided_slice %5 {offsets = [32, 0], sizes = [32, 32], strides = [1, 1]} : vector<512x32xbf16> to vector<32x32xbf16>
    %c32 = arith.constant 32 : index
    %c0_7 = arith.constant 0 : index
    %10 = vector.load %arg1[%c32, %c0_7] : memref<512x64xbf16, #tpu.memory_space<vmem>>, vector<32x32xbf16>
    %cst_8 = arith.constant dense<0.000000e+00> : vector<32x32xf32>
    %11 = tpu.matmul %9, %10, %cst_8 {dimension_numbers = #tpu.dot_dimension_numbers<[1], [0], [0], [1], [0, 0, 1, 1], [], []>} : vector<32x32xbf16>, vector<32x32xbf16>, vector<32x32xf32> -> vector<32x32xf32>
    %12 = arith.addf %8, %11 : vector<32x32xf32>
    %13 = vector.extract_strided_slice %5 {offsets = [64, 0], sizes = [32, 32], strides = [1, 1]} : vector<512x32xbf16> to vector<32x32xbf16>
    %c64 = arith.constant 64 : index
    %c0_9 = arith.constant 0 : index
    %14 = vector.load %arg1[%c64, %c0_9] : memref<512x64xbf16, #tpu.memory_space<vmem>>, vector<32x32xbf16>
    %cst_10 = arith.constant dense<0.000000e+00> : vector<32x32xf32>
    %15 = tpu.matmul %13, %14, %cst_10 {dimension_numbers = #tpu.dot_dimension_numbers<[1], [0], [0], [1], [0, 0, 1, 1], [], []>} : vector<32x32xbf16>, vector<32x32xbf16>, vector<32x32xf32> -> vector<32x32xf32>
    %16 = arith.addf %12, %15 : vector<32x32xf32>
    %17 = vector.extract_strided_slice %5 {offsets = [96, 0], sizes = [32, 32], strides = [1, 1]} : vector<512x32xbf16> to vector<32x32xbf16>
    %c96 = arith.constant 96 : index
    %c0_11 = arith.constant 0 : index
    %18 = vector.load %arg1[%c96, %c0_11] : memref<512x64xbf16, #tpu.memory_space<vmem>>, vector<32x32xbf16>
    %cst_12 = arith.constant dense<0.000000e+00> : vector<32x32xf32>
    %19 = tpu.matmul %17, %18, %cst_12 {dimension_numbers = #tpu.dot_dimension_numbers<[1], [0], [0], [1], [0, 0, 1, 1], [], []>} : vector<32x32xbf16>, vector<32x32xbf16>, vector<32x32xf32> -> vector<32x32xf32>
    %20 = arith.addf %16, %19 : vector<32x32xf32>
    %21 = vector.extract_strided_slice %5 {offsets = [128, 0], sizes = [32, 32], strides = [1, 1]} : vector<512x32xbf16> to vector<32x32xbf16>
    %c128 = arith.constant 128 : index
    %c0_13 = arith.constant 0 : index
    %22 = vector.load %arg1[%c128, %c0_13] : memref<512x64xbf16, #tpu.memory_space<vmem>>, vector<32x32xbf16>
    %cst_14 = arith.constant dense<0.000000e+00> : vector<32x32xf32>
    %23 = tpu.matmul %21, %22, %cst_14 {dimension_numbers = #tpu.dot_dimension_numbers<[1], [0], [0], [1], [0, 0, 1, 1], [], []>} : vector<32x32xbf16>, vector<32x32xbf16>, vector<32x32xf32> -> vector<32x32xf32>
    %24 = vector.extract_strided_slice %5 {offsets = [160, 0], sizes = [32, 32], strides = [1, 1]} : vector<512x32xbf16> to vector<32x32xbf16>
    %c160 = arith.constant 160 : index
    %c0_15 = arith.constant 0 : index
    %25 = vector.load %arg1[%c160, %c0_15] : memref<512x64xbf16, #tpu.memory_space<vmem>>, vector<32x32xbf16>
    %cst_16 = arith.constant dense<0.000000e+00> : vector<32x32xf32>
    %26 = tpu.matmul %24, %25, %cst_16 {dimension_numbers = #tpu.dot_dimension_numbers<[1], [0], [0], [1], [0, 0, 1, 1], [], []>} : vector<32x32xbf16>, vector<32x32xbf16>, vector<32x32xf32> -> vector<32x32xf32>
    %27 = arith.addf %23, %26 : vector<32x32xf32>
    %28 = vector.extract_strided_slice %5 {offsets = [192, 0], sizes = [32, 32], strides = [1, 1]} : vector<512x32xbf16> to vector<32x32xbf16>
    %c192 = arith.constant 192 : index
    %c0_17 = arith.constant 0 : index
    %29 = vector.load %arg1[%c192, %c0_17] : memref<512x64xbf16, #tpu.memory_space<vmem>>, vector<32x32xbf16>
    %cst_18 = arith.constant dense<0.000000e+00> : vector<32x32xf32>
    %30 = tpu.matmul %28, %29, %cst_18 {dimension_numbers = #tpu.dot_dimension_numbers<[1], [0], [0], [1], [0, 0, 1, 1], [], []>} : vector<32x32xbf16>, vector<32x32xbf16>, vector<32x32xf32> -> vector<32x32xf32>
    %31 = arith.addf %27, %30 : vector<32x32xf32>
    %32 = vector.extract_strided_slice %5 {offsets = [224, 0], sizes = [32, 32], strides = [1, 1]} : vector<512x32xbf16> to vector<32x32xbf16>
    %c224 = arith.constant 224 : index
    %c0_19 = arith.constant 0 : index
    %33 = vector.load %arg1[%c224, %c0_19] : memref<512x64xbf16, #tpu.memory_space<vmem>>, vector<32x32xbf16>
    %cst_20 = arith.constant dense<0.000000e+00> : vector<32x32xf32>
    %34 = tpu.matmul %32, %33, %cst_20 {dimension_numbers = #tpu.dot_dimension_numbers<[1], [0], [0], [1], [0, 0, 1, 1], [], []>} : vector<32x32xbf16>, vector<32x32xbf16>, vector<32x32xf32> -> vector<32x32xf32>
    %35 = arith.addf %31, %34 : vector<32x32xf32>
    %36 = vector.extract_strided_slice %5 {offsets = [256, 0], sizes = [32, 32], strides = [1, 1]} : vector<512x32xbf16> to vector<32x32xbf16>
    %c256 = arith.constant 256 : index
    %c0_21 = arith.constant 0 : index
    %37 = vector.load %arg1[%c256, %c0_21] : memref<512x64xbf16, #tpu.memory_space<vmem>>, vector<32x32xbf16>
    %cst_22 = arith.constant dense<0.000000e+00> : vector<32x32xf32>
    %38 = tpu.matmul %36, %37, %cst_22 {dimension_numbers = #tpu.dot_dimension_numbers<[1], [0], [0], [1], [0, 0, 1, 1], [], []>} : vector<32x32xbf16>, vector<32x32xbf16>, vector<32x32xf32> -> vector<32x32xf32>
    %39 = vector.extract_strided_slice %5 {offsets = [288, 0], sizes = [32, 32], strides = [1, 1]} : vector<512x32xbf16> to vector<32x32xbf16>
    %c288 = arith.constant 288 : index
    %c0_23 = arith.constant 0 : index
    %40 = vector.load %arg1[%c288, %c0_23] : memref<512x64xbf16, #tpu.memory_space<vmem>>, vector<32x32xbf16>
    %cst_24 = arith.constant dense<0.000000e+00> : vector<32x32xf32>
    %41 = tpu.matmul %39, %40, %cst_24 {dimension_numbers = #tpu.dot_dimension_numbers<[1], [0], [0], [1], [0, 0, 1, 1], [], []>} : vector<32x32xbf16>, vector<32x32xbf16>, vector<32x32xf32> -> vector<32x32xf32>
    %42 = arith.addf %38, %41 : vector<32x32xf32>
    %43 = vector.extract_strided_slice %5 {offsets = [320, 0], sizes = [32, 32], strides = [1, 1]} : vector<512x32xbf16> to vector<32x32xbf16>
    %c320 = arith.constant 320 : index
    %c0_25 = arith.constant 0 : index
    %44 = vector.load %arg1[%c320, %c0_25] : memref<512x64xbf16, #tpu.memory_space<vmem>>, vector<32x32xbf16>
    %cst_26 = arith.constant dense<0.000000e+00> : vector<32x32xf32>
    %45 = tpu.matmul %43, %44, %cst_26 {dimension_numbers = #tpu.dot_dimension_numbers<[1], [0], [0], [1], [0, 0, 1, 1], [], []>} : vector<32x32xbf16>, vector<32x32xbf16>, vector<32x32xf32> -> vector<32x32xf32>
    %46 = arith.addf %42, %45 : vector<32x32xf32>
    %47 = vector.extract_strided_slice %5 {offsets = [352, 0], sizes = [32, 32], strides = [1, 1]} : vector<512x32xbf16> to vector<32x32xbf16>
    %c352 = arith.constant 352 : index
    %c0_27 = arith.constant 0 : index
    %48 = vector.load %arg1[%c352, %c0_27] : memref<512x64xbf16, #tpu.memory_space<vmem>>, vector<32x32xbf16>
    %cst_28 = arith.constant dense<0.000000e+00> : vector<32x32xf32>
    %49 = tpu.matmul %47, %48, %cst_28 {dimension_numbers = #tpu.dot_dimension_numbers<[1], [0], [0], [1], [0, 0, 1, 1], [], []>} : vector<32x32xbf16>, vector<32x32xbf16>, vector<32x32xf32> -> vector<32x32xf32>
    %50 = arith.addf %46, %49 : vector<32x32xf32>
    %51 = vector.extract_strided_slice %5 {offsets = [384, 0], sizes = [32, 32], strides = [1, 1]} : vector<512x32xbf16> to vector<32x32xbf16>
    %c384 = arith.constant 384 : index
    %c0_29 = arith.constant 0 : index
    %52 = vector.load %arg1[%c384, %c0_29] : memref<512x64xbf16, #tpu.memory_space<vmem>>, vector<32x32xbf16>
    %cst_30 = arith.constant dense<0.000000e+00> : vector<32x32xf32>
    %53 = tpu.matmul %51, %52, %cst_30 {dimension_numbers = #tpu.dot_dimension_numbers<[1], [0], [0], [1], [0, 0, 1, 1], [], []>} : vector<32x32xbf16>, vector<32x32xbf16>, vector<32x32xf32> -> vector<32x32xf32>
    %54 = vector.extract_strided_slice %5 {offsets = [416, 0], sizes = [32, 32], strides = [1, 1]} : vector<512x32xbf16> to vector<32x32xbf16>
    %c416 = arith.constant 416 : index
    %c0_31 = arith.constant 0 : index
    %55 = vector.load %arg1[%c416, %c0_31] : memref<512x64xbf16, #tpu.memory_space<vmem>>, vector<32x32xbf16>
    %cst_32 = arith.constant dense<0.000000e+00> : vector<32x32xf32>
    %56 = tpu.matmul %54, %55, %cst_32 {dimension_numbers = #tpu.dot_dimension_numbers<[1], [0], [0], [1], [0, 0, 1, 1], [], []>} : vector<32x32xbf16>, vector<32x32xbf16>, vector<32x32xf32> -> vector<32x32xf32>
    %57 = arith.addf %53, %56 : vector<32x32xf32>
    %58 = vector.extract_strided_slice %5 {offsets = [448, 0], sizes = [32, 32], strides = [1, 1]} : vector<512x32xbf16> to vector<32x32xbf16>
    %c448 = arith.constant 448 : index
    %c0_33 = arith.constant 0 : index
    %59 = vector.load %arg1[%c448, %c0_33] : memref<512x64xbf16, #tpu.memory_space<vmem>>, vector<32x32xbf16>
    %cst_34 = arith.constant dense<0.000000e+00> : vector<32x32xf32>
    %60 = tpu.matmul %58, %59, %cst_34 {dimension_numbers = #tpu.dot_dimension_numbers<[1], [0], [0], [1], [0, 0, 1, 1], [], []>} : vector<32x32xbf16>, vector<32x32xbf16>, vector<32x32xf32> -> vector<32x32xf32>
    %61 = arith.addf %57, %60 : vector<32x32xf32>
    %62 = vector.extract_strided_slice %5 {offsets = [480, 0], sizes = [32, 32], strides = [1, 1]} : vector<512x32xbf16> to vector<32x32xbf16>
    %c480 = arith.constant 480 : index
    %c0_35 = arith.constant 0 : index
    %63 = vector.load %arg1[%c480, %c0_35] : memref<512x64xbf16, #tpu.memory_space<vmem>>, vector<32x32xbf16>
    %cst_36 = arith.constant dense<0.000000e+00> : vector<32x32xf32>
    %64 = tpu.matmul %62, %63, %cst_36 {dimension_numbers = #tpu.dot_dimension_numbers<[1], [0], [0], [1], [0, 0, 1, 1], [], []>} : vector<32x32xbf16>, vector<32x32xbf16>, vector<32x32xf32> -> vector<32x32xf32>
    %65 = arith.addf %61, %64 : vector<32x32xf32>
    %66 = arith.addf %20, %35 : vector<32x32xf32>
    %67 = arith.addf %50, %65 : vector<32x32xf32>
    %68 = arith.addf %66, %67 : vector<32x32xf32>
    %c176 = arith.constant 176 : index
    %c0_37 = arith.constant 0 : index
    %69 = vector.load %arg2[%c176, %c0_37] : memref<182x128xbf16, #tpu.memory_space<vmem>>, vector<1x32xbf16>
    %70 = arith.extf %69 : vector<1x32xbf16> to vector<1x32xf32>
    %71 = vector.broadcast %70 : vector<1x32xf32> to vector<32x32xf32>
    %72 = arith.addf %68, %71 : vector<32x32xf32>
    %cst_38 = arith.constant 0.000000e+00 : f32
    %73 = vector.broadcast %cst_38 : f32 to vector<32x32xf32>
    %74 = arith.maximumf %72, %73 : vector<32x32xf32>
    %75 = arith.truncf %74 : vector<32x32xf32> to vector<32x32xbf16>
    %76 = vector.extract_strided_slice %75 {offsets = [0, 0], sizes = [2, 32], strides = [1, 1]} : vector<32x32xbf16> to vector<2x32xbf16>
    %c0_39 = arith.constant 0 : index
    %c32_40 = arith.constant 32 : index
    %77 = vector.load %arg1[%c0_39, %c32_40] : memref<512x64xbf16, #tpu.memory_space<vmem>>, vector<32x32xbf16>
    %cst_41 = arith.constant dense<0.000000e+00> : vector<2x32xf32>
    %78 = tpu.matmul %76, %77, %cst_41 {dimension_numbers = #tpu.dot_dimension_numbers<[1], [0], [0], [1], [0, 0, 1, 1], [], []>} : vector<2x32xbf16>, vector<32x32xbf16>, vector<2x32xf32> -> vector<2x32xf32>
    %79 = vector.extract_strided_slice %75 {offsets = [2, 0], sizes = [2, 32], strides = [1, 1]} : vector<32x32xbf16> to vector<2x32xbf16>
    %c32_42 = arith.constant 32 : index
    %c32_43 = arith.constant 32 : index
    %80 = vector.load %arg1[%c32_42, %c32_43] : memref<512x64xbf16, #tpu.memory_space<vmem>>, vector<32x32xbf16>
    %cst_44 = arith.constant dense<0.000000e+00> : vector<2x32xf32>
    %81 = tpu.matmul %79, %80, %cst_44 {dimension_numbers = #tpu.dot_dimension_numbers<[1], [0], [0], [1], [0, 0, 1, 1], [], []>} : vector<2x32xbf16>, vector<32x32xbf16>, vector<2x32xf32> -> vector<2x32xf32>
    %82 = arith.addf %78, %81 : vector<2x32xf32>
    %83 = vector.extract_strided_slice %75 {offsets = [4, 0], sizes = [2, 32], strides = [1, 1]} : vector<32x32xbf16> to vector<2x32xbf16>
    %c64_45 = arith.constant 64 : index
    %c32_46 = arith.constant 32 : index
    %84 = vector.load %arg1[%c64_45, %c32_46] : memref<512x64xbf16, #tpu.memory_space<vmem>>, vector<32x32xbf16>
    %cst_47 = arith.constant dense<0.000000e+00> : vector<2x32xf32>
    %85 = tpu.matmul %83, %84, %cst_47 {dimension_numbers = #tpu.dot_dimension_numbers<[1], [0], [0], [1], [0, 0, 1, 1], [], []>} : vector<2x32xbf16>, vector<32x32xbf16>, vector<2x32xf32> -> vector<2x32xf32>
    %86 = arith.addf %82, %85 : vector<2x32xf32>
    %87 = vector.extract_strided_slice %75 {offsets = [6, 0], sizes = [2, 32], strides = [1, 1]} : vector<32x32xbf16> to vector<2x32xbf16>
    %c96_48 = arith.constant 96 : index
    %c32_49 = arith.constant 32 : index
    %88 = vector.load %arg1[%c96_48, %c32_49] : memref<512x64xbf16, #tpu.memory_space<vmem>>, vector<32x32xbf16>
    %cst_50 = arith.constant dense<0.000000e+00> : vector<2x32xf32>
    %89 = tpu.matmul %87, %88, %cst_50 {dimension_numbers = #tpu.dot_dimension_numbers<[1], [0], [0], [1], [0, 0, 1, 1], [], []>} : vector<2x32xbf16>, vector<32x32xbf16>, vector<2x32xf32> -> vector<2x32xf32>
    %90 = arith.addf %86, %89 : vector<2x32xf32>
    %91 = vector.extract_strided_slice %75 {offsets = [8, 0], sizes = [2, 32], strides = [1, 1]} : vector<32x32xbf16> to vector<2x32xbf16>
    %c128_51 = arith.constant 128 : index
    %c32_52 = arith.constant 32 : index
    %92 = vector.load %arg1[%c128_51, %c32_52] : memref<512x64xbf16, #tpu.memory_space<vmem>>, vector<32x32xbf16>
    %cst_53 = arith.constant dense<0.000000e+00> : vector<2x32xf32>
    %93 = tpu.matmul %91, %92, %cst_53 {dimension_numbers = #tpu.dot_dimension_numbers<[1], [0], [0], [1], [0, 0, 1, 1], [], []>} : vector<2x32xbf16>, vector<32x32xbf16>, vector<2x32xf32> -> vector<2x32xf32>
    %94 = vector.extract_strided_slice %75 {offsets = [10, 0], sizes = [2, 32], strides = [1, 1]} : vector<32x32xbf16> to vector<2x32xbf16>
    %c160_54 = arith.constant 160 : index
    %c32_55 = arith.constant 32 : index
    %95 = vector.load %arg1[%c160_54, %c32_55] : memref<512x64xbf16, #tpu.memory_space<vmem>>, vector<32x32xbf16>
    %cst_56 = arith.constant dense<0.000000e+00> : vector<2x32xf32>
    %96 = tpu.matmul %94, %95, %cst_56 {dimension_numbers = #tpu.dot_dimension_numbers<[1], [0], [0], [1], [0, 0, 1, 1], [], []>} : vector<2x32xbf16>, vector<32x32xbf16>, vector<2x32xf32> -> vector<2x32xf32>
    %97 = arith.addf %93, %96 : vector<2x32xf32>
    %98 = vector.extract_strided_slice %75 {offsets = [12, 0], sizes = [2, 32], strides = [1, 1]} : vector<32x32xbf16> to vector<2x32xbf16>
    %c192_57 = arith.constant 192 : index
    %c32_58 = arith.constant 32 : index
    %99 = vector.load %arg1[%c192_57, %c32_58] : memref<512x64xbf16, #tpu.memory_space<vmem>>, vector<32x32xbf16>
    %cst_59 = arith.constant dense<0.000000e+00> : vector<2x32xf32>
    %100 = tpu.matmul %98, %99, %cst_59 {dimension_numbers = #tpu.dot_dimension_numbers<[1], [0], [0], [1], [0, 0, 1, 1], [], []>} : vector<2x32xbf16>, vector<32x32xbf16>, vector<2x32xf32> -> vector<2x32xf32>
    %101 = arith.addf %97, %100 : vector<2x32xf32>
    %102 = vector.extract_strided_slice %75 {offsets = [14, 0], sizes = [2, 32], strides = [1, 1]} : vector<32x32xbf16> to vector<2x32xbf16>
    %c224_60 = arith.constant 224 : index
    %c32_61 = arith.constant 32 : index
    %103 = vector.load %arg1[%c224_60, %c32_61] : memref<512x64xbf16, #tpu.memory_space<vmem>>, vector<32x32xbf16>
    %cst_62 = arith.constant dense<0.000000e+00> : vector<2x32xf32>
    %104 = tpu.matmul %102, %103, %cst_62 {dimension_numbers = #tpu.dot_dimension_numbers<[1], [0], [0], [1], [0, 0, 1, 1], [], []>} : vector<2x32xbf16>, vector<32x32xbf16>, vector<2x32xf32> -> vector<2x32xf32>
    %105 = arith.addf %101, %104 : vector<2x32xf32>
    %106 = vector.extract_strided_slice %75 {offsets = [16, 0], sizes = [2, 32], strides = [1, 1]} : vector<32x32xbf16> to vector<2x32xbf16>
    %c256_63 = arith.constant 256 : index
    %c32_64 = arith.constant 32 : index
    %107 = vector.load %arg1[%c256_63, %c32_64] : memref<512x64xbf16, #tpu.memory_space<vmem>>, vector<32x32xbf16>
    %cst_65 = arith.constant dense<0.000000e+00> : vector<2x32xf32>
    %108 = tpu.matmul %106, %107, %cst_65 {dimension_numbers = #tpu.dot_dimension_numbers<[1], [0], [0], [1], [0, 0, 1, 1], [], []>} : vector<2x32xbf16>, vector<32x32xbf16>, vector<2x32xf32> -> vector<2x32xf32>
    %109 = vector.extract_strided_slice %75 {offsets = [18, 0], sizes = [2, 32], strides = [1, 1]} : vector<32x32xbf16> to vector<2x32xbf16>
    %c288_66 = arith.constant 288 : index
    %c32_67 = arith.constant 32 : index
    %110 = vector.load %arg1[%c288_66, %c32_67] : memref<512x64xbf16, #tpu.memory_space<vmem>>, vector<32x32xbf16>
    %cst_68 = arith.constant dense<0.000000e+00> : vector<2x32xf32>
    %111 = tpu.matmul %109, %110, %cst_68 {dimension_numbers = #tpu.dot_dimension_numbers<[1], [0], [0], [1], [0, 0, 1, 1], [], []>} : vector<2x32xbf16>, vector<32x32xbf16>, vector<2x32xf32> -> vector<2x32xf32>
    %112 = arith.addf %108, %111 : vector<2x32xf32>
    %113 = vector.extract_strided_slice %75 {offsets = [20, 0], sizes = [2, 32], strides = [1, 1]} : vector<32x32xbf16> to vector<2x32xbf16>
    %c320_69 = arith.constant 320 : index
    %c32_70 = arith.constant 32 : index
    %114 = vector.load %arg1[%c320_69, %c32_70] : memref<512x64xbf16, #tpu.memory_space<vmem>>, vector<32x32xbf16>
    %cst_71 = arith.constant dense<0.000000e+00> : vector<2x32xf32>
    %115 = tpu.matmul %113, %114, %cst_71 {dimension_numbers = #tpu.dot_dimension_numbers<[1], [0], [0], [1], [0, 0, 1, 1], [], []>} : vector<2x32xbf16>, vector<32x32xbf16>, vector<2x32xf32> -> vector<2x32xf32>
    %116 = arith.addf %112, %115 : vector<2x32xf32>
    %117 = vector.extract_strided_slice %75 {offsets = [22, 0], sizes = [2, 32], strides = [1, 1]} : vector<32x32xbf16> to vector<2x32xbf16>
    %c352_72 = arith.constant 352 : index
    %c32_73 = arith.constant 32 : index
    %118 = vector.load %arg1[%c352_72, %c32_73] : memref<512x64xbf16, #tpu.memory_space<vmem>>, vector<32x32xbf16>
    %cst_74 = arith.constant dense<0.000000e+00> : vector<2x32xf32>
    %119 = tpu.matmul %117, %118, %cst_74 {dimension_numbers = #tpu.dot_dimension_numbers<[1], [0], [0], [1], [0, 0, 1, 1], [], []>} : vector<2x32xbf16>, vector<32x32xbf16>, vector<2x32xf32> -> vector<2x32xf32>
    %120 = arith.addf %116, %119 : vector<2x32xf32>
    %121 = vector.extract_strided_slice %75 {offsets = [24, 0], sizes = [2, 32], strides = [1, 1]} : vector<32x32xbf16> to vector<2x32xbf16>
    %c384_75 = arith.constant 384 : index
    %c32_76 = arith.constant 32 : index
    %122 = vector.load %arg1[%c384_75, %c32_76] : memref<512x64xbf16, #tpu.memory_space<vmem>>, vector<32x32xbf16>
    %cst_77 = arith.constant dense<0.000000e+00> : vector<2x32xf32>
    %123 = tpu.matmul %121, %122, %cst_77 {dimension_numbers = #tpu.dot_dimension_numbers<[1], [0], [0], [1], [0, 0, 1, 1], [], []>} : vector<2x32xbf16>, vector<32x32xbf16>, vector<2x32xf32> -> vector<2x32xf32>
    %124 = vector.extract_strided_slice %75 {offsets = [26, 0], sizes = [2, 32], strides = [1, 1]} : vector<32x32xbf16> to vector<2x32xbf16>
    %c416_78 = arith.constant 416 : index
    %c32_79 = arith.constant 32 : index
    %125 = vector.load %arg1[%c416_78, %c32_79] : memref<512x64xbf16, #tpu.memory_space<vmem>>, vector<32x32xbf16>
    %cst_80 = arith.constant dense<0.000000e+00> : vector<2x32xf32>
    %126 = tpu.matmul %124, %125, %cst_80 {dimension_numbers = #tpu.dot_dimension_numbers<[1], [0], [0], [1], [0, 0, 1, 1], [], []>} : vector<2x32xbf16>, vector<32x32xbf16>, vector<2x32xf32> -> vector<2x32xf32>
    %127 = arith.addf %123, %126 : vector<2x32xf32>
    %128 = vector.extract_strided_slice %75 {offsets = [28, 0], sizes = [2, 32], strides = [1, 1]} : vector<32x32xbf16> to vector<2x32xbf16>
    %c448_81 = arith.constant 448 : index
    %c32_82 = arith.constant 32 : index
    %129 = vector.load %arg1[%c448_81, %c32_82] : memref<512x64xbf16, #tpu.memory_space<vmem>>, vector<32x32xbf16>
    %cst_83 = arith.constant dense<0.000000e+00> : vector<2x32xf32>
    %130 = tpu.matmul %128, %129, %cst_83 {dimension_numbers = #tpu.dot_dimension_numbers<[1], [0], [0], [1], [0, 0, 1, 1], [], []>} : vector<2x32xbf16>, vector<32x32xbf16>, vector<2x32xf32> -> vector<2x32xf32>
    %131 = arith.addf %127, %130 : vector<2x32xf32>
    %132 = vector.extract_strided_slice %75 {offsets = [30, 0], sizes = [2, 32], strides = [1, 1]} : vector<32x32xbf16> to vector<2x32xbf16>
    %c480_84 = arith.constant 480 : index
    %c32_85 = arith.constant 32 : index
    %133 = vector.load %arg1[%c480_84, %c32_85] : memref<512x64xbf16, #tpu.memory_space<vmem>>, vector<32x32xbf16>
    %cst_86 = arith.constant dense<0.000000e+00> : vector<2x32xf32>
    %134 = tpu.matmul %132, %133, %cst_86 {dimension_numbers = #tpu.dot_dimension_numbers<[1], [0], [0], [1], [0, 0, 1, 1], [], []>} : vector<2x32xbf16>, vector<32x32xbf16>, vector<2x32xf32> -> vector<2x32xf32>
    %135 = arith.addf %131, %134 : vector<2x32xf32>
    %136 = arith.addf %90, %105 : vector<2x32xf32>
    %137 = arith.addf %120, %135 : vector<2x32xf32>
    %138 = arith.addf %136, %137 : vector<2x32xf32>
    %c177 = arith.constant 177 : index
    %c0_87 = arith.constant 0 : index
    %139 = vector.load %arg2[%c177, %c0_87] : memref<182x128xbf16, #tpu.memory_space<vmem>>, vector<1x32xbf16>
    %140 = arith.extf %139 : vector<1x32xbf16> to vector<1x32xf32>
    %141 = vector.broadcast %140 : vector<1x32xf32> to vector<2x32xf32>
    %142 = arith.addf %138, %141 : vector<2x32xf32>
    %cst_88 = arith.constant 0.000000e+00 : f32
    %143 = vector.broadcast %cst_88 : f32 to vector<2x32xf32>
    %144 = arith.maximumf %142, %143 : vector<2x32xf32>
    %145 = arith.truncf %144 : vector<2x32xf32> to vector<2x32xbf16>
    %c112 = arith.constant 112 : index
    %c0_89 = arith.constant 0 : index
    %146 = vector.load %arg2[%c112, %c0_89] : memref<182x128xbf16, #tpu.memory_space<vmem>>, vector<32x128xbf16>
    %cst_90 = arith.constant dense<0.000000e+00> : vector<2x128xf32>
    %147 = tpu.matmul %145, %146, %cst_90 {dimension_numbers = #tpu.dot_dimension_numbers<[1], [0], [0], [1], [0, 0, 1, 1], [], []>} : vector<2x32xbf16>, vector<32x128xbf16>, vector<2x128xf32> -> vector<2x128xf32>
    %c180 = arith.constant 180 : index
    %c0_91 = arith.constant 0 : index
    %148 = vector.load %arg2[%c180, %c0_91] : memref<182x128xbf16, #tpu.memory_space<vmem>>, vector<1x128xbf16>
    %149 = arith.extf %148 : vector<1x128xbf16> to vector<1x128xf32>
    %150 = vector.broadcast %149 : vector<1x128xf32> to vector<2x128xf32>
    %151 = arith.addf %147, %150 : vector<2x128xf32>
    %c0_92 = arith.constant 0 : index
    %c0_93 = arith.constant 0 : index
    %152 = vector.load %arg3[%c0_92, %c0_93] : memref<2x8xf32, #tpu.memory_space<vmem>>, vector<2x8xf32>
    %153 = arith.truncf %152 : vector<2x8xf32> to vector<2x8xbf16>
    %c96_94 = arith.constant 96 : index
    %c0_95 = arith.constant 0 : index
    %154 = vector.load %arg2[%c96_94, %c0_95] : memref<182x128xbf16, #tpu.memory_space<vmem>>, vector<8x32xbf16>
    %cst_96 = arith.constant dense<0.000000e+00> : vector<2x32xf32>
    %155 = tpu.matmul %153, %154, %cst_96 {dimension_numbers = #tpu.dot_dimension_numbers<[1], [0], [0], [1], [0, 0, 1, 1], [], []>} : vector<2x8xbf16>, vector<8x32xbf16>, vector<2x32xf32> -> vector<2x32xf32>
    %c178 = arith.constant 178 : index
    %c0_97 = arith.constant 0 : index
    %156 = vector.load %arg2[%c178, %c0_97] : memref<182x128xbf16, #tpu.memory_space<vmem>>, vector<1x32xbf16>
    %157 = arith.extf %156 : vector<1x32xbf16> to vector<1x32xf32>
    %158 = vector.broadcast %157 : vector<1x32xf32> to vector<2x32xf32>
    %159 = arith.addf %155, %158 : vector<2x32xf32>
    %cst_98 = arith.constant 0.000000e+00 : f32
    %160 = vector.broadcast %cst_98 : f32 to vector<2x32xf32>
    %161 = arith.maximumf %159, %160 : vector<2x32xf32>
    %162 = arith.truncf %161 : vector<2x32xf32> to vector<2x32xbf16>
    %c64_99 = arith.constant 64 : index
    %c0_100 = arith.constant 0 : index
    %163 = vector.load %arg2[%c64_99, %c0_100] : memref<182x128xbf16, #tpu.memory_space<vmem>>, vector<32x32xbf16>
    %cst_101 = arith.constant dense<0.000000e+00> : vector<2x32xf32>
    %164 = tpu.matmul %162, %163, %cst_101 {dimension_numbers = #tpu.dot_dimension_numbers<[1], [0], [0], [1], [0, 0, 1, 1], [], []>} : vector<2x32xbf16>, vector<32x32xbf16>, vector<2x32xf32> -> vector<2x32xf32>
    %c179 = arith.constant 179 : index
    %c0_102 = arith.constant 0 : index
    %165 = vector.load %arg2[%c179, %c0_102] : memref<182x128xbf16, #tpu.memory_space<vmem>>, vector<1x32xbf16>
    %166 = arith.extf %165 : vector<1x32xbf16> to vector<1x32xf32>
    %167 = vector.broadcast %166 : vector<1x32xf32> to vector<2x32xf32>
    %168 = arith.addf %164, %167 : vector<2x32xf32>
    %cst_103 = arith.constant 0.000000e+00 : f32
    %169 = vector.broadcast %cst_103 : f32 to vector<2x32xf32>
    %170 = arith.maximumf %168, %169 : vector<2x32xf32>
    %171 = arith.truncf %170 : vector<2x32xf32> to vector<2x32xbf16>
    %c144 = arith.constant 144 : index
    %c0_104 = arith.constant 0 : index
    %172 = vector.load %arg2[%c144, %c0_104] : memref<182x128xbf16, #tpu.memory_space<vmem>>, vector<32x128xbf16>
    %cst_105 = arith.constant dense<0.000000e+00> : vector<2x128xf32>
    %173 = tpu.matmul %171, %172, %cst_105 {dimension_numbers = #tpu.dot_dimension_numbers<[1], [0], [0], [1], [0, 0, 1, 1], [], []>} : vector<2x32xbf16>, vector<32x128xbf16>, vector<2x128xf32> -> vector<2x128xf32>
    %c181 = arith.constant 181 : index
    %c0_106 = arith.constant 0 : index
    %174 = vector.load %arg2[%c181, %c0_106] : memref<182x128xbf16, #tpu.memory_space<vmem>>, vector<1x128xbf16>
    %175 = arith.extf %174 : vector<1x128xbf16> to vector<1x128xf32>
    %176 = vector.broadcast %175 : vector<1x128xf32> to vector<2x128xf32>
    %177 = arith.addf %173, %176 : vector<2x128xf32>
    %178 = tpu.iota {dimensions = array<i32: 1>} : vector<2x128xi32>
    %c2_i32 = arith.constant 2 : i32
    %179 = vector.broadcast %c2_i32 : i32 to vector<2x128xi32>
    %180 = arith.cmpi slt, %178, %179 : vector<2x128xi32>
    %c2_i32_107 = arith.constant 2 : i32
    %181 = vector.broadcast %c2_i32_107 : i32 to vector<2x128xi32>
    %182 = arith.cmpi sge, %178, %181 : vector<2x128xi32>
    %c4_i32 = arith.constant 4 : i32
    %183 = vector.broadcast %c4_i32 : i32 to vector<2x128xi32>
    %184 = arith.cmpi slt, %178, %183 : vector<2x128xi32>
    %185 = arith.andi %182, %184 : vector<2x128xi1>
    %c4_i32_108 = arith.constant 4 : i32
    %186 = vector.broadcast %c4_i32_108 : i32 to vector<2x128xi32>
    %187 = arith.cmpi sge, %178, %186 : vector<2x128xi32>
    %c6_i32 = arith.constant 6 : i32
    %188 = vector.broadcast %c6_i32 : i32 to vector<2x128xi32>
    %189 = arith.cmpi slt, %178, %188 : vector<2x128xi32>
    %190 = arith.andi %187, %189 : vector<2x128xi1>
    %cst_109 = arith.constant 0.000000e+00 : f32
    %191 = vector.broadcast %cst_109 : f32 to vector<2x128xf32>
    %192 = arith.maximumf %151, %191 : vector<2x128xf32>
    %193 = math.absf %151 : vector<2x128xf32>
    %cst_110 = arith.constant 0.000000e+00 : f32
    %194 = vector.broadcast %cst_110 : f32 to vector<2x128xf32>
    %195 = arith.subf %194, %193 : vector<2x128xf32>
    %196 = math.exp %195 : vector<2x128xf32>
    %cst_111 = arith.constant 1.000000e+00 : f32
    %197 = vector.broadcast %cst_111 : f32 to vector<2x128xf32>
    %198 = arith.addf %197, %196 : vector<2x128xf32>
    %199 = math.log %198 : vector<2x128xf32>
    %200 = arith.addf %192, %199 : vector<2x128xf32>
    %cst_112 = arith.constant 0.000000e+00 : f32
    %201 = vector.broadcast %cst_112 : f32 to vector<2x128xf32>
    %202 = arith.maximumf %177, %201 : vector<2x128xf32>
    %203 = math.absf %177 : vector<2x128xf32>
    %cst_113 = arith.constant 0.000000e+00 : f32
    %204 = vector.broadcast %cst_113 : f32 to vector<2x128xf32>
    %205 = arith.subf %204, %203 : vector<2x128xf32>
    %206 = math.exp %205 : vector<2x128xf32>
    %cst_114 = arith.constant 1.000000e+00 : f32
    %207 = vector.broadcast %cst_114 : f32 to vector<2x128xf32>
    %208 = arith.addf %207, %206 : vector<2x128xf32>
    %209 = math.log %208 : vector<2x128xf32>
    %210 = arith.addf %202, %209 : vector<2x128xf32>
    %cst_115 = arith.constant 0xFF800000 : f32
    %211 = vector.broadcast %cst_115 : f32 to vector<2x128xf32>
    %212 = arith.select %185, %200, %211 : vector<2x128xi1>, vector<2x128xf32>
    %cst_116 = arith.constant dense<0xFF800000> : vector<2xf32>
    %213 = vector.multi_reduction <maximumf>, %212, %cst_116 [1] : vector<2x128xf32> to vector<2xf32>
    %214 = vector.shape_cast %213 : vector<2xf32> to vector<2x1xf32>
    %215 = arith.select %190, %210, %211 : vector<2x128xi1>, vector<2x128xf32>
    %cst_117 = arith.constant dense<0xFF800000> : vector<2xf32>
    %216 = vector.multi_reduction <maximumf>, %215, %cst_117 [1] : vector<2x128xf32> to vector<2xf32>
    %217 = vector.shape_cast %216 : vector<2xf32> to vector<2x1xf32>
    %218 = arith.cmpf ogt, %214, %217 : vector<2x1xf32>
    %219 = vector.shape_cast %218 : vector<2x1xi1> to vector<2x1xi1>
    %220 = vector.broadcast %219 : vector<2x1xi1> to vector<2x128xi1>
    %221 = arith.select %220, %177, %151 : vector<2x128xi1>, vector<2x128xf32>
    %cst_118 = arith.constant 0.000000e+00 : f32
    %222 = vector.broadcast %cst_118 : f32 to vector<2x128xf32>
    %223 = arith.select %180, %221, %222 : vector<2x128xi1>, vector<2x128xf32>
    %cst_119 = arith.constant 0.000000e+00 : f32
    %224 = vector.broadcast %cst_119 : f32 to vector<2x128xf32>
    %225 = arith.select %185, %200, %224 : vector<2x128xi1>, vector<2x128xf32>
    %226 = arith.addf %223, %225 : vector<2x128xf32>
    %cst_120 = arith.constant 0.000000e+00 : f32
    %227 = vector.broadcast %cst_120 : f32 to vector<2x128xf32>
    %228 = arith.select %190, %210, %227 : vector<2x128xi1>, vector<2x128xf32>
    %229 = arith.addf %226, %228 : vector<2x128xf32>
    %c0_121 = arith.constant 0 : index
    %c0_122 = arith.constant 0 : index
    %230 = vector.load %arg4[%c0_121, %c0_122] : memref<2x128xf32, #tpu.memory_space<vmem>>, vector<2x128xf32>
    tpu.vector_store %arg4[%c0_121, %c0_122], %229 {strides = array<i32>} : memref<2x128xf32, #tpu.memory_space<vmem>>, vector<2x128xf32>,
    return
  }
}

</mosaic_0001>

<llo_original>
// kernel: forward.1
$region0: #{forward.1}
  #allocation0 [shape = 'u32[]', space=smem, size = 0x4, offset = 0x4, fixed_abs, tag = 'smem constant byte address 0x4 - core index']
  #allocation1 [shape = 'u32[144,128]{1,0:T(1,128)}', space=vmem, size = 0x12000, scoped, tag = 'internal scratch']
  %s0 = inlined_call_operand.vmem [shape: bf16[512,49], index: 0, kind: input, shape index: {}]
  %s1 = inlined_call_operand.vmem [shape: bf16[512,64], index: 1, kind: input, shape index: {}]
  %s2 = inlined_call_operand.vmem [shape: bf16[182,128], index: 2, kind: input, shape index: {}]
  %s3 = inlined_call_operand.vmem [shape: f32[2,8], index: 3, kind: input, shape index: {}]
  %s4 = inlined_call_operand.vmem [shape: f32[2,128], index: 4, kind: output, shape index: {}]
  %s5 = sld [smem:[#allocation0]]
  $region26: #{forward.1} parent=0
    _
  %s7 = ssub.s32 1, %s5
  %s8 = scalar_select 0, %s7, %s5
  // Predicated region
  $region2: #{forward.1} parent=0 // pred_check
    _
  $region3: #{forward.1} parent=0 // pred_check_branch
    %10 = sbr.rel (0) target = $region5
  $region4: #{forward.1} parent=0 // pred_region
    _
  $region5: #{forward.1} parent=0 // pred_fallthru
    _
  // Predicated region
  $region6: #{forward.1} parent=0 // pred_check
    _
  $region7: #{forward.1} parent=0 // pred_check_branch
    %12 = sbr.rel (0) target = $region9
  $region8: #{forward.1} parent=0 // pred_region
    _
  $region9: #{forward.1} parent=0 // pred_fallthru
    _
  // Predicated region
  $region10: #{forward.1} parent=0 // pred_check
    _
  $region11: #{forward.1} parent=0 // pred_check_branch
    %14 = sbr.rel (0) target = $region13
  $region12: #{forward.1} parent=0 // pred_region
    _
  $region13: #{forward.1} parent=0 // pred_fallthru
    _
  // Predicated region
  $region14: #{forward.1} parent=0 // pred_check
    _
  $region15: #{forward.1} parent=0 // pred_check_branch
    %16 = sbr.rel (0) target = $region17
  $region16: #{forward.1} parent=0 // pred_region
    _
  $region17: #{forward.1} parent=0 // pred_fallthru
    _
  %v18 = vld [vmem:[%s2] sm:$0xf]
  %v19 = vld [vmem:[%s2 + $0x4] sm:$0xf]
  %v20 = vld [vmem:[%s2 + $0x8] sm:$0xf]
  %v21 = vld [vmem:[%s2 + $0xc] sm:$0xf]
  %v22 = vld [vmem:[%s2 + $0x10] sm:$0xf]
  %v23 = vld [vmem:[%s2 + $0x14] sm:$0xf]
  %v24 = vld [vmem:[%s2 + $0x18] sm:$0x1]
  %v25 = vld [vmem:[%s0] sm:$0xf]
  %v26 = vld [vmem:[%s0 + $0x4] sm:$0xf]
  %v27 = vld [vmem:[%s0 + $0x8] sm:$0xf]
  %v28 = vld [vmem:[%s0 + $0xc] sm:$0xf]
  %v29 = vld [vmem:[%s0 + $0x10] sm:$0xf]
  %v30 = vld [vmem:[%s0 + $0x14] sm:$0xf]
  %v31 = vld [vmem:[%s0 + $0x18] sm:$0xf]
  %v32 = vld [vmem:[%s0 + $0x1c] sm:$0xf]
  %v33 = vld [vmem:[%s0 + $0x20] sm:$0xf]
  %v34 = vld [vmem:[%s0 + $0x24] sm:$0xf]
  %v35 = vld [vmem:[%s0 + $0x28] sm:$0xf]
  %v36 = vld [vmem:[%s0 + $0x2c] sm:$0xf]
  %v37 = vld [vmem:[%s0 + $0x30] sm:$0xf]
  %v38 = vld [vmem:[%s0 + $0x34] sm:$0xf]
  %v39 = vld [vmem:[%s0 + $0x38] sm:$0xf]
  %v40 = vld [vmem:[%s0 + $0x3c] sm:$0xf]
  %v41 = vld [vmem:[%s0 + $0x40] sm:$0xf]
  %v42 = vld [vmem:[%s0 + $0x44] sm:$0xf]
  %v43 = vld [vmem:[%s0 + $0x48] sm:$0xf]
  %v44 = vld [vmem:[%s0 + $0x4c] sm:$0xf]
  %v45 = vld [vmem:[%s0 + $0x50] sm:$0xf]
  %v46 = vld [vmem:[%s0 + $0x54] sm:$0xf]
  %v47 = vld [vmem:[%s0 + $0x58] sm:$0xf]
  %v48 = vld [vmem:[%s0 + $0x5c] sm:$0xf]
  %v49 = vld [vmem:[%s0 + $0x60] sm:$0xf]
  %v50 = vld [vmem:[%s0 + $0x64] sm:$0xf]
  %v51 = vld [vmem:[%s0 + $0x68] sm:$0xf]
  %v52 = vld [vmem:[%s0 + $0x6c] sm:$0xf]
  %v53 = vld [vmem:[%s0 + $0x70] sm:$0xf]
  %v54 = vld [vmem:[%s0 + $0x74] sm:$0xf]
  %v55 = vld [vmem:[%s0 + $0x78] sm:$0xf]
  %v56 = vld [vmem:[%s0 + $0x7c] sm:$0xf]
  %v57 = vld [vmem:[%s0 + $0x80] sm:$0xf]
  %v58 = vld [vmem:[%s0 + $0x84] sm:$0xf]
  %v59 = vld [vmem:[%s0 + $0x88] sm:$0xf]
  %v60 = vld [vmem:[%s0 + $0x8c] sm:$0xf]
  %v61 = vld [vmem:[%s0 + $0x90] sm:$0xf]
  %v62 = vld [vmem:[%s0 + $0x94] sm:$0xf]
  %v63 = vld [vmem:[%s0 + $0x98] sm:$0xf]
  %v64 = vld [vmem:[%s0 + $0x9c] sm:$0xf]
  %v65 = vld [vmem:[%s0 + $0xa0] sm:$0xf]
  %v66 = vld [vmem:[%s0 + $0xa4] sm:$0xf]
  %v67 = vld [vmem:[%s0 + $0xa8] sm:$0xf]
  %v68 = vld [vmem:[%s0 + $0xac] sm:$0xf]
  %v69 = vld [vmem:[%s0 + $0xb0] sm:$0xf]
  %v70 = vld [vmem:[%s0 + $0xb4] sm:$0xf]
  %v71 = vld [vmem:[%s0 + $0xb8] sm:$0xf]
  %v72 = vld [vmem:[%s0 + $0xbc] sm:$0xf]
  %v73 = vld [vmem:[%s0 + $0xc0] sm:$0xf]
  %v74 = vld [vmem:[%s0 + $0xc4] sm:$0xf]
  %v75 = vld [vmem:[%s0 + $0xc8] sm:$0xf]
  %v76 = vld [vmem:[%s0 + $0xcc] sm:$0xf]
  %v77 = vld [vmem:[%s0 + $0xd0] sm:$0xf]
  %v78 = vld [vmem:[%s0 + $0xd4] sm:$0xf]
  %v79 = vld [vmem:[%s0 + $0xd8] sm:$0xf]
  %v80 = vld [vmem:[%s0 + $0xdc] sm:$0xf]
  %v81 = vld [vmem:[%s0 + $0xe0] sm:$0xf]
  %v82 = vld [vmem:[%s0 + $0xe4] sm:$0xf]
  %v83 = vld [vmem:[%s0 + $0xe8] sm:$0xf]
  %v84 = vld [vmem:[%s0 + $0xec] sm:$0xf]
  %v85 = vld [vmem:[%s0 + $0xf0] sm:$0xf]
  %v86 = vld [vmem:[%s0 + $0xf4] sm:$0xf]
  %v87 = vld [vmem:[%s0 + $0xf8] sm:$0xf]
  %v88 = vld [vmem:[%s0 + $0xfc] sm:$0xf]
  %v153 = vunpack.c.l.b16 %v25
  %v154 = vunpack.c.l.b16 %v26
  %v155 = vunpack.c.l.b16 %v27
  %v156 = vunpack.c.l.b16 %v28
  %v157 = vunpack.c.l.b16 %v29
  %v158 = vunpack.c.l.b16 %v30
  %v159 = vunpack.c.l.b16 %v31
  %v160 = vunpack.c.l.b16 %v32
  %v161 = vunpack.c.l.b16 %v33
  %v162 = vunpack.c.l.b16 %v34
  %v163 = vunpack.c.l.b16 %v35
  %v164 = vunpack.c.l.b16 %v36
  %v165 = vunpack.c.l.b16 %v37
  %v166 = vunpack.c.l.b16 %v38
  %v167 = vunpack.c.l.b16 %v39
  %v168 = vunpack.c.l.b16 %v40
  %v169 = vunpack.c.l.b16 %v41
  %v170 = vunpack.c.l.b16 %v42
  %v171 = vunpack.c.l.b16 %v43
  %v172 = vunpack.c.l.b16 %v44
  %v173 = vunpack.c.l.b16 %v45
  %v174 = vunpack.c.l.b16 %v46
  %v175 = vunpack.c.l.b16 %v47
  %v176 = vunpack.c.l.b16 %v48
  %v177 = vunpack.c.l.b16 %v49
  %v178 = vunpack.c.l.b16 %v50
  %v179 = vunpack.c.l.b16 %v51
  %v180 = vunpack.c.l.b16 %v52
  %v181 = vunpack.c.l.b16 %v53
  %v182 = vunpack.c.l.b16 %v54
  %v183 = vunpack.c.l.b16 %v55
  %v184 = vunpack.c.l.b16 %v56
  %v185 = vunpack.c.l.b16 %v57
  %v186 = vunpack.c.l.b16 %v58
  %v187 = vunpack.c.l.b16 %v59
  %v188 = vunpack.c.l.b16 %v60
  %v189 = vunpack.c.l.b16 %v61
  %v190 = vunpack.c.l.b16 %v62
  %v191 = vunpack.c.l.b16 %v63
  %v192 = vunpack.c.l.b16 %v64
  %v193 = vunpack.c.l.b16 %v65
  %v194 = vunpack.c.l.b16 %v66
  %v195 = vunpack.c.l.b16 %v67
  %v196 = vunpack.c.l.b16 %v68
  %v197 = vunpack.c.l.b16 %v69
  %v198 = vunpack.c.l.b16 %v70
  %v199 = vunpack.c.l.b16 %v71
  %v200 = vunpack.c.l.b16 %v72
  %v201 = vunpack.c.l.b16 %v73
  %v202 = vunpack.c.l.b16 %v74
  %v203 = vunpack.c.l.b16 %v75
  %v204 = vunpack.c.l.b16 %v76
  %v205 = vunpack.c.l.b16 %v77
  %v206 = vunpack.c.l.b16 %v78
  %v207 = vunpack.c.l.b16 %v79
  %v208 = vunpack.c.l.b16 %v80
  %v209 = vunpack.c.l.b16 %v81
  %v210 = vunpack.c.l.b16 %v82
  %v211 = vunpack.c.l.b16 %v83
  %v212 = vunpack.c.l.b16 %v84
  %v213 = vunpack.c.l.b16 %v85
  %v214 = vunpack.c.l.b16 %v86
  %v215 = vunpack.c.l.b16 %v87
  %v216 = vunpack.c.l.b16 %v88
  %v217 = vpack.c.b16 %v154, %v153
  %v218 = vpack.c.b16 %v156, %v155
  %v219 = vpack.c.b16 %v158, %v157
  %v220 = vpack.c.b16 %v160, %v159
  %v221 = vpack.c.b16 %v162, %v161
  %v222 = vpack.c.b16 %v164, %v163
  %v223 = vpack.c.b16 %v166, %v165
  %v224 = vpack.c.b16 %v168, %v167
  %v225 = vpack.c.b16 %v170, %v169
  %v226 = vpack.c.b16 %v172, %v171
  %v227 = vpack.c.b16 %v174, %v173
  %v228 = vpack.c.b16 %v176, %v175
  %v229 = vpack.c.b16 %v178, %v177
  %v230 = vpack.c.b16 %v180, %v179
  %v231 = vpack.c.b16 %v182, %v181
  %v232 = vpack.c.b16 %v184, %v183
  %v233 = vpack.c.b16 %v186, %v185
  %v234 = vpack.c.b16 %v188, %v187
  %v235 = vpack.c.b16 %v190, %v189
  %v236 = vpack.c.b16 %v192, %v191
  %v237 = vpack.c.b16 %v194, %v193
  %v238 = vpack.c.b16 %v196, %v195
  %v239 = vpack.c.b16 %v198, %v197
  %v240 = vpack.c.b16 %v200, %v199
  %v241 = vpack.c.b16 %v202, %v201
  %v242 = vpack.c.b16 %v204, %v203
  %v243 = vpack.c.b16 %v206, %v205
  %v244 = vpack.c.b16 %v208, %v207
  %v245 = vpack.c.b16 %v210, %v209
  %v246 = vpack.c.b16 %v212, %v211
  %v247 = vpack.c.b16 %v214, %v213
  %v248 = vpack.c.b16 %v216, %v215
  %v256 = vunpack.c.l.b16 %v18
  %v257 = vunpack.c.l.b16 %v19
  %v258 = vunpack.c.l.b16 %v20
  %v259 = vunpack.c.l.b16 %v21
  %v260 = vunpack.c.l.b16 %v22
  %v261 = vunpack.c.l.b16 %v23
  %v262 = vunpack.c.l.b16 %v24
  %v263 = vpack.c.b16 %v257, %v256
  %v264 = vpack.c.b16 %v259, %v258
  %v265 = vpack.c.b16 %v261, %v260
  %v266 = vpack.c.b16 %v262, %v262
  %vm270 = vcmask 400384
  %v272 = vsel %vm270, %v217, 0
  %v275 = vsel %vm270, %v218, 0
  %v278 = vsel %vm270, %v219, 0
  %v281 = vsel %vm270, %v220, 0
  %v284 = vsel %vm270, %v221, 0
  %v287 = vsel %vm270, %v222, 0
  %v290 = vsel %vm270, %v223, 0
  %v293 = vsel %vm270, %v224, 0
  %v296 = vsel %vm270, %v225, 0
  %v299 = vsel %vm270, %v226, 0
  %v302 = vsel %vm270, %v227, 0
  %v305 = vsel %vm270, %v228, 0
  %v308 = vsel %vm270, %v229, 0
  %v311 = vsel %vm270, %v230, 0
  %v314 = vsel %vm270, %v231, 0
  %v317 = vsel %vm270, %v232, 0
  %v320 = vsel %vm270, %v233, 0
  %v323 = vsel %vm270, %v234, 0
  %v326 = vsel %vm270, %v235, 0
  %v329 = vsel %vm270, %v236, 0
  %v332 = vsel %vm270, %v237, 0
  %v335 = vsel %vm270, %v238, 0
  %v338 = vsel %vm270, %v239, 0
  %v341 = vsel %vm270, %v240, 0
  %v344 = vsel %vm270, %v241, 0
  %v347 = vsel %vm270, %v242, 0
  %v350 = vsel %vm270, %v243, 0
  %v353 = vsel %vm270, %v244, 0
  %v356 = vsel %vm270, %v245, 0
  %v359 = vsel %vm270, %v246, 0
  %v362 = vsel %vm270, %v247, 0
  %v365 = vsel %vm270, %v248, 0
  %vm367 = vcmask 1040384
  %v368 = vsel 0, 4294967295, 65535
  %v369 = vsel %vm367, %v368, 0
  %v371 = vand.u32 %v266, %v369
  %373 = vmatprep.subr.bf16.mxu0 0
  %374 = vmatpush1.bf16.msra.mxu0 %v263
  %375 = vmatprep.subr.bf16.mxu0 0
  %376 = vmatpush1.bf16.msra.mxu0 %v264
  %377 = vmatprep.subr.bf16.mxu0 0
  %378 = vmatpush1.bf16.msra.mxu0 %v265
  %379 = vmatprep.subr.bf16.mxu0 0
  %380 = vmatpush1.bf16.msra.mxu0 %v371
  %381 = vmatprep.subr.bf16.mxu0 0
  %382 = vmatpush1.bf16.msra.mxu0 0
  %383 = vmatprep.subr.bf16.mxu0 0
  %384 = vmatpush1.bf16.msra.mxu0 0
  %385 = vmatprep.subr.bf16.mxu0 0
  %386 = vmatpush1.bf16.msra.mxu0 0
  %387 = vmatprep.subr.bf16.mxu0 0
  %388 = vmatpush1.bf16.msra.mxu0 0
  %389 = vmatprep.subr.bf16.mxu0 0
  %390 = vmatpush1.bf16.msra.mxu0 0
  %391 = vmatprep.subr.bf16.mxu0 0
  %392 = vmatpush1.bf16.msra.mxu0 0
  %393 = vmatprep.subr.bf16.mxu0 0
  %394 = vmatpush1.bf16.msra.mxu0 0
  %395 = vmatprep.subr.bf16.mxu0 0
  %396 = vmatpush1.bf16.msra.mxu0 0
  %397 = vmatprep.subr.bf16.mxu0 0
  %398 = vmatpush1.bf16.msra.mxu0 0
  %399 = vmatprep.subr.bf16.mxu0 0
  %400 = vmatpush1.bf16.msra.mxu0 0
  %401 = vmatprep.subr.bf16.mxu0 0
  %402 = vmatpush1.bf16.msra.mxu0 0
  %403 = vmatprep.subr.bf16.mxu0 0
  %404 = vmatpush1.bf16.msra.mxu0 0
  %405 = vmatprep.mubr.bf16.mxu0 0
  %406 = vmatmul.mubr.bf16.gmra.mrb[0].mxu0 %v272
  %v407 = vpop.f32.mrb[0].mxu0
  %v408 = vadd.f32 0.0, %v407
  %v409 = vpop.f32.mrb[0].mxu0
  %v410 = vpop.f32.mrb[0].mxu0
  %v411 = vadd.f32 0.0, %v410
  %v412 = vpop.f32.mrb[0].mxu0
  %413 = vmatprep.mubr.bf16.mxu0 0
  %414 = vmatmul.mubr.bf16.gmra.mrb[0].mxu0 %v275
  %v415 = vpop.f32.mrb[0].mxu0
  %v416 = vadd.f32 0.0, %v415
  %v417 = vpop.f32.mrb[0].mxu0
  %v418 = vpop.f32.mrb[0].mxu0
  %v419 = vadd.f32 0.0, %v418
  %v420 = vpop.f32.mrb[0].mxu0
  %421 = vmatprep.mubr.bf16.mxu0 0
  %422 = vmatmul.mubr.bf16.gmra.mrb[0].mxu0 %v278
  %v423 = vpop.f32.mrb[0].mxu0
  %v424 = vadd.f32 0.0, %v423
  %v425 = vpop.f32.mrb[0].mxu0
  %v426 = vpop.f32.mrb[0].mxu0
  %v427 = vadd.f32 0.0, %v426
  %v428 = vpop.f32.mrb[0].mxu0
  %429 = vmatprep.mubr.bf16.mxu0 0
  %430 = vmatmul.mubr.bf16.gmra.mrb[0].mxu0 %v281
  %v431 = vpop.f32.mrb[0].mxu0
  %v432 = vadd.f32 0.0, %v431
  %v433 = vpop.f32.mrb[0].mxu0
  %v434 = vpop.f32.mrb[0].mxu0
  %v435 = vadd.f32 0.0, %v434
  %v436 = vpop.f32.mrb[0].mxu0
  %437 = vmatprep.mubr.bf16.mxu0 0
  %438 = vmatmul.mubr.bf16.gmra.mrb[0].mxu0 %v284
  %v439 = vpop.f32.mrb[0].mxu0
  %v440 = vadd.f32 0.0, %v439
  %v441 = vpop.f32.mrb[0].mxu0
  %v442 = vpop.f32.mrb[0].mxu0
  %v443 = vadd.f32 0.0, %v442
  %v444 = vpop.f32.mrb[0].mxu0
  %445 = vmatprep.mubr.bf16.mxu0 0
  %446 = vmatmul.mubr.bf16.gmra.mrb[0].mxu0 %v287
  %v447 = vpop.f32.mrb[0].mxu0
  %v448 = vadd.f32 0.0, %v447
  %v449 = vpop.f32.mrb[0].mxu0
  %v450 = vpop.f32.mrb[0].mxu0
  %v451 = vadd.f32 0.0, %v450
  %v452 = vpop.f32.mrb[0].mxu0
  %453 = vmatprep.mubr.bf16.mxu0 0
  %454 = vmatmul.mubr.bf16.gmra.mrb[0].mxu0 %v290
  %v455 = vpop.f32.mrb[0].mxu0
  %v456 = vadd.f32 0.0, %v455
  %v457 = vpop.f32.mrb[0].mxu0
  %v458 = vpop.f32.mrb[0].mxu0
  %v459 = vadd.f32 0.0, %v458
  %v460 = vpop.f32.mrb[0].mxu0
  %461 = vmatprep.mubr.bf16.mxu0 0
  %462 = vmatmul.mubr.bf16.gmra.mrb[0].mxu0 %v293
  %v463 = vpop.f32.mrb[0].mxu0
  %v464 = vadd.f32 0.0, %v463
  %v465 = vpop.f32.mrb[0].mxu0
  %v466 = vpop.f32.mrb[0].mxu0
  %v467 = vadd.f32 0.0, %v466
  %v468 = vpop.f32.mrb[0].mxu0
  %469 = vmatprep.mubr.bf16.mxu0 0
  %470 = vmatmul.mubr.bf16.gmra.mrb[0].mxu0 %v296
  %v471 = vpop.f32.mrb[0].mxu0
  %v472 = vadd.f32 0.0, %v471
  %v473 = vpop.f32.mrb[0].mxu0
  %v474 = vpop.f32.mrb[0].mxu0
  %v475 = vadd.f32 0.0, %v474
  %v476 = vpop.f32.mrb[0].mxu0
  %477 = vmatprep.mubr.bf16.mxu0 0
  %478 = vmatmul.mubr.bf16.gmra.mrb[0].mxu0 %v299
  %v479 = vpop.f32.mrb[0].mxu0
  %v480 = vadd.f32 0.0, %v479
  %v481 = vpop.f32.mrb[0].mxu0
  %v482 = vpop.f32.mrb[0].mxu0
  %v483 = vadd.f32 0.0, %v482
  %v484 = vpop.f32.mrb[0].mxu0
  %485 = vmatprep.mubr.bf16.mxu0 0
  %486 = vmatmul.mubr.bf16.gmra.mrb[0].mxu0 %v302
  %v487 = vpop.f32.mrb[0].mxu0
  %v488 = vadd.f32 0.0, %v487
  %v489 = vpop.f32.mrb[0].mxu0
  %v490 = vpop.f32.mrb[0].mxu0
  %v491 = vadd.f32 0.0, %v490
  %v492 = vpop.f32.mrb[0].mxu0
  %493 = vmatprep.mubr.bf16.mxu0 0
  %494 = vmatmul.mubr.bf16.gmra.mrb[0].mxu0 %v305
  %v495 = vpop.f32.mrb[0].mxu0
  %v496 = vadd.f32 0.0, %v495
  %v497 = vpop.f32.mrb[0].mxu0
  %v498 = vpop.f32.mrb[0].mxu0
  %v499 = vadd.f32 0.0, %v498
  %v500 = vpop.f32.mrb[0].mxu0
  %501 = vmatprep.mubr.bf16.mxu0 0
  %502 = vmatmul.mubr.bf16.gmra.mrb[0].mxu0 %v308
  %v503 = vpop.f32.mrb[0].mxu0
  %v504 = vadd.f32 0.0, %v503
  %v505 = vpop.f32.mrb[0].mxu0
  %v506 = vpop.f32.mrb[0].mxu0
  %v507 = vadd.f32 0.0, %v506
  %v508 = vpop.f32.mrb[0].mxu0
  %509 = vmatprep.mubr.bf16.mxu0 0
  %510 = vmatmul.mubr.bf16.gmra.mrb[0].mxu0 %v311
  %v511 = vpop.f32.mrb[0].mxu0
  %v512 = vadd.f32 0.0, %v511
  %v513 = vpop.f32.mrb[0].mxu0
  %v514 = vpop.f32.mrb[0].mxu0
  %v515 = vadd.f32 0.0, %v514
  %v516 = vpop.f32.mrb[0].mxu0
  %517 = vmatprep.mubr.bf16.mxu0 0
  %518 = vmatmul.mubr.bf16.gmra.mrb[0].mxu0 %v314
  %v519 = vpop.f32.mrb[0].mxu0
  %v520 = vadd.f32 0.0, %v519
  %v521 = vpop.f32.mrb[0].mxu0
  %v522 = vpop.f32.mrb[0].mxu0
  %v523 = vadd.f32 0.0, %v522
  %v524 = vpop.f32.mrb[0].mxu0
  %525 = vmatprep.mubr.bf16.mxu0 0
  %526 = vmatmul.mubr.bf16.gmra.mrb[0].mxu0 %v317
  %v527 = vpop.f32.mrb[0].mxu0
  %v528 = vadd.f32 0.0, %v527
  %v529 = vpop.f32.mrb[0].mxu0
  %v530 = vpop.f32.mrb[0].mxu0
  %v531 = vadd.f32 0.0, %v530
  %v532 = vpop.f32.mrb[0].mxu0
  %533 = vmatprep.mubr.bf16.mxu0 0
  %534 = vmatmul.mubr.bf16.gmra.mrb[0].mxu0 %v320
  %v535 = vpop.f32.mrb[0].mxu0
  %v536 = vadd.f32 0.0, %v535
  %v537 = vpop.f32.mrb[0].mxu0
  %v538 = vpop.f32.mrb[0].mxu0
  %v539 = vadd.f32 0.0, %v538
  %v540 = vpop.f32.mrb[0].mxu0
  %541 = vmatprep.mubr.bf16.mxu0 0
  %542 = vmatmul.mubr.bf16.gmra.mrb[0].mxu0 %v323
  %v543 = vpop.f32.mrb[0].mxu0
  %v544 = vadd.f32 0.0, %v543
  %v545 = vpop.f32.mrb[0].mxu0
  %v546 = vpop.f32.mrb[0].mxu0
  %v547 = vadd.f32 0.0, %v546
  %v548 = vpop.f32.mrb[0].mxu0
  %549 = vmatprep.mubr.bf16.mxu0 0
  %550 = vmatmul.mubr.bf16.gmra.mrb[0].mxu0 %v326
  %v551 = vpop.f32.mrb[0].mxu0
  %v552 = vadd.f32 0.0, %v551
  %v553 = vpop.f32.mrb[0].mxu0
  %v554 = vpop.f32.mrb[0].mxu0
  %v555 = vadd.f32 0.0, %v554
  %v556 = vpop.f32.mrb[0].mxu0
  %557 = vmatprep.mubr.bf16.mxu0 0
  %558 = vmatmul.mubr.bf16.gmra.mrb[0].mxu0 %v329
  %v559 = vpop.f32.mrb[0].mxu0
  %v560 = vadd.f32 0.0, %v559
  %v561 = vpop.f32.mrb[0].mxu0
  %v562 = vpop.f32.mrb[0].mxu0
  %v563 = vadd.f32 0.0, %v562
  %v564 = vpop.f32.mrb[0].mxu0
  %565 = vmatprep.mubr.bf16.mxu0 0
  %566 = vmatmul.mubr.bf16.gmra.mrb[0].mxu0 %v332
  %v567 = vpop.f32.mrb[0].mxu0
  %v568 = vadd.f32 0.0, %v567
  %v569 = vpop.f32.mrb[0].mxu0
  %v570 = vpop.f32.mrb[0].mxu0
  %v571 = vadd.f32 0.0, %v570
  %v572 = vpop.f32.mrb[0].mxu0
  %573 = vmatprep.mubr.bf16.mxu0 0
  %574 = vmatmul.mubr.bf16.gmra.mrb[0].mxu0 %v335
  %v575 = vpop.f32.mrb[0].mxu0
  %v576 = vadd.f32 0.0, %v575
  %v577 = vpop.f32.mrb[0].mxu0
  %v578 = vpop.f32.mrb[0].mxu0
  %v579 = vadd.f32 0.0, %v578
  %v580 = vpop.f32.mrb[0].mxu0
  %581 = vmatprep.mubr.bf16.mxu0 0
  %582 = vmatmul.mubr.bf16.gmra.mrb[0].mxu0 %v338
  %v583 = vpop.f32.mrb[0].mxu0
  %v584 = vadd.f32 0.0, %v583
  %v585 = vpop.f32.mrb[0].mxu0
  %v586 = vpop.f32.mrb[0].mxu0
  %v587 = vadd.f32 0.0, %v586
  %v588 = vpop.f32.mrb[0].mxu0
  %589 = vmatprep.mubr.bf16.mxu0 0
  %590 = vmatmul.mubr.bf16.gmra.mrb[0].mxu0 %v341
  %v591 = vpop.f32.mrb[0].mxu0
  %v592 = vadd.f32 0.0, %v591
  %v593 = vpop.f32.mrb[0].mxu0
  %v594 = vpop.f32.mrb[0].mxu0
  %v595 = vadd.f32 0.0, %v594
  %v596 = vpop.f32.mrb[0].mxu0
  %597 = vmatprep.mubr.bf16.mxu0 0
  %598 = vmatmul.mubr.bf16.gmra.mrb[0].mxu0 %v344
  %v599 = vpop.f32.mrb[0].mxu0
  %v600 = vadd.f32 0.0, %v599
  %v601 = vpop.f32.mrb[0].mxu0
  %v602 = vpop.f32.mrb[0].mxu0
  %v603 = vadd.f32 0.0, %v602
  %v604 = vpop.f32.mrb[0].mxu0
  %605 = vmatprep.mubr.bf16.mxu0 0
  %606 = vmatmul.mubr.bf16.gmra.mrb[0].mxu0 %v347
  %v607 = vpop.f32.mrb[0].mxu0
  %v608 = vadd.f32 0.0, %v607
  %v609 = vpop.f32.mrb[0].mxu0
  %v610 = vpop.f32.mrb[0].mxu0
  %v611 = vadd.f32 0.0, %v610
  %v612 = vpop.f32.mrb[0].mxu0
  %613 = vmatprep.mubr.bf16.mxu0 0
  %614 = vmatmul.mubr.bf16.gmra.mrb[0].mxu0 %v350
  %v615 = vpop.f32.mrb[0].mxu0
  %v616 = vadd.f32 0.0, %v615
  %v617 = vpop.f32.mrb[0].mxu0
  %v618 = vpop.f32.mrb[0].mxu0
  %v619 = vadd.f32 0.0, %v618
  %v620 = vpop.f32.mrb[0].mxu0
  %621 = vmatprep.mubr.bf16.mxu0 0
  %622 = vmatmul.mubr.bf16.gmra.mrb[0].mxu0 %v353
  %v623 = vpop.f32.mrb[0].mxu0
  %v624 = vadd.f32 0.0, %v623
  %v625 = vpop.f32.mrb[0].mxu0
  %v626 = vpop.f32.mrb[0].mxu0
  %v627 = vadd.f32 0.0, %v626
  %v628 = vpop.f32.mrb[0].mxu0
  %629 = vmatprep.mubr.bf16.mxu0 0
  %630 = vmatmul.mubr.bf16.gmra.mrb[0].mxu0 %v356
  %v631 = vpop.f32.mrb[0].mxu0
  %v632 = vadd.f32 0.0, %v631
  %v633 = vpop.f32.mrb[0].mxu0
  %v634 = vpop.f32.mrb[0].mxu0
  %v635 = vadd.f32 0.0, %v634
  %v636 = vpop.f32.mrb[0].mxu0
  %637 = vmatprep.mubr.bf16.mxu0 0
  %638 = vmatmul.mubr.bf16.gmra.mrb[0].mxu0 %v359
  %v639 = vpop.f32.mrb[0].mxu0
  %v640 = vadd.f32 0.0, %v639
  %v641 = vpop.f32.mrb[0].mxu0
  %v642 = vpop.f32.mrb[0].mxu0
  %v643 = vadd.f32 0.0, %v642
  %v644 = vpop.f32.mrb[0].mxu0
  %645 = vmatprep.mubr.bf16.mxu0 0
  %646 = vmatmul.mubr.bf16.gmra.mrb[0].mxu0 %v362
  %v647 = vpop.f32.mrb[0].mxu0
  %v648 = vadd.f32 0.0, %v647
  %v649 = vpop.f32.mrb[0].mxu0
  %v650 = vpop.f32.mrb[0].mxu0
  %v651 = vadd.f32 0.0, %v650
  %v652 = vpop.f32.mrb[0].mxu0
  %653 = vmatprep.mubr.bf16.mxu0 0
  %654 = vmatmul.mubr.bf16.gmra.mrb[0].mxu0 %v365
  %v655 = vpop.f32.mrb[0].mxu0
  %v656 = vadd.f32 0.0, %v655
  %v657 = vpop.f32.mrb[0].mxu0
  %v658 = vpop.f32.mrb[0].mxu0
  %v659 = vadd.f32 0.0, %v658
  %v660 = vpop.f32.mrb[0].mxu0
  %661 = vdwg.mxu0
  %v662 = vmax.f32 %v408, 0.0
  %v663 = vmax.f32 %v411, 0.0
  %v664 = vmax.f32 %v416, 0.0
  %v665 = vmax.f32 %v419, 0.0
  %v666 = vmax.f32 %v424, 0.0
  %v667 = vmax.f32 %v427, 0.0
  %v668 = vmax.f32 %v432, 0.0
  %v669 = vmax.f32 %v435, 0.0
  %v670 = vmax.f32 %v440, 0.0
  %v671 = vmax.f32 %v443, 0.0
  %v672 = vmax.f32 %v448, 0.0
  %v673 = vmax.f32 %v451, 0.0
  %v674 = vmax.f32 %v456, 0.0
  %v675 = vmax.f32 %v459, 0.0
  %v676 = vmax.f32 %v464, 0.0
  %v677 = vmax.f32 %v467, 0.0
  %v678 = vmax.f32 %v472, 0.0
  %v679 = vmax.f32 %v475, 0.0
  %v680 = vmax.f32 %v480, 0.0
  %v681 = vmax.f32 %v483, 0.0
  %v682 = vmax.f32 %v488, 0.0
  %v683 = vmax.f32 %v491, 0.0
  %v684 = vmax.f32 %v496, 0.0
  %v685 = vmax.f32 %v499, 0.0
  %v686 = vmax.f32 %v504, 0.0
  %v687 = vmax.f32 %v507, 0.0
  %v688 = vmax.f32 %v512, 0.0
  %v689 = vmax.f32 %v515, 0.0
  %v690 = vmax.f32 %v520, 0.0
  %v691 = vmax.f32 %v523, 0.0
  %v692 = vmax.f32 %v528, 0.0
  %v693 = vmax.f32 %v531, 0.0
  %v694 = vmax.f32 %v536, 0.0
  %v695 = vmax.f32 %v539, 0.0
  %v696 = vmax.f32 %v544, 0.0
  %v697 = vmax.f32 %v547, 0.0
  %v698 = vmax.f32 %v552, 0.0
  %v699 = vmax.f32 %v555, 0.0
  %v700 = vmax.f32 %v560, 0.0
  %v701 = vmax.f32 %v563, 0.0
  %v702 = vmax.f32 %v568, 0.0
  %v703 = vmax.f32 %v571, 0.0
  %v704 = vmax.f32 %v576, 0.0
  %v705 = vmax.f32 %v579, 0.0
  %v706 = vmax.f32 %v584, 0.0
  %v707 = vmax.f32 %v587, 0.0
  %v708 = vmax.f32 %v592, 0.0
  %v709 = vmax.f32 %v595, 0.0
  %v710 = vmax.f32 %v600, 0.0
  %v711 = vmax.f32 %v603, 0.0
  %v712 = vmax.f32 %v608, 0.0
  %v713 = vmax.f32 %v611, 0.0
  %v714 = vmax.f32 %v616, 0.0
  %v715 = vmax.f32 %v619, 0.0
  %v716 = vmax.f32 %v624, 0.0
  %v717 = vmax.f32 %v627, 0.0
  %v718 = vmax.f32 %v632, 0.0
  %v719 = vmax.f32 %v635, 0.0
  %v720 = vmax.f32 %v640, 0.0
  %v721 = vmax.f32 %v643, 0.0
  %v722 = vmax.f32 %v648, 0.0
  %v723 = vmax.f32 %v651, 0.0
  %v724 = vmax.f32 %v656, 0.0
  %v725 = vmax.f32 %v659, 0.0
  %v726 = vpack.c.bf16 %v663, %v662
  %v727 = vpack.c.bf16 %v665, %v664
  %v728 = vpack.c.bf16 %v667, %v666
  %v729 = vpack.c.bf16 %v669, %v668
  %v730 = vpack.c.bf16 %v671, %v670
  %v731 = vpack.c.bf16 %v673, %v672
  %v732 = vpack.c.bf16 %v675, %v674
  %v733 = vpack.c.bf16 %v677, %v676
  %v734 = vpack.c.bf16 %v679, %v678
  %v735 = vpack.c.bf16 %v681, %v680
  %v736 = vpack.c.bf16 %v683, %v682
  %v737 = vpack.c.bf16 %v685, %v684
  %v738 = vpack.c.bf16 %v687, %v686
  %v739 = vpack.c.bf16 %v689, %v688
  %v740 = vpack.c.bf16 %v691, %v690
  %v741 = vpack.c.bf16 %v693, %v692
  %v742 = vpack.c.bf16 %v695, %v694
  %v743 = vpack.c.bf16 %v697, %v696
  %v744 = vpack.c.bf16 %v699, %v698
  %v745 = vpack.c.bf16 %v701, %v700
  %v746 = vpack.c.bf16 %v703, %v702
  %v747 = vpack.c.bf16 %v705, %v704
  %v748 = vpack.c.bf16 %v707, %v706
  %v749 = vpack.c.bf16 %v709, %v708
  %v750 = vpack.c.bf16 %v711, %v710
  %v751 = vpack.c.bf16 %v713, %v712
  %v752 = vpack.c.bf16 %v715, %v714
  %v753 = vpack.c.bf16 %v717, %v716
  %v754 = vpack.c.bf16 %v719, %v718
  %v755 = vpack.c.bf16 %v721, %v720
  %v756 = vpack.c.bf16 %v723, %v722
  %v757 = vpack.c.bf16 %v725, %v724
  %v758 = vld [vmem:[%s1] sm:$0xf]
  %v759 = vld [vmem:[%s1 + $0x4] sm:$0xf]
  %v760 = vld [vmem:[%s1 + $0x8] sm:$0xf]
  %v761 = vld [vmem:[%s1 + $0xc] sm:$0xf]
  %v762 = vld [vmem:[%s1 + $0x10] sm:$0xf]
  %v763 = vld [vmem:[%s1 + $0x14] sm:$0xf]
  %v764 = vld [vmem:[%s1 + $0x18] sm:$0xf]
  %v765 = vld [vmem:[%s1 + $0x1c] sm:$0xf]
  %v770 = vunpack.c.l.b16 %v762
  %v771 = vunpack.c.l.b16 %v763
  %v772 = vunpack.c.l.b16 %v764
  %v773 = vunpack.c.l.b16 %v765
  %v774 = vpack.c.b16 %v771, %v770
  %v775 = vpack.c.b16 %v773, %v772
  %vm778 = vcmask 261120
  %v780 = vsel %vm778, %v728, 0
  %v783 = vsel %vm778, %v729, 0
  %785 = vmatprep.subr.bf16.mxu0 0
  %786 = vmatpush1.bf16.msra.mxu0 %v774
  %787 = vmatprep.subr.bf16.mxu0 0
  %788 = vmatpush1.bf16.msra.mxu0 %v775
  %789 = vmatprep.subr.bf16.mxu0 0
  %790 = vmatpush1.bf16.msra.mxu0 0
  %791 = vmatprep.subr.bf16.mxu0 0
  %792 = vmatpush1.bf16.msra.mxu0 0
  %793 = vmatprep.subr.bf16.mxu0 0
  %794 = vmatpush1.bf16.msra.mxu0 0
  %795 = vmatprep.subr.bf16.mxu0 0
  %796 = vmatpush1.bf16.msra.mxu0 0
  %797 = vmatprep.subr.bf16.mxu0 0
  %798 = vmatpush1.bf16.msra.mxu0 0
  %799 = vmatprep.subr.bf16.mxu0 0
  %800 = vmatpush1.bf16.msra.mxu0 0
  %801 = vmatprep.subr.bf16.mxu0 0
  %802 = vmatpush1.bf16.msra.mxu0 0
  %803 = vmatprep.subr.bf16.mxu0 0
  %804 = vmatpush1.bf16.msra.mxu0 0
  %805 = vmatprep.subr.bf16.mxu0 0
  %806 = vmatpush1.bf16.msra.mxu0 0
  %807 = vmatprep.subr.bf16.mxu0 0
  %808 = vmatpush1.bf16.msra.mxu0 0
  %809 = vmatprep.subr.bf16.mxu0 0
  %810 = vmatpush1.bf16.msra.mxu0 0
  %811 = vmatprep.subr.bf16.mxu0 0
  %812 = vmatpush1.bf16.msra.mxu0 0
  %813 = vmatprep.subr.bf16.mxu0 0
  %814 = vmatpush1.bf16.msra.mxu0 0
  %815 = vmatprep.subr.bf16.mxu0 0
  %816 = vmatpush1.bf16.msra.mxu0 0
  %817 = vmatprep.mubr.bf16.mxu0 0
  %818 = vmatmul.mubr.bf16.gmra.mrb[0].mxu0 %v780
  %v819 = vpop.f32.mrb[0].mxu0
  %v820 = vadd.f32 0.0, %v819
  %v821 = vpop.f32.mrb[0].mxu0
  %v822 = vpop.f32.mrb[0].mxu0
  %v823 = vadd.f32 0.0, %v822
  %v824 = vpop.f32.mrb[0].mxu0
  %825 = vmatprep.mubr.bf16.mxu0 0
  %826 = vmatmul.mubr.bf16.gmra.mrb[0].mxu0 %v783
  %v827 = vpop.f32.mrb[0].mxu0
  %v828 = vadd.f32 0.0, %v827
  %v829 = vpop.f32.mrb[0].mxu0
  %v830 = vpop.f32.mrb[0].mxu0
  %v831 = vadd.f32 0.0, %v830
  %v832 = vpop.f32.mrb[0].mxu0
  %833 = vdwg.mxu0
  %v838 = vunpack.c.l.b16 %v758
  %v839 = vunpack.c.l.b16 %v759
  %v840 = vunpack.c.l.b16 %v760
  %v841 = vunpack.c.l.b16 %v761
  %v842 = vpack.c.b16 %v839, %v838
  %v843 = vpack.c.b16 %v841, %v840
  %v847 = vsel %vm778, %v726, 0
  %v850 = vsel %vm778, %v727, 0
  %852 = vmatprep.subr.bf16.mxu0 0
  %853 = vmatpush1.bf16.msra.mxu0 %v842
  %854 = vmatprep.subr.bf16.mxu0 0
  %855 = vmatpush1.bf16.msra.mxu0 %v843
  %856 = vmatprep.subr.bf16.mxu0 0
  %857 = vmatpush1.bf16.msra.mxu0 0
  %858 = vmatprep.subr.bf16.mxu0 0
  %859 = vmatpush1.bf16.msra.mxu0 0
  %860 = vmatprep.subr.bf16.mxu0 0
  %861 = vmatpush1.bf16.msra.mxu0 0
  %862 = vmatprep.subr.bf16.mxu0 0
  %863 = vmatpush1.bf16.msra.mxu0 0
  %864 = vmatprep.subr.bf16.mxu0 0
  %865 = vmatpush1.bf16.msra.mxu0 0
  %866 = vmatprep.subr.bf16.mxu0 0
  %867 = vmatpush1.bf16.msra.mxu0 0
  %868 = vmatprep.subr.bf16.mxu0 0
  %869 = vmatpush1.bf16.msra.mxu0 0
  %870 = vmatprep.subr.bf16.mxu0 0
  %871 = vmatpush1.bf16.msra.mxu0 0
  %872 = vmatprep.subr.bf16.mxu0 0
  %873 = vmatpush1.bf16.msra.mxu0 0
  %874 = vmatprep.subr.bf16.mxu0 0
  %875 = vmatpush1.bf16.msra.mxu0 0
  %876 = vmatprep.subr.bf16.mxu0 0
  %877 = vmatpush1.bf16.msra.mxu0 0
  %878 = vmatprep.subr.bf16.mxu0 0
  %879 = vmatpush1.bf16.msra.mxu0 0
  %880 = vmatprep.subr.bf16.mxu0 0
  %881 = vmatpush1.bf16.msra.mxu0 0
  %882 = vmatprep.subr.bf16.mxu0 0
  %883 = vmatpush1.bf16.msra.mxu0 0
  %884 = vmatprep.mubr.bf16.mxu0 0
  %885 = vmatmul.mubr.bf16.gmra.mrb[0].mxu0 %v847
  %v886 = vpop.f32.mrb[0].mxu0
  %v887 = vadd.f32 %v820, %v886
  %v888 = vpop.f32.mrb[0].mxu0
  %v889 = vpop.f32.mrb[0].mxu0
  %v890 = vadd.f32 %v823, %v889
  %v891 = vpop.f32.mrb[0].mxu0
  %892 = vmatprep.mubr.bf16.mxu0 0
  %893 = vmatmul.mubr.bf16.gmra.mrb[0].mxu0 %v850
  %v894 = vpop.f32.mrb[0].mxu0
  %v895 = vadd.f32 %v828, %v894
  %v896 = vpop.f32.mrb[0].mxu0
  %v897 = vpop.f32.mrb[0].mxu0
  %v898 = vadd.f32 %v831, %v897
  %v899 = vpop.f32.mrb[0].mxu0
  %900 = vdwg.mxu0
  %v901 = vld [vmem:[%s1 + $0x20] sm:$0xf]
  %v902 = vld [vmem:[%s1 + $0x24] sm:$0xf]
  %v903 = vld [vmem:[%s1 + $0x28] sm:$0xf]
  %v904 = vld [vmem:[%s1 + $0x2c] sm:$0xf]
  %v909 = vunpack.c.l.b16 %v901
  %v910 = vunpack.c.l.b16 %v902
  %v911 = vunpack.c.l.b16 %v903
  %v912 = vunpack.c.l.b16 %v904
  %v913 = vpack.c.b16 %v910, %v909
  %v914 = vpack.c.b16 %v912, %v911
  %v918 = vsel %vm778, %v730, 0
  %v921 = vsel %vm778, %v731, 0
  %923 = vmatprep.subr.bf16.mxu0 0
  %924 = vmatpush1.bf16.msra.mxu0 %v913
  %925 = vmatprep.subr.bf16.mxu0 0
  %926 = vmatpush1.bf16.msra.mxu0 %v914
  %927 = vmatprep.subr.bf16.mxu0 0
  %928 = vmatpush1.bf16.msra.mxu0 0
  %929 = vmatprep.subr.bf16.mxu0 0
  %930 = vmatpush1.bf16.msra.mxu0 0
  %931 = vmatprep.subr.bf16.mxu0 0
  %932 = vmatpush1.bf16.msra.mxu0 0
  %933 = vmatprep.subr.bf16.mxu0 0
  %934 = vmatpush1.bf16.msra.mxu0 0
  %935 = vmatprep.subr.bf16.mxu0 0
  %936 = vmatpush1.bf16.msra.mxu0 0
  %937 = vmatprep.subr.bf16.mxu0 0
  %938 = vmatpush1.bf16.msra.mxu0 0
  %939 = vmatprep.subr.bf16.mxu0 0
  %940 = vmatpush1.bf16.msra.mxu0 0
  %941 = vmatprep.subr.bf16.mxu0 0
  %942 = vmatpush1.bf16.msra.mxu0 0
  %943 = vmatprep.subr.bf16.mxu0 0
  %944 = vmatpush1.bf16.msra.mxu0 0
  %945 = vmatprep.subr.bf16.mxu0 0
  %946 = vmatpush1.bf16.msra.mxu0 0
  %947 = vmatprep.subr.bf16.mxu0 0
  %948 = vmatpush1.bf16.msra.mxu0 0
  %949 = vmatprep.subr.bf16.mxu0 0
  %950 = vmatpush1.bf16.msra.mxu0 0
  %951 = vmatprep.subr.bf16.mxu0 0
  %952 = vmatpush1.bf16.msra.mxu0 0
  %953 = vmatprep.subr.bf16.mxu0 0
  %954 = vmatpush1.bf16.msra.mxu0 0
  %955 = vmatprep.mubr.bf16.mxu0 0
  %956 = vmatmul.mubr.bf16.gmra.mrb[0].mxu0 %v918
  %v957 = vpop.f32.mrb[0].mxu0
  %v958 = vadd.f32 0.0, %v957
  %v959 = vpop.f32.mrb[0].mxu0
  %v960 = vpop.f32.mrb[0].mxu0
  %v961 = vadd.f32 0.0, %v960
  %v962 = vpop.f32.mrb[0].mxu0
  %963 = vmatprep.mubr.bf16.mxu0 0
  %964 = vmatmul.mubr.bf16.gmra.mrb[0].mxu0 %v921
  %v965 = vpop.f32.mrb[0].mxu0
  %v966 = vadd.f32 0.0, %v965
  %v967 = vpop.f32.mrb[0].mxu0
  %v968 = vpop.f32.mrb[0].mxu0
  %v969 = vadd.f32 0.0, %v968
  %v970 = vpop.f32.mrb[0].mxu0
  %971 = vdwg.mxu0
  %v972 = vadd.f32 %v887, %v958
  %v973 = vadd.f32 %v890, %v961
  %v974 = vadd.f32 %v895, %v966
  %v975 = vadd.f32 %v898, %v969
  %v976 = vld [vmem:[%s1 + $0x30] sm:$0xf]
  %v977 = vld [vmem:[%s1 + $0x34] sm:$0xf]
  %v978 = vld [vmem:[%s1 + $0x38] sm:$0xf]
  %v979 = vld [vmem:[%s1 + $0x3c] sm:$0xf]
  %v984 = vunpack.c.l.b16 %v976
  %v985 = vunpack.c.l.b16 %v977
  %v986 = vunpack.c.l.b16 %v978
  %v987 = vunpack.c.l.b16 %v979
  %v988 = vpack.c.b16 %v985, %v984
  %v989 = vpack.c.b16 %v987, %v986
  %v993 = vsel %vm778, %v732, 0
  %v996 = vsel %vm778, %v733, 0
  %998 = vmatprep.subr.bf16.mxu0 0
  %999 = vmatpush1.bf16.msra.mxu0 %v988
  %1000 = vmatprep.subr.bf16.mxu0 0
  %1001 = vmatpush1.bf16.msra.mxu0 %v989
  %1002 = vmatprep.subr.bf16.mxu0 0
  %1003 = vmatpush1.bf16.msra.mxu0 0
  %1004 = vmatprep.subr.bf16.mxu0 0
  %1005 = vmatpush1.bf16.msra.mxu0 0
  %1006 = vmatprep.subr.bf16.mxu0 0
  %1007 = vmatpush1.bf16.msra.mxu0 0
  %1008 = vmatprep.subr.bf16.mxu0 0
  %1009 = vmatpush1.bf16.msra.mxu0 0
  %1010 = vmatprep.subr.bf16.mxu0 0
  %1011 = vmatpush1.bf16.msra.mxu0 0
  %1012 = vmatprep.subr.bf16.mxu0 0
  %1013 = vmatpush1.bf16.msra.mxu0 0
  %1014 = vmatprep.subr.bf16.mxu0 0
  %1015 = vmatpush1.bf16.msra.mxu0 0
  %1016 = vmatprep.subr.bf16.mxu0 0
  %1017 = vmatpush1.bf16.msra.mxu0 0
  %1018 = vmatprep.subr.bf16.mxu0 0
  %1019 = vmatpush1.bf16.msra.mxu0 0
  %1020 = vmatprep.subr.bf16.mxu0 0
  %1021 = vmatpush1.bf16.msra.mxu0 0
  %1022 = vmatprep.subr.bf16.mxu0 0
  %1023 = vmatpush1.bf16.msra.mxu0 0
  %1024 = vmatprep.subr.bf16.mxu0 0
  %1025 = vmatpush1.bf16.msra.mxu0 0
  %1026 = vmatprep.subr.bf16.mxu0 0
  %1027 = vmatpush1.bf16.msra.mxu0 0
  %1028 = vmatprep.subr.bf16.mxu0 0
  %1029 = vmatpush1.bf16.msra.mxu0 0
  %1030 = vmatprep.mubr.bf16.mxu0 0
  %1031 = vmatmul.mubr.bf16.gmra.mrb[0].mxu0 %v993
  %v1032 = vpop.f32.mrb[0].mxu0
  %v1033 = vadd.f32 0.0, %v1032
  %v1034 = vpop.f32.mrb[0].mxu0
  %v1035 = vpop.f32.mrb[0].mxu0
  %v1036 = vadd.f32 0.0, %v1035
  %v1037 = vpop.f32.mrb[0].mxu0
  %1038 = vmatprep.mubr.bf16.mxu0 0
  %1039 = vmatmul.mubr.bf16.gmra.mrb[0].mxu0 %v996
  %v1040 = vpop.f32.mrb[0].mxu0
  %v1041 = vadd.f32 0.0, %v1040
  %v1042 = vpop.f32.mrb[0].mxu0
  %v1043 = vpop.f32.mrb[0].mxu0
  %v1044 = vadd.f32 0.0, %v1043
  %v1045 = vpop.f32.mrb[0].mxu0
  %1046 = vdwg.mxu0
  %v1047 = vadd.f32 %v972, %v1033
  %v1048 = vadd.f32 %v973, %v1036
  %v1049 = vadd.f32 %v974, %v1041
  %v1050 = vadd.f32 %v975, %v1044
  %v1051 = vld [vmem:[%s1 + $0x40] sm:$0xf]
  %v1052 = vld [vmem:[%s1 + $0x44] sm:$0xf]
  %v1053 = vld [vmem:[%s1 + $0x48] sm:$0xf]
  %v1054 = vld [vmem:[%s1 + $0x4c] sm:$0xf]
  %v1055 = vld [vmem:[%s1 + $0x50] sm:$0xf]
  %v1056 = vld [vmem:[%s1 + $0x54] sm:$0xf]
  %v1057 = vld [vmem:[%s1 + $0x58] sm:$0xf]
  %v1058 = vld [vmem:[%s1 + $0x5c] sm:$0xf]
  %v1063 = vunpack.c.l.b16 %v1055
  %v1064 = vunpack.c.l.b16 %v1056
  %v1065 = vunpack.c.l.b16 %v1057
  %v1066 = vunpack.c.l.b16 %v1058
  %v1067 = vpack.c.b16 %v1064, %v1063
  %v1068 = vpack.c.b16 %v1066, %v1065
  %v1072 = vsel %vm778, %v736, 0
  %v1075 = vsel %vm778, %v737, 0
  %1077 = vmatprep.subr.bf16.mxu0 0
  %1078 = vmatpush1.bf16.msra.mxu0 %v1067
  %1079 = vmatprep.subr.bf16.mxu0 0
  %1080 = vmatpush1.bf16.msra.mxu0 %v1068
  %1081 = vmatprep.subr.bf16.mxu0 0
  %1082 = vmatpush1.bf16.msra.mxu0 0
  %1083 = vmatprep.subr.bf16.mxu0 0
  %1084 = vmatpush1.bf16.msra.mxu0 0
  %1085 = vmatprep.subr.bf16.mxu0 0
  %1086 = vmatpush1.bf16.msra.mxu0 0
  %1087 = vmatprep.subr.bf16.mxu0 0
  %1088 = vmatpush1.bf16.msra.mxu0 0
  %1089 = vmatprep.subr.bf16.mxu0 0
  %1090 = vmatpush1.bf16.msra.mxu0 0
  %1091 = vmatprep.subr.bf16.mxu0 0
  %1092 = vmatpush1.bf16.msra.mxu0 0
  %1093 = vmatprep.subr.bf16.mxu0 0
  %1094 = vmatpush1.bf16.msra.mxu0 0
  %1095 = vmatprep.subr.bf16.mxu0 0
  %1096 = vmatpush1.bf16.msra.mxu0 0
  %1097 = vmatprep.subr.bf16.mxu0 0
  %1098 = vmatpush1.bf16.msra.mxu0 0
  %1099 = vmatprep.subr.bf16.mxu0 0
  %1100 = vmatpush1.bf16.msra.mxu0 0
  %1101 = vmatprep.subr.bf16.mxu0 0
  %1102 = vmatpush1.bf16.msra.mxu0 0
  %1103 = vmatprep.subr.bf16.mxu0 0
  %1104 = vmatpush1.bf16.msra.mxu0 0
  %1105 = vmatprep.subr.bf16.mxu0 0
  %1106 = vmatpush1.bf16.msra.mxu0 0
  %1107 = vmatprep.subr.bf16.mxu0 0
  %1108 = vmatpush1.bf16.msra.mxu0 0
  %1109 = vmatprep.mubr.bf16.mxu0 0
  %1110 = vmatmul.mubr.bf16.gmra.mrb[0].mxu0 %v1072
  %v1111 = vpop.f32.mrb[0].mxu0
  %v1112 = vadd.f32 0.0, %v1111
  %v1113 = vpop.f32.mrb[0].mxu0
  %v1114 = vpop.f32.mrb[0].mxu0
  %v1115 = vadd.f32 0.0, %v1114
  %v1116 = vpop.f32.mrb[0].mxu0
  %1117 = vmatprep.mubr.bf16.mxu0 0
  %1118 = vmatmul.mubr.bf16.gmra.mrb[0].mxu0 %v1075
  %v1119 = vpop.f32.mrb[0].mxu0
  %v1120 = vadd.f32 0.0, %v1119
  %v1121 = vpop.f32.mrb[0].mxu0
  %v1122 = vpop.f32.mrb[0].mxu0
  %v1123 = vadd.f32 0.0, %v1122
  %v1124 = vpop.f32.mrb[0].mxu0
  %1125 = vdwg.mxu0
  %v1130 = vunpack.c.l.b16 %v1051
  %v1131 = vunpack.c.l.b16 %v1052
  %v1132 = vunpack.c.l.b16 %v1053
  %v1133 = vunpack.c.l.b16 %v1054
  %v1134 = vpack.c.b16 %v1131, %v1130
  %v1135 = vpack.c.b16 %v1133, %v1132
  %v1139 = vsel %vm778, %v734, 0
  %v1142 = vsel %vm778, %v735, 0
  %1144 = vmatprep.subr.bf16.mxu0 0
  %1145 = vmatpush1.bf16.msra.mxu0 %v1134
  %1146 = vmatprep.subr.bf16.mxu0 0
  %1147 = vmatpush1.bf16.msra.mxu0 %v1135
  %1148 = vmatprep.subr.bf16.mxu0 0
  %1149 = vmatpush1.bf16.msra.mxu0 0
  %1150 = vmatprep.subr.bf16.mxu0 0
  %1151 = vmatpush1.bf16.msra.mxu0 0
  %1152 = vmatprep.subr.bf16.mxu0 0
  %1153 = vmatpush1.bf16.msra.mxu0 0
  %1154 = vmatprep.subr.bf16.mxu0 0
  %1155 = vmatpush1.bf16.msra.mxu0 0
  %1156 = vmatprep.subr.bf16.mxu0 0
  %1157 = vmatpush1.bf16.msra.mxu0 0
  %1158 = vmatprep.subr.bf16.mxu0 0
  %1159 = vmatpush1.bf16.msra.mxu0 0
  %1160 = vmatprep.subr.bf16.mxu0 0
  %1161 = vmatpush1.bf16.msra.mxu0 0
  %1162 = vmatprep.subr.bf16.mxu0 0
  %1163 = vmatpush1.bf16.msra.mxu0 0
  %1164 = vmatprep.subr.bf16.mxu0 0
  %1165 = vmatpush1.bf16.msra.mxu0 0
  %1166 = vmatprep.subr.bf16.mxu0 0
  %1167 = vmatpush1.bf16.msra.mxu0 0
  %1168 = vmatprep.subr.bf16.mxu0 0
  %1169 = vmatpush1.bf16.msra.mxu0 0
  %1170 = vmatprep.subr.bf16.mxu0 0
  %1171 = vmatpush1.bf16.msra.mxu0 0
  %1172 = vmatprep.subr.bf16.mxu0 0
  %1173 = vmatpush1.bf16.msra.mxu0 0
  %1174 = vmatprep.subr.bf16.mxu0 0
  %1175 = vmatpush1.bf16.msra.mxu0 0
  %1176 = vmatprep.mubr.bf16.mxu0 0
  %1177 = vmatmul.mubr.bf16.gmra.mrb[0].mxu0 %v1139
  %v1178 = vpop.f32.mrb[0].mxu0
  %v1179 = vadd.f32 %v1112, %v1178
  %v1180 = vpop.f32.mrb[0].mxu0
  %v1181 = vpop.f32.mrb[0].mxu0
  %v1182 = vadd.f32 %v1115, %v1181
  %v1183 = vpop.f32.mrb[0].mxu0
  %1184 = vmatprep.mubr.bf16.mxu0 0
  %1185 = vmatmul.mubr.bf16.gmra.mrb[0].mxu0 %v1142
  %v1186 = vpop.f32.mrb[0].mxu0
  %v1187 = vadd.f32 %v1120, %v1186
  %v1188 = vpop.f32.mrb[0].mxu0
  %v1189 = vpop.f32.mrb[0].mxu0
  %v1190 = vadd.f32 %v1123, %v1189
  %v1191 = vpop.f32.mrb[0].mxu0
  %1192 = vdwg.mxu0
  %v1193 = vld [vmem:[%s1 + $0x60] sm:$0xf]
  %v1194 = vld [vmem:[%s1 + $0x64] sm:$0xf]
  %v1195 = vld [vmem:[%s1 + $0x68] sm:$0xf]
  %v1196 = vld [vmem:[%s1 + $0x6c] sm:$0xf]
  %v1201 = vunpack.c.l.b16 %v1193
  %v1202 = vunpack.c.l.b16 %v1194
  %v1203 = vunpack.c.l.b16 %v1195
  %v1204 = vunpack.c.l.b16 %v1196
  %v1205 = vpack.c.b16 %v1202, %v1201
  %v1206 = vpack.c.b16 %v1204, %v1203
  %v1210 = vsel %vm778, %v738, 0
  %v1213 = vsel %vm778, %v739, 0
  %1215 = vmatprep.subr.bf16.mxu0 0
  %1216 = vmatpush1.bf16.msra.mxu0 %v1205
  %1217 = vmatprep.subr.bf16.mxu0 0
  %1218 = vmatpush1.bf16.msra.mxu0 %v1206
  %1219 = vmatprep.subr.bf16.mxu0 0
  %1220 = vmatpush1.bf16.msra.mxu0 0
  %1221 = vmatprep.subr.bf16.mxu0 0
  %1222 = vmatpush1.bf16.msra.mxu0 0
  %1223 = vmatprep.subr.bf16.mxu0 0
  %1224 = vmatpush1.bf16.msra.mxu0 0
  %1225 = vmatprep.subr.bf16.mxu0 0
  %1226 = vmatpush1.bf16.msra.mxu0 0
  %1227 = vmatprep.subr.bf16.mxu0 0
  %1228 = vmatpush1.bf16.msra.mxu0 0
  %1229 = vmatprep.subr.bf16.mxu0 0
  %1230 = vmatpush1.bf16.msra.mxu0 0
  %1231 = vmatprep.subr.bf16.mxu0 0
  %1232 = vmatpush1.bf16.msra.mxu0 0
  %1233 = vmatprep.subr.bf16.mxu0 0
  %1234 = vmatpush1.bf16.msra.mxu0 0
  %1235 = vmatprep.subr.bf16.mxu0 0
  %1236 = vmatpush1.bf16.msra.mxu0 0
  %1237 = vmatprep.subr.bf16.mxu0 0
  %1238 = vmatpush1.bf16.msra.mxu0 0
  %1239 = vmatprep.subr.bf16.mxu0 0
  %1240 = vmatpush1.bf16.msra.mxu0 0
  %1241 = vmatprep.subr.bf16.mxu0 0
  %1242 = vmatpush1.bf16.msra.mxu0 0
  %1243 = vmatprep.subr.bf16.mxu0 0
  %1244 = vmatpush1.bf16.msra.mxu0 0
  %1245 = vmatprep.subr.bf16.mxu0 0
  %1246 = vmatpush1.bf16.msra.mxu0 0
  %1247 = vmatprep.mubr.bf16.mxu0 0
  %1248 = vmatmul.mubr.bf16.gmra.mrb[0].mxu0 %v1210
  %v1249 = vpop.f32.mrb[0].mxu0
  %v1250 = vadd.f32 0.0, %v1249
  %v1251 = vpop.f32.mrb[0].mxu0
  %v1252 = vpop.f32.mrb[0].mxu0
  %v1253 = vadd.f32 0.0, %v1252
  %v1254 = vpop.f32.mrb[0].mxu0
  %1255 = vmatprep.mubr.bf16.mxu0 0
  %1256 = vmatmul.mubr.bf16.gmra.mrb[0].mxu0 %v1213
  %v1257 = vpop.f32.mrb[0].mxu0
  %v1258 = vadd.f32 0.0, %v1257
  %v1259 = vpop.f32.mrb[0].mxu0
  %v1260 = vpop.f32.mrb[0].mxu0
  %v1261 = vadd.f32 0.0, %v1260
  %v1262 = vpop.f32.mrb[0].mxu0
  %1263 = vdwg.mxu0
  %v1264 = vadd.f32 %v1179, %v1250
  %v1265 = vadd.f32 %v1182, %v1253
  %v1266 = vadd.f32 %v1187, %v1258
  %v1267 = vadd.f32 %v1190, %v1261
  %v1268 = vld [vmem:[%s1 + $0x70] sm:$0xf]
  %v1269 = vld [vmem:[%s1 + $0x74] sm:$0xf]
  %v1270 = vld [vmem:[%s1 + $0x78] sm:$0xf]
  %v1271 = vld [vmem:[%s1 + $0x7c] sm:$0xf]
  %v1276 = vunpack.c.l.b16 %v1268
  %v1277 = vunpack.c.l.b16 %v1269
  %v1278 = vunpack.c.l.b16 %v1270
  %v1279 = vunpack.c.l.b16 %v1271
  %v1280 = vpack.c.b16 %v1277, %v1276
  %v1281 = vpack.c.b16 %v1279, %v1278
  %v1285 = vsel %vm778, %v740, 0
  %v1288 = vsel %vm778, %v741, 0
  %1290 = vmatprep.subr.bf16.mxu0 0
  %1291 = vmatpush1.bf16.msra.mxu0 %v1280
  %1292 = vmatprep.subr.bf16.mxu0 0
  %1293 = vmatpush1.bf16.msra.mxu0 %v1281
  %1294 = vmatprep.subr.bf16.mxu0 0
  %1295 = vmatpush1.bf16.msra.mxu0 0
  %1296 = vmatprep.subr.bf16.mxu0 0
  %1297 = vmatpush1.bf16.msra.mxu0 0
  %1298 = vmatprep.subr.bf16.mxu0 0
  %1299 = vmatpush1.bf16.msra.mxu0 0
  %1300 = vmatprep.subr.bf16.mxu0 0
  %1301 = vmatpush1.bf16.msra.mxu0 0
  %1302 = vmatprep.subr.bf16.mxu0 0
  %1303 = vmatpush1.bf16.msra.mxu0 0
  %1304 = vmatprep.subr.bf16.mxu0 0
  %1305 = vmatpush1.bf16.msra.mxu0 0
  %1306 = vmatprep.subr.bf16.mxu0 0
  %1307 = vmatpush1.bf16.msra.mxu0 0
  %1308 = vmatprep.subr.bf16.mxu0 0
  %1309 = vmatpush1.bf16.msra.mxu0 0
  %1310 = vmatprep.subr.bf16.mxu0 0
  %1311 = vmatpush1.bf16.msra.mxu0 0
  %1312 = vmatprep.subr.bf16.mxu0 0
  %1313 = vmatpush1.bf16.msra.mxu0 0
  %1314 = vmatprep.subr.bf16.mxu0 0
  %1315 = vmatpush1.bf16.msra.mxu0 0
  %1316 = vmatprep.subr.bf16.mxu0 0
  %1317 = vmatpush1.bf16.msra.mxu0 0
  %1318 = vmatprep.subr.bf16.mxu0 0
  %1319 = vmatpush1.bf16.msra.mxu0 0
  %1320 = vmatprep.subr.bf16.mxu0 0
  %1321 = vmatpush1.bf16.msra.mxu0 0
  %1322 = vmatprep.mubr.bf16.mxu0 0
  %1323 = vmatmul.mubr.bf16.gmra.mrb[0].mxu0 %v1285
  %v1324 = vpop.f32.mrb[0].mxu0
  %v1325 = vadd.f32 0.0, %v1324
  %v1326 = vpop.f32.mrb[0].mxu0
  %v1327 = vpop.f32.mrb[0].mxu0
  %v1328 = vadd.f32 0.0, %v1327
  %v1329 = vpop.f32.mrb[0].mxu0
  %1330 = vmatprep.mubr.bf16.mxu0 0
  %1331 = vmatmul.mubr.bf16.gmra.mrb[0].mxu0 %v1288
  %v1332 = vpop.f32.mrb[0].mxu0
  %v1333 = vadd.f32 0.0, %v1332
  %v1334 = vpop.f32.mrb[0].mxu0
  %v1335 = vpop.f32.mrb[0].mxu0
  %v1336 = vadd.f32 0.0, %v1335
  %v1337 = vpop.f32.mrb[0].mxu0
  %1338 = vdwg.mxu0
  %v1339 = vadd.f32 %v1264, %v1325
  %v1340 = vadd.f32 %v1265, %v1328
  %v1341 = vadd.f32 %v1266, %v1333
  %v1342 = vadd.f32 %v1267, %v1336
  %v1343 = vld [vmem:[%s1 + $0x80] sm:$0xf]
  %v1344 = vld [vmem:[%s1 + $0x84] sm:$0xf]
  %v1345 = vld [vmem:[%s1 + $0x88] sm:$0xf]
  %v1346 = vld [vmem:[%s1 + $0x8c] sm:$0xf]
  %v1347 = vld [vmem:[%s1 + $0x90] sm:$0xf]
  %v1348 = vld [vmem:[%s1 + $0x94] sm:$0xf]
  %v1349 = vld [vmem:[%s1 + $0x98] sm:$0xf]
  %v1350 = vld [vmem:[%s1 + $0x9c] sm:$0xf]
  %v1355 = vunpack.c.l.b16 %v1347
  %v1356 = vunpack.c.l.b16 %v1348
  %v1357 = vunpack.c.l.b16 %v1349
  %v1358 = vunpack.c.l.b16 %v1350
  %v1359 = vpack.c.b16 %v1356, %v1355
  %v1360 = vpack.c.b16 %v1358, %v1357
  %v1364 = vsel %vm778, %v744, 0
  %v1367 = vsel %vm778, %v745, 0
  %1369 = vmatprep.subr.bf16.mxu0 0
  %1370 = vmatpush1.bf16.msra.mxu0 %v1359
  %1371 = vmatprep.subr.bf16.mxu0 0
  %1372 = vmatpush1.bf16.msra.mxu0 %v1360
  %1373 = vmatprep.subr.bf16.mxu0 0
  %1374 = vmatpush1.bf16.msra.mxu0 0
  %1375 = vmatprep.subr.bf16.mxu0 0
  %1376 = vmatpush1.bf16.msra.mxu0 0
  %1377 = vmatprep.subr.bf16.mxu0 0
  %1378 = vmatpush1.bf16.msra.mxu0 0
  %1379 = vmatprep.subr.bf16.mxu0 0
  %1380 = vmatpush1.bf16.msra.mxu0 0
  %1381 = vmatprep.subr.bf16.mxu0 0
  %1382 = vmatpush1.bf16.msra.mxu0 0
  %1383 = vmatprep.subr.bf16.mxu0 0
  %1384 = vmatpush1.bf16.msra.mxu0 0
  %1385 = vmatprep.subr.bf16.mxu0 0
  %1386 = vmatpush1.bf16.msra.mxu0 0
  %1387 = vmatprep.subr.bf16.mxu0 0
  %1388 = vmatpush1.bf16.msra.mxu0 0
  %1389 = vmatprep.subr.bf16.mxu0 0
  %1390 = vmatpush1.bf16.msra.mxu0 0
  %1391 = vmatprep.subr.bf16.mxu0 0
  %1392 = vmatpush1.bf16.msra.mxu0 0
  %1393 = vmatprep.subr.bf16.mxu0 0
  %1394 = vmatpush1.bf16.msra.mxu0 0
  %1395 = vmatprep.subr.bf16.mxu0 0
  %1396 = vmatpush1.bf16.msra.mxu0 0
  %1397 = vmatprep.subr.bf16.mxu0 0
  %1398 = vmatpush1.bf16.msra.mxu0 0
  %1399 = vmatprep.subr.bf16.mxu0 0
  %1400 = vmatpush1.bf16.msra.mxu0 0
  %1401 = vmatprep.mubr.bf16.mxu0 0
  %1402 = vmatmul.mubr.bf16.gmra.mrb[0].mxu0 %v1364
  %v1403 = vpop.f32.mrb[0].mxu0
  %v1404 = vadd.f32 0.0, %v1403
  %v1405 = vpop.f32.mrb[0].mxu0
  %v1406 = vpop.f32.mrb[0].mxu0
  %v1407 = vadd.f32 0.0, %v1406
  %v1408 = vpop.f32.mrb[0].mxu0
  %1409 = vmatprep.mubr.bf16.mxu0 0
  %1410 = vmatmul.mubr.bf16.gmra.mrb[0].mxu0 %v1367
  %v1411 = vpop.f32.mrb[0].mxu0
  %v1412 = vadd.f32 0.0, %v1411
  %v1413 = vpop.f32.mrb[0].mxu0
  %v1414 = vpop.f32.mrb[0].mxu0
  %v1415 = vadd.f32 0.0, %v1414
  %v1416 = vpop.f32.mrb[0].mxu0
  %1417 = vdwg.mxu0
  %v1422 = vunpack.c.l.b16 %v1343
  %v1423 = vunpack.c.l.b16 %v1344
  %v1424 = vunpack.c.l.b16 %v1345
  %v1425 = vunpack.c.l.b16 %v1346
  %v1426 = vpack.c.b16 %v1423, %v1422
  %v1427 = vpack.c.b16 %v1425, %v1424
  %v1431 = vsel %vm778, %v742, 0
  %v1434 = vsel %vm778, %v743, 0
  %1436 = vmatprep.subr.bf16.mxu0 0
  %1437 = vmatpush1.bf16.msra.mxu0 %v1426
  %1438 = vmatprep.subr.bf16.mxu0 0
  %1439 = vmatpush1.bf16.msra.mxu0 %v1427
  %1440 = vmatprep.subr.bf16.mxu0 0
  %1441 = vmatpush1.bf16.msra.mxu0 0
  %1442 = vmatprep.subr.bf16.mxu0 0
  %1443 = vmatpush1.bf16.msra.mxu0 0
  %1444 = vmatprep.subr.bf16.mxu0 0
  %1445 = vmatpush1.bf16.msra.mxu0 0
  %1446 = vmatprep.subr.bf16.mxu0 0
  %1447 = vmatpush1.bf16.msra.mxu0 0
  %1448 = vmatprep.subr.bf16.mxu0 0
  %1449 = vmatpush1.bf16.msra.mxu0 0
  %1450 = vmatprep.subr.bf16.mxu0 0
  %1451 = vmatpush1.bf16.msra.mxu0 0
  %1452 = vmatprep.subr.bf16.mxu0 0
  %1453 = vmatpush1.bf16.msra.mxu0 0
  %1454 = vmatprep.subr.bf16.mxu0 0
  %1455 = vmatpush1.bf16.msra.mxu0 0
  %1456 = vmatprep.subr.bf16.mxu0 0
  %1457 = vmatpush1.bf16.msra.mxu0 0
  %1458 = vmatprep.subr.bf16.mxu0 0
  %1459 = vmatpush1.bf16.msra.mxu0 0
  %1460 = vmatprep.subr.bf16.mxu0 0
  %1461 = vmatpush1.bf16.msra.mxu0 0
  %1462 = vmatprep.subr.bf16.mxu0 0
  %1463 = vmatpush1.bf16.msra.mxu0 0
  %1464 = vmatprep.subr.bf16.mxu0 0
  %1465 = vmatpush1.bf16.msra.mxu0 0
  %1466 = vmatprep.subr.bf16.mxu0 0
  %1467 = vmatpush1.bf16.msra.mxu0 0
  %1468 = vmatprep.mubr.bf16.mxu0 0
  %1469 = vmatmul.mubr.bf16.gmra.mrb[0].mxu0 %v1431
  %v1470 = vpop.f32.mrb[0].mxu0
  %v1471 = vadd.f32 %v1404, %v1470
  %v1472 = vpop.f32.mrb[0].mxu0
  %v1473 = vpop.f32.mrb[0].mxu0
  %v1474 = vadd.f32 %v1407, %v1473
  %v1475 = vpop.f32.mrb[0].mxu0
  %1476 = vmatprep.mubr.bf16.mxu0 0
  %1477 = vmatmul.mubr.bf16.gmra.mrb[0].mxu0 %v1434
  %v1478 = vpop.f32.mrb[0].mxu0
  %v1479 = vadd.f32 %v1412, %v1478
  %v1480 = vpop.f32.mrb[0].mxu0
  %v1481 = vpop.f32.mrb[0].mxu0
  %v1482 = vadd.f32 %v1415, %v1481
  %v1483 = vpop.f32.mrb[0].mxu0
  %1484 = vdwg.mxu0
  %v1485 = vld [vmem:[%s1 + $0xa0] sm:$0xf]
  %v1486 = vld [vmem:[%s1 + $0xa4] sm:$0xf]
  %v1487 = vld [vmem:[%s1 + $0xa8] sm:$0xf]
  %v1488 = vld [vmem:[%s1 + $0xac] sm:$0xf]
  %v1493 = vunpack.c.l.b16 %v1485
  %v1494 = vunpack.c.l.b16 %v1486
  %v1495 = vunpack.c.l.b16 %v1487
  %v1496 = vunpack.c.l.b16 %v1488
  %v1497 = vpack.c.b16 %v1494, %v1493
  %v1498 = vpack.c.b16 %v1496, %v1495
  %v1502 = vsel %vm778, %v746, 0
  %v1505 = vsel %vm778, %v747, 0
  %1507 = vmatprep.subr.bf16.mxu0 0
  %1508 = vmatpush1.bf16.msra.mxu0 %v1497
  %1509 = vmatprep.subr.bf16.mxu0 0
  %1510 = vmatpush1.bf16.msra.mxu0 %v1498
  %1511 = vmatprep.subr.bf16.mxu0 0
  %1512 = vmatpush1.bf16.msra.mxu0 0
  %1513 = vmatprep.subr.bf16.mxu0 0
  %1514 = vmatpush1.bf16.msra.mxu0 0
  %1515 = vmatprep.subr.bf16.mxu0 0
  %1516 = vmatpush1.bf16.msra.mxu0 0
  %1517 = vmatprep.subr.bf16.mxu0 0
  %1518 = vmatpush1.bf16.msra.mxu0 0
  %1519 = vmatprep.subr.bf16.mxu0 0
  %1520 = vmatpush1.bf16.msra.mxu0 0
  %1521 = vmatprep.subr.bf16.mxu0 0
  %1522 = vmatpush1.bf16.msra.mxu0 0
  %1523 = vmatprep.subr.bf16.mxu0 0
  %1524 = vmatpush1.bf16.msra.mxu0 0
  %1525 = vmatprep.subr.bf16.mxu0 0
  %1526 = vmatpush1.bf16.msra.mxu0 0
  %1527 = vmatprep.subr.bf16.mxu0 0
  %1528 = vmatpush1.bf16.msra.mxu0 0
  %1529 = vmatprep.subr.bf16.mxu0 0
  %1530 = vmatpush1.bf16.msra.mxu0 0
  %1531 = vmatprep.subr.bf16.mxu0 0
  %1532 = vmatpush1.bf16.msra.mxu0 0
  %1533 = vmatprep.subr.bf16.mxu0 0
  %1534 = vmatpush1.bf16.msra.mxu0 0
  %1535 = vmatprep.subr.bf16.mxu0 0
  %1536 = vmatpush1.bf16.msra.mxu0 0
  %1537 = vmatprep.subr.bf16.mxu0 0
  %1538 = vmatpush1.bf16.msra.mxu0 0
  %1539 = vmatprep.mubr.bf16.mxu0 0
  %1540 = vmatmul.mubr.bf16.gmra.mrb[0].mxu0 %v1502
  %v1541 = vpop.f32.mrb[0].mxu0
  %v1542 = vadd.f32 0.0, %v1541
  %v1543 = vpop.f32.mrb[0].mxu0
  %v1544 = vpop.f32.mrb[0].mxu0
  %v1545 = vadd.f32 0.0, %v1544
  %v1546 = vpop.f32.mrb[0].mxu0
  %1547 = vmatprep.mubr.bf16.mxu0 0
  %1548 = vmatmul.mubr.bf16.gmra.mrb[0].mxu0 %v1505
  %v1549 = vpop.f32.mrb[0].mxu0
  %v1550 = vadd.f32 0.0, %v1549
  %v1551 = vpop.f32.mrb[0].mxu0
  %v1552 = vpop.f32.mrb[0].mxu0
  %v1553 = vadd.f32 0.0, %v1552
  %v1554 = vpop.f32.mrb[0].mxu0
  %1555 = vdwg.mxu0
  %v1556 = vadd.f32 %v1471, %v1542
  %v1557 = vadd.f32 %v1474, %v1545
  %v1558 = vadd.f32 %v1479, %v1550
  %v1559 = vadd.f32 %v1482, %v1553
  %v1560 = vld [vmem:[%s1 + $0xb0] sm:$0xf]
  %v1561 = vld [vmem:[%s1 + $0xb4] sm:$0xf]
  %v1562 = vld [vmem:[%s1 + $0xb8] sm:$0xf]
  %v1563 = vld [vmem:[%s1 + $0xbc] sm:$0xf]
  %v1568 = vunpack.c.l.b16 %v1560
  %v1569 = vunpack.c.l.b16 %v1561
  %v1570 = vunpack.c.l.b16 %v1562
  %v1571 = vunpack.c.l.b16 %v1563
  %v1572 = vpack.c.b16 %v1569, %v1568
  %v1573 = vpack.c.b16 %v1571, %v1570
  %v1577 = vsel %vm778, %v748, 0
  %v1580 = vsel %vm778, %v749, 0
  %1582 = vmatprep.subr.bf16.mxu0 0
  %1583 = vmatpush1.bf16.msra.mxu0 %v1572
  %1584 = vmatprep.subr.bf16.mxu0 0
  %1585 = vmatpush1.bf16.msra.mxu0 %v1573
  %1586 = vmatprep.subr.bf16.mxu0 0
  %1587 = vmatpush1.bf16.msra.mxu0 0
  %1588 = vmatprep.subr.bf16.mxu0 0
  %1589 = vmatpush1.bf16.msra.mxu0 0
  %1590 = vmatprep.subr.bf16.mxu0 0
  %1591 = vmatpush1.bf16.msra.mxu0 0
  %1592 = vmatprep.subr.bf16.mxu0 0
  %1593 = vmatpush1.bf16.msra.mxu0 0
  %1594 = vmatprep.subr.bf16.mxu0 0
  %1595 = vmatpush1.bf16.msra.mxu0 0
  %1596 = vmatprep.subr.bf16.mxu0 0
  %1597 = vmatpush1.bf16.msra.mxu0 0
  %1598 = vmatprep.subr.bf16.mxu0 0
  %1599 = vmatpush1.bf16.msra.mxu0 0
  %1600 = vmatprep.subr.bf16.mxu0 0
  %1601 = vmatpush1.bf16.msra.mxu0 0
  %1602 = vmatprep.subr.bf16.mxu0 0
  %1603 = vmatpush1.bf16.msra.mxu0 0
  %1604 = vmatprep.subr.bf16.mxu0 0
  %1605 = vmatpush1.bf16.msra.mxu0 0
  %1606 = vmatprep.subr.bf16.mxu0 0
  %1607 = vmatpush1.bf16.msra.mxu0 0
  %1608 = vmatprep.subr.bf16.mxu0 0
  %1609 = vmatpush1.bf16.msra.mxu0 0
  %1610 = vmatprep.subr.bf16.mxu0 0
  %1611 = vmatpush1.bf16.msra.mxu0 0
  %1612 = vmatprep.subr.bf16.mxu0 0
  %1613 = vmatpush1.bf16.msra.mxu0 0
  %1614 = vmatprep.mubr.bf16.mxu0 0
  %1615 = vmatmul.mubr.bf16.gmra.mrb[0].mxu0 %v1577
  %v1616 = vpop.f32.mrb[0].mxu0
  %v1617 = vadd.f32 0.0, %v1616
  %v1618 = vpop.f32.mrb[0].mxu0
  %v1619 = vpop.f32.mrb[0].mxu0
  %v1620 = vadd.f32 0.0, %v1619
  %v1621 = vpop.f32.mrb[0].mxu0
  %1622 = vmatprep.mubr.bf16.mxu0 0
  %1623 = vmatmul.mubr.bf16.gmra.mrb[0].mxu0 %v1580
  %v1624 = vpop.f32.mrb[0].mxu0
  %v1625 = vadd.f32 0.0, %v1624
  %v1626 = vpop.f32.mrb[0].mxu0
  %v1627 = vpop.f32.mrb[0].mxu0
  %v1628 = vadd.f32 0.0, %v1627
  %v1629 = vpop.f32.mrb[0].mxu0
  %1630 = vdwg.mxu0
  %v1631 = vadd.f32 %v1556, %v1617
  %v1632 = vadd.f32 %v1557, %v1620
  %v1633 = vadd.f32 %v1558, %v1625
  %v1634 = vadd.f32 %v1559, %v1628
  %v1635 = vld [vmem:[%s1 + $0xc0] sm:$0xf]
  %v1636 = vld [vmem:[%s1 + $0xc4] sm:$0xf]
  %v1637 = vld [vmem:[%s1 + $0xc8] sm:$0xf]
  %v1638 = vld [vmem:[%s1 + $0xcc] sm:$0xf]
  %v1639 = vld [vmem:[%s1 + $0xd0] sm:$0xf]
  %v1640 = vld [vmem:[%s1 + $0xd4] sm:$0xf]
  %v1641 = vld [vmem:[%s1 + $0xd8] sm:$0xf]
  %v1642 = vld [vmem:[%s1 + $0xdc] sm:$0xf]
  %v1647 = vunpack.c.l.b16 %v1639
  %v1648 = vunpack.c.l.b16 %v1640
  %v1649 = vunpack.c.l.b16 %v1641
  %v1650 = vunpack.c.l.b16 %v1642
  %v1651 = vpack.c.b16 %v1648, %v1647
  %v1652 = vpack.c.b16 %v1650, %v1649
  %v1656 = vsel %vm778, %v752, 0
  %v1659 = vsel %vm778, %v753, 0
  %1661 = vmatprep.subr.bf16.mxu0 0
  %1662 = vmatpush1.bf16.msra.mxu0 %v1651
  %1663 = vmatprep.subr.bf16.mxu0 0
  %1664 = vmatpush1.bf16.msra.mxu0 %v1652
  %1665 = vmatprep.subr.bf16.mxu0 0
  %1666 = vmatpush1.bf16.msra.mxu0 0
  %1667 = vmatprep.subr.bf16.mxu0 0
  %1668 = vmatpush1.bf16.msra.mxu0 0
  %1669 = vmatprep.subr.bf16.mxu0 0
  %1670 = vmatpush1.bf16.msra.mxu0 0
  %1671 = vmatprep.subr.bf16.mxu0 0
  %1672 = vmatpush1.bf16.msra.mxu0 0
  %1673 = vmatprep.subr.bf16.mxu0 0
  %1674 = vmatpush1.bf16.msra.mxu0 0
  %1675 = vmatprep.subr.bf16.mxu0 0
  %1676 = vmatpush1.bf16.msra.mxu0 0
  %1677 = vmatprep.subr.bf16.mxu0 0
  %1678 = vmatpush1.bf16.msra.mxu0 0
  %1679 = vmatprep.subr.bf16.mxu0 0
  %1680 = vmatpush1.bf16.msra.mxu0 0
  %1681 = vmatprep.subr.bf16.mxu0 0
  %1682 = vmatpush1.bf16.msra.mxu0 0
  %1683 = vmatprep.subr.bf16.mxu0 0
  %1684 = vmatpush1.bf16.msra.mxu0 0
  %1685 = vmatprep.subr.bf16.mxu0 0
  %1686 = vmatpush1.bf16.msra.mxu0 0
  %1687 = vmatprep.subr.bf16.mxu0 0
  %1688 = vmatpush1.bf16.msra.mxu0 0
  %1689 = vmatprep.subr.bf16.mxu0 0
  %1690 = vmatpush1.bf16.msra.mxu0 0
  %1691 = vmatprep.subr.bf16.mxu0 0
  %1692 = vmatpush1.bf16.msra.mxu0 0
  %1693 = vmatprep.mubr.bf16.mxu0 0
  %1694 = vmatmul.mubr.bf16.gmra.mrb[0].mxu0 %v1656
  %v1695 = vpop.f32.mrb[0].mxu0
  %v1696 = vadd.f32 0.0, %v1695
  %v1697 = vpop.f32.mrb[0].mxu0
  %v1698 = vpop.f32.mrb[0].mxu0
  %v1699 = vadd.f32 0.0, %v1698
  %v1700 = vpop.f32.mrb[0].mxu0
  %1701 = vmatprep.mubr.bf16.mxu0 0
  %1702 = vmatmul.mubr.bf16.gmra.mrb[0].mxu0 %v1659
  %v1703 = vpop.f32.mrb[0].mxu0
  %v1704 = vadd.f32 0.0, %v1703
  %v1705 = vpop.f32.mrb[0].mxu0
  %v1706 = vpop.f32.mrb[0].mxu0
  %v1707 = vadd.f32 0.0, %v1706
  %v1708 = vpop.f32.mrb[0].mxu0
  %1709 = vdwg.mxu0
  %v1714 = vunpack.c.l.b16 %v1635
  %v1715 = vunpack.c.l.b16 %v1636
  %v1716 = vunpack.c.l.b16 %v1637
  %v1717 = vunpack.c.l.b16 %v1638
  %v1718 = vpack.c.b16 %v1715, %v1714
  %v1719 = vpack.c.b16 %v1717, %v1716
  %v1723 = vsel %vm778, %v750, 0
  %v1726 = vsel %vm778, %v751, 0
  %1728 = vmatprep.subr.bf16.mxu0 0
  %1729 = vmatpush1.bf16.msra.mxu0 %v1718
  %1730 = vmatprep.subr.bf16.mxu0 0
  %1731 = vmatpush1.bf16.msra.mxu0 %v1719
  %1732 = vmatprep.subr.bf16.mxu0 0
  %1733 = vmatpush1.bf16.msra.mxu0 0
  %1734 = vmatprep.subr.bf16.mxu0 0
  %1735 = vmatpush1.bf16.msra.mxu0 0
  %1736 = vmatprep.subr.bf16.mxu0 0
  %1737 = vmatpush1.bf16.msra.mxu0 0
  %1738 = vmatprep.subr.bf16.mxu0 0
  %1739 = vmatpush1.bf16.msra.mxu0 0
  %1740 = vmatprep.subr.bf16.mxu0 0
  %1741 = vmatpush1.bf16.msra.mxu0 0
  %1742 = vmatprep.subr.bf16.mxu0 0
  %1743 = vmatpush1.bf16.msra.mxu0 0
  %1744 = vmatprep.subr.bf16.mxu0 0
  %1745 = vmatpush1.bf16.msra.mxu0 0
  %1746 = vmatprep.subr.bf16.mxu0 0
  %1747 = vmatpush1.bf16.msra.mxu0 0
  %1748 = vmatprep.subr.bf16.mxu0 0
  %1749 = vmatpush1.bf16.msra.mxu0 0
  %1750 = vmatprep.subr.bf16.mxu0 0
  %1751 = vmatpush1.bf16.msra.mxu0 0
  %1752 = vmatprep.subr.bf16.mxu0 0
  %1753 = vmatpush1.bf16.msra.mxu0 0
  %1754 = vmatprep.subr.bf16.mxu0 0
  %1755 = vmatpush1.bf16.msra.mxu0 0
  %1756 = vmatprep.subr.bf16.mxu0 0
  %1757 = vmatpush1.bf16.msra.mxu0 0
  %1758 = vmatprep.subr.bf16.mxu0 0
  %1759 = vmatpush1.bf16.msra.mxu0 0
  %1760 = vmatprep.mubr.bf16.mxu0 0
  %1761 = vmatmul.mubr.bf16.gmra.mrb[0].mxu0 %v1723
  %v1762 = vpop.f32.mrb[0].mxu0
  %v1763 = vadd.f32 %v1696, %v1762
  %v1764 = vpop.f32.mrb[0].mxu0
  %v1765 = vpop.f32.mrb[0].mxu0
  %v1766 = vadd.f32 %v1699, %v1765
  %v1767 = vpop.f32.mrb[0].mxu0
  %1768 = vmatprep.mubr.bf16.mxu0 0
  %1769 = vmatmul.mubr.bf16.gmra.mrb[0].mxu0 %v1726
  %v1770 = vpop.f32.mrb[0].mxu0
  %v1771 = vadd.f32 %v1704, %v1770
  %v1772 = vpop.f32.mrb[0].mxu0
  %v1773 = vpop.f32.mrb[0].mxu0
  %v1774 = vadd.f32 %v1707, %v1773
  %v1775 = vpop.f32.mrb[0].mxu0
  %1776 = vdwg.mxu0
  %v1777 = vld [vmem:[%s1 + $0xe0] sm:$0xf]
  %v1778 = vld [vmem:[%s1 + $0xe4] sm:$0xf]
  %v1779 = vld [vmem:[%s1 + $0xe8] sm:$0xf]
  %v1780 = vld [vmem:[%s1 + $0xec] sm:$0xf]
  %v1785 = vunpack.c.l.b16 %v1777
  %v1786 = vunpack.c.l.b16 %v1778
  %v1787 = vunpack.c.l.b16 %v1779
  %v1788 = vunpack.c.l.b16 %v1780
  %v1789 = vpack.c.b16 %v1786, %v1785
  %v1790 = vpack.c.b16 %v1788, %v1787
  %v1794 = vsel %vm778, %v754, 0
  %v1797 = vsel %vm778, %v755, 0
  %1799 = vmatprep.subr.bf16.mxu0 0
  %1800 = vmatpush1.bf16.msra.mxu0 %v1789
  %1801 = vmatprep.subr.bf16.mxu0 0
  %1802 = vmatpush1.bf16.msra.mxu0 %v1790
  %1803 = vmatprep.subr.bf16.mxu0 0
  %1804 = vmatpush1.bf16.msra.mxu0 0
  %1805 = vmatprep.subr.bf16.mxu0 0
  %1806 = vmatpush1.bf16.msra.mxu0 0
  %1807 = vmatprep.subr.bf16.mxu0 0
  %1808 = vmatpush1.bf16.msra.mxu0 0
  %1809 = vmatprep.subr.bf16.mxu0 0
  %1810 = vmatpush1.bf16.msra.mxu0 0
  %1811 = vmatprep.subr.bf16.mxu0 0
  %1812 = vmatpush1.bf16.msra.mxu0 0
  %1813 = vmatprep.subr.bf16.mxu0 0
  %1814 = vmatpush1.bf16.msra.mxu0 0
  %1815 = vmatprep.subr.bf16.mxu0 0
  %1816 = vmatpush1.bf16.msra.mxu0 0
  %1817 = vmatprep.subr.bf16.mxu0 0
  %1818 = vmatpush1.bf16.msra.mxu0 0
  %1819 = vmatprep.subr.bf16.mxu0 0
  %1820 = vmatpush1.bf16.msra.mxu0 0
  %1821 = vmatprep.subr.bf16.mxu0 0
  %1822 = vmatpush1.bf16.msra.mxu0 0
  %1823 = vmatprep.subr.bf16.mxu0 0
  %1824 = vmatpush1.bf16.msra.mxu0 0
  %1825 = vmatprep.subr.bf16.mxu0 0
  %1826 = vmatpush1.bf16.msra.mxu0 0
  %1827 = vmatprep.subr.bf16.mxu0 0
  %1828 = vmatpush1.bf16.msra.mxu0 0
  %1829 = vmatprep.subr.bf16.mxu0 0
  %1830 = vmatpush1.bf16.msra.mxu0 0
  %1831 = vmatprep.mubr.bf16.mxu0 0
  %1832 = vmatmul.mubr.bf16.gmra.mrb[0].mxu0 %v1794
  %v1833 = vpop.f32.mrb[0].mxu0
  %v1834 = vadd.f32 0.0, %v1833
  %v1835 = vpop.f32.mrb[0].mxu0
  %v1836 = vpop.f32.mrb[0].mxu0
  %v1837 = vadd.f32 0.0, %v1836
  %v1838 = vpop.f32.mrb[0].mxu0
  %1839 = vmatprep.mubr.bf16.mxu0 0
  %1840 = vmatmul.mubr.bf16.gmra.mrb[0].mxu0 %v1797
  %v1841 = vpop.f32.mrb[0].mxu0
  %v1842 = vadd.f32 0.0, %v1841
  %v1843 = vpop.f32.mrb[0].mxu0
  %v1844 = vpop.f32.mrb[0].mxu0
  %v1845 = vadd.f32 0.0, %v1844
  %v1846 = vpop.f32.mrb[0].mxu0
  %1847 = vdwg.mxu0
  %v1848 = vadd.f32 %v1763, %v1834
  %v1849 = vadd.f32 %v1766, %v1837
  %v1850 = vadd.f32 %v1771, %v1842
  %v1851 = vadd.f32 %v1774, %v1845
  %v1852 = vld [vmem:[%s1 + $0xf0] sm:$0xf]
  %v1853 = vld [vmem:[%s1 + $0xf4] sm:$0xf]
  %v1854 = vld [vmem:[%s1 + $0xf8] sm:$0xf]
  %v1855 = vld [vmem:[%s1 + $0xfc] sm:$0xf]
  %v1860 = vunpack.c.l.b16 %v1852
  %v1861 = vunpack.c.l.b16 %v1853
  %v1862 = vunpack.c.l.b16 %v1854
  %v1863 = vunpack.c.l.b16 %v1855
  %v1864 = vpack.c.b16 %v1861, %v1860
  %v1865 = vpack.c.b16 %v1863, %v1862
  %v1869 = vsel %vm778, %v756, 0
  %v1872 = vsel %vm778, %v757, 0
  %1874 = vmatprep.subr.bf16.mxu0 0
  %1875 = vmatpush1.bf16.msra.mxu0 %v1864
  %1876 = vmatprep.subr.bf16.mxu0 0
  %1877 = vmatpush1.bf16.msra.mxu0 %v1865
  %1878 = vmatprep.subr.bf16.mxu0 0
  %1879 = vmatpush1.bf16.msra.mxu0 0
  %1880 = vmatprep.subr.bf16.mxu0 0
  %1881 = vmatpush1.bf16.msra.mxu0 0
  %1882 = vmatprep.subr.bf16.mxu0 0
  %1883 = vmatpush1.bf16.msra.mxu0 0
  %1884 = vmatprep.subr.bf16.mxu0 0
  %1885 = vmatpush1.bf16.msra.mxu0 0
  %1886 = vmatprep.subr.bf16.mxu0 0
  %1887 = vmatpush1.bf16.msra.mxu0 0
  %1888 = vmatprep.subr.bf16.mxu0 0
  %1889 = vmatpush1.bf16.msra.mxu0 0
  %1890 = vmatprep.subr.bf16.mxu0 0
  %1891 = vmatpush1.bf16.msra.mxu0 0
  %1892 = vmatprep.subr.bf16.mxu0 0
  %1893 = vmatpush1.bf16.msra.mxu0 0
  %1894 = vmatprep.subr.bf16.mxu0 0
  %1895 = vmatpush1.bf16.msra.mxu0 0
  %1896 = vmatprep.subr.bf16.mxu0 0
  %1897 = vmatpush1.bf16.msra.mxu0 0
  %1898 = vmatprep.subr.bf16.mxu0 0
  %1899 = vmatpush1.bf16.msra.mxu0 0
  %1900 = vmatprep.subr.bf16.mxu0 0
  %1901 = vmatpush1.bf16.msra.mxu0 0
  %1902 = vmatprep.subr.bf16.mxu0 0
  %1903 = vmatpush1.bf16.msra.mxu0 0
  %1904 = vmatprep.subr.bf16.mxu0 0
  %1905 = vmatpush1.bf16.msra.mxu0 0
  %1906 = vmatprep.mubr.bf16.mxu0 0
  %1907 = vmatmul.mubr.bf16.gmra.mrb[0].mxu0 %v1869
  %v1908 = vpop.f32.mrb[0].mxu0
  %v1909 = vadd.f32 0.0, %v1908
  %v1910 = vpop.f32.mrb[0].mxu0
  %v1911 = vpop.f32.mrb[0].mxu0
  %v1912 = vadd.f32 0.0, %v1911
  %v1913 = vpop.f32.mrb[0].mxu0
  %1914 = vmatprep.mubr.bf16.mxu0 0
  %1915 = vmatmul.mubr.bf16.gmra.mrb[0].mxu0 %v1872
  %v1916 = vpop.f32.mrb[0].mxu0
  %v1917 = vadd.f32 0.0, %v1916
  %v1918 = vpop.f32.mrb[0].mxu0
  %v1919 = vpop.f32.mrb[0].mxu0
  %v1920 = vadd.f32 0.0, %v1919
  %v1921 = vpop.f32.mrb[0].mxu0
  %1922 = vdwg.mxu0
  %v1923 = vadd.f32 %v1848, %v1909
  %v1924 = vadd.f32 %v1849, %v1912
  %v1925 = vadd.f32 %v1850, %v1917
  %v1926 = vadd.f32 %v1851, %v1920
  %v1927 = vadd.f32 %v1047, %v1339
  %v1928 = vadd.f32 %v1048, %v1340
  %v1929 = vadd.f32 %v1049, %v1341
  %v1930 = vadd.f32 %v1050, %v1342
  %v1931 = vadd.f32 %v1631, %v1923
  %v1932 = vadd.f32 %v1632, %v1924
  %v1933 = vadd.f32 %v1633, %v1925
  %v1934 = vadd.f32 %v1634, %v1926
  %v1935 = vadd.f32 %v1927, %v1931
  %v1936 = vadd.f32 %v1928, %v1932
  %v1937 = vadd.f32 %v1929, %v1933
  %v1938 = vadd.f32 %v1930, %v1934
  %v1939 = vld [vmem:[%s2 + $0x58] sm:$0x1]
  %v1940 = vunpack.c.l.bf16 %v1939
  %v1941 = vlaneseq
  %v1942 = vshrl.u32 %v1941, 7
  %v1943 = vsub.s32 0, %v1942
  %v1944 = vrot.slane %v1940, %v1943
  %v1945 = vadd.f32 %v1935, %v1944
  %v1946 = vadd.f32 %v1936, %v1944
  %v1947 = vadd.f32 %v1937, %v1944
  %v1948 = vadd.f32 %v1938, %v1944
  %v1949 = vmax.f32 %v1945, 0.0
  %v1950 = vmax.f32 %v1946, 0.0
  %v1951 = vmax.f32 %v1947, 0.0
  %v1952 = vmax.f32 %v1948, 0.0
  %v1953 = vpack.c.bf16 %v1950, %v1949
  %v1954 = vpack.c.bf16 %v1952, %v1951
  %v1956 = vrot.slane %v1953, 1
  %1957 = vrot.lane.b32.xlu0 %v774, 96
  %v1958 = vpop.permute.xlu0 %1957
  %1959 = vrot.lane.b32.xlu0 %v775, 96
  %v1960 = vpop.permute.xlu0 %1959
  %v1964 = vsel %vm778, %v1956, 0
  %1966 = vmatprep.subr.bf16.mxu0 0
  %1967 = vmatpush1.bf16.msra.mxu0 %v1958
  %1968 = vmatprep.subr.bf16.mxu0 0
  %1969 = vmatpush1.bf16.msra.mxu0 %v1960
  %1970 = vmatprep.subr.bf16.mxu0 0
  %1971 = vmatpush1.bf16.msra.mxu0 0
  %1972 = vmatprep.subr.bf16.mxu0 0
  %1973 = vmatpush1.bf16.msra.mxu0 0
  %1974 = vmatprep.subr.bf16.mxu0 0
  %1975 = vmatpush1.bf16.msra.mxu0 0
  %1976 = vmatprep.subr.bf16.mxu0 0
  %1977 = vmatpush1.bf16.msra.mxu0 0
  %1978 = vmatprep.subr.bf16.mxu0 0
  %1979 = vmatpush1.bf16.msra.mxu0 0
  %1980 = vmatprep.subr.bf16.mxu0 0
  %1981 = vmatpush1.bf16.msra.mxu0 0
  %1982 = vmatprep.subr.bf16.mxu0 0
  %1983 = vmatpush1.bf16.msra.mxu0 0
  %1984 = vmatprep.subr.bf16.mxu0 0
  %1985 = vmatpush1.bf16.msra.mxu0 0
  %1986 = vmatprep.subr.bf16.mxu0 0
  %1987 = vmatpush1.bf16.msra.mxu0 0
  %1988 = vmatprep.subr.bf16.mxu0 0
  %1989 = vmatpush1.bf16.msra.mxu0 0
  %1990 = vmatprep.subr.bf16.mxu0 0
  %1991 = vmatpush1.bf16.msra.mxu0 0
  %1992 = vmatprep.subr.bf16.mxu0 0
  %1993 = vmatpush1.bf16.msra.mxu0 0
  %1994 = vmatprep.subr.bf16.mxu0 0
  %1995 = vmatpush1.bf16.msra.mxu0 0
  %1996 = vmatprep.subr.bf16.mxu0 0
  %1997 = vmatpush1.bf16.msra.mxu0 0
  %1998 = vmatprep.mubr.bf16.mxu0 0
  %1999 = vmatmul.mubr.bf16.gmra.mrb[0].mxu0 %v1964
  %v2000 = vpop.f32.mrb[0].mxu0
  %v2001 = vadd.f32 0.0, %v2000
  %v2002 = vpop.f32.mrb[0].mxu0
  %v2003 = vpop.f32.mrb[0].mxu0
  %v2004 = vpop.f32.mrb[0].mxu0
  %2005 = vdwg.mxu0
  %2006 = vrot.lane.b32.xlu0 %v842, 96
  %v2007 = vpop.permute.xlu0 %2006
  %2008 = vrot.lane.b32.xlu0 %v843, 96
  %v2009 = vpop.permute.xlu0 %2008
  %v2013 = vsel %vm778, %v1953, 0
  %2015 = vmatprep.subr.bf16.mxu0 0
  %2016 = vmatpush1.bf16.msra.mxu0 %v2007
  %2017 = vmatprep.subr.bf16.mxu0 0
  %2018 = vmatpush1.bf16.msra.mxu0 %v2009
  %2019 = vmatprep.subr.bf16.mxu0 0
  %2020 = vmatpush1.bf16.msra.mxu0 0
  %2021 = vmatprep.subr.bf16.mxu0 0
  %2022 = vmatpush1.bf16.msra.mxu0 0
  %2023 = vmatprep.subr.bf16.mxu0 0
  %2024 = vmatpush1.bf16.msra.mxu0 0
  %2025 = vmatprep.subr.bf16.mxu0 0
  %2026 = vmatpush1.bf16.msra.mxu0 0
  %2027 = vmatprep.subr.bf16.mxu0 0
  %2028 = vmatpush1.bf16.msra.mxu0 0
  %2029 = vmatprep.subr.bf16.mxu0 0
  %2030 = vmatpush1.bf16.msra.mxu0 0
  %2031 = vmatprep.subr.bf16.mxu0 0
  %2032 = vmatpush1.bf16.msra.mxu0 0
  %2033 = vmatprep.subr.bf16.mxu0 0
  %2034 = vmatpush1.bf16.msra.mxu0 0
  %2035 = vmatprep.subr.bf16.mxu0 0
  %2036 = vmatpush1.bf16.msra.mxu0 0
  %2037 = vmatprep.subr.bf16.mxu0 0
  %2038 = vmatpush1.bf16.msra.mxu0 0
  %2039 = vmatprep.subr.bf16.mxu0 0
  %2040 = vmatpush1.bf16.msra.mxu0 0
  %2041 = vmatprep.subr.bf16.mxu0 0
  %2042 = vmatpush1.bf16.msra.mxu0 0
  %2043 = vmatprep.subr.bf16.mxu0 0
  %2044 = vmatpush1.bf16.msra.mxu0 0
  %2045 = vmatprep.subr.bf16.mxu0 0
  %2046 = vmatpush1.bf16.msra.mxu0 0
  %2047 = vmatprep.mubr.bf16.mxu0 0
  %2048 = vmatmul.mubr.bf16.gmra.mrb[0].mxu0 %v2013
  %v2049 = vpop.f32.mrb[0].mxu0
  %v2050 = vadd.f32 %v2001, %v2049
  %v2051 = vpop.f32.mrb[0].mxu0
  %v2052 = vpop.f32.mrb[0].mxu0
  %v2053 = vpop.f32.mrb[0].mxu0
  %2054 = vdwg.mxu0
  %v2055 = vrot.slane %v1953, 2
  %2056 = vrot.lane.b32.xlu0 %v913, 96
  %v2057 = vpop.permute.xlu0 %2056
  %2058 = vrot.lane.b32.xlu0 %v914, 96
  %v2059 = vpop.permute.xlu0 %2058
  %v2063 = vsel %vm778, %v2055, 0
  %2065 = vmatprep.subr.bf16.mxu0 0
  %2066 = vmatpush1.bf16.msra.mxu0 %v2057
  %2067 = vmatprep.subr.bf16.mxu0 0
  %2068 = vmatpush1.bf16.msra.mxu0 %v2059
  %2069 = vmatprep.subr.bf16.mxu0 0
  %2070 = vmatpush1.bf16.msra.mxu0 0
  %2071 = vmatprep.subr.bf16.mxu0 0
  %2072 = vmatpush1.bf16.msra.mxu0 0
  %2073 = vmatprep.subr.bf16.mxu0 0
  %2074 = vmatpush1.bf16.msra.mxu0 0
  %2075 = vmatprep.subr.bf16.mxu0 0
  %2076 = vmatpush1.bf16.msra.mxu0 0
  %2077 = vmatprep.subr.bf16.mxu0 0
  %2078 = vmatpush1.bf16.msra.mxu0 0
  %2079 = vmatprep.subr.bf16.mxu0 0
  %2080 = vmatpush1.bf16.msra.mxu0 0
  %2081 = vmatprep.subr.bf16.mxu0 0
  %2082 = vmatpush1.bf16.msra.mxu0 0
  %2083 = vmatprep.subr.bf16.mxu0 0
  %2084 = vmatpush1.bf16.msra.mxu0 0
  %2085 = vmatprep.subr.bf16.mxu0 0
  %2086 = vmatpush1.bf16.msra.mxu0 0
  %2087 = vmatprep.subr.bf16.mxu0 0
  %2088 = vmatpush1.bf16.msra.mxu0 0
  %2089 = vmatprep.subr.bf16.mxu0 0
  %2090 = vmatpush1.bf16.msra.mxu0 0
  %2091 = vmatprep.subr.bf16.mxu0 0
  %2092 = vmatpush1.bf16.msra.mxu0 0
  %2093 = vmatprep.subr.bf16.mxu0 0
  %2094 = vmatpush1.bf16.msra.mxu0 0
  %2095 = vmatprep.subr.bf16.mxu0 0
  %2096 = vmatpush1.bf16.msra.mxu0 0
  %2097 = vmatprep.mubr.bf16.mxu0 0
  %2098 = vmatmul.mubr.bf16.gmra.mrb[0].mxu0 %v2063
  %v2099 = vpop.f32.mrb[0].mxu0
  %v2100 = vadd.f32 0.0, %v2099
  %v2101 = vpop.f32.mrb[0].mxu0
  %v2102 = vpop.f32.mrb[0].mxu0
  %v2103 = vpop.f32.mrb[0].mxu0
  %2104 = vdwg.mxu0
  %v2105 = vadd.f32 %v2050, %v2100
  %v2106 = vrot.slane %v1953, 3
  %2107 = vrot.lane.b32.xlu0 %v988, 96
  %v2108 = vpop.permute.xlu0 %2107
  %2109 = vrot.lane.b32.xlu0 %v989, 96
  %v2110 = vpop.permute.xlu0 %2109
  %v2114 = vsel %vm778, %v2106, 0
  %2116 = vmatprep.subr.bf16.mxu0 0
  %2117 = vmatpush1.bf16.msra.mxu0 %v2108
  %2118 = vmatprep.subr.bf16.mxu0 0
  %2119 = vmatpush1.bf16.msra.mxu0 %v2110
  %2120 = vmatprep.subr.bf16.mxu0 0
  %2121 = vmatpush1.bf16.msra.mxu0 0
  %2122 = vmatprep.subr.bf16.mxu0 0
  %2123 = vmatpush1.bf16.msra.mxu0 0
  %2124 = vmatprep.subr.bf16.mxu0 0
  %2125 = vmatpush1.bf16.msra.mxu0 0
  %2126 = vmatprep.subr.bf16.mxu0 0
  %2127 = vmatpush1.bf16.msra.mxu0 0
  %2128 = vmatprep.subr.bf16.mxu0 0
  %2129 = vmatpush1.bf16.msra.mxu0 0
  %2130 = vmatprep.subr.bf16.mxu0 0
  %2131 = vmatpush1.bf16.msra.mxu0 0
  %2132 = vmatprep.subr.bf16.mxu0 0
  %2133 = vmatpush1.bf16.msra.mxu0 0
  %2134 = vmatprep.subr.bf16.mxu0 0
  %2135 = vmatpush1.bf16.msra.mxu0 0
  %2136 = vmatprep.subr.bf16.mxu0 0
  %2137 = vmatpush1.bf16.msra.mxu0 0
  %2138 = vmatprep.subr.bf16.mxu0 0
  %2139 = vmatpush1.bf16.msra.mxu0 0
  %2140 = vmatprep.subr.bf16.mxu0 0
  %2141 = vmatpush1.bf16.msra.mxu0 0
  %2142 = vmatprep.subr.bf16.mxu0 0
  %2143 = vmatpush1.bf16.msra.mxu0 0
  %2144 = vmatprep.subr.bf16.mxu0 0
  %2145 = vmatpush1.bf16.msra.mxu0 0
  %2146 = vmatprep.subr.bf16.mxu0 0
  %2147 = vmatpush1.bf16.msra.mxu0 0
  %2148 = vmatprep.mubr.bf16.mxu0 0
  %2149 = vmatmul.mubr.bf16.gmra.mrb[0].mxu0 %v2114
  %v2150 = vpop.f32.mrb[0].mxu0
  %v2151 = vadd.f32 0.0, %v2150
  %v2152 = vpop.f32.mrb[0].mxu0
  %v2153 = vpop.f32.mrb[0].mxu0
  %v2154 = vpop.f32.mrb[0].mxu0
  %2155 = vdwg.mxu0
  %v2156 = vadd.f32 %v2105, %v2151
  %v2157 = vrot.slane %v1953, 5
  %2158 = vrot.lane.b32.xlu0 %v1067, 96
  %v2159 = vpop.permute.xlu0 %2158
  %2160 = vrot.lane.b32.xlu0 %v1068, 96
  %v2161 = vpop.permute.xlu0 %2160
  %v2165 = vsel %vm778, %v2157, 0
  %2167 = vmatprep.subr.bf16.mxu0 0
  %2168 = vmatpush1.bf16.msra.mxu0 %v2159
  %2169 = vmatprep.subr.bf16.mxu0 0
  %2170 = vmatpush1.bf16.msra.mxu0 %v2161
  %2171 = vmatprep.subr.bf16.mxu0 0
  %2172 = vmatpush1.bf16.msra.mxu0 0
  %2173 = vmatprep.subr.bf16.mxu0 0
  %2174 = vmatpush1.bf16.msra.mxu0 0
  %2175 = vmatprep.subr.bf16.mxu0 0
  %2176 = vmatpush1.bf16.msra.mxu0 0
  %2177 = vmatprep.subr.bf16.mxu0 0
  %2178 = vmatpush1.bf16.msra.mxu0 0
  %2179 = vmatprep.subr.bf16.mxu0 0
  %2180 = vmatpush1.bf16.msra.mxu0 0
  %2181 = vmatprep.subr.bf16.mxu0 0
  %2182 = vmatpush1.bf16.msra.mxu0 0
  %2183 = vmatprep.subr.bf16.mxu0 0
  %2184 = vmatpush1.bf16.msra.mxu0 0
  %2185 = vmatprep.subr.bf16.mxu0 0
  %2186 = vmatpush1.bf16.msra.mxu0 0
  %2187 = vmatprep.subr.bf16.mxu0 0
  %2188 = vmatpush1.bf16.msra.mxu0 0
  %2189 = vmatprep.subr.bf16.mxu0 0
  %2190 = vmatpush1.bf16.msra.mxu0 0
  %2191 = vmatprep.subr.bf16.mxu0 0
  %2192 = vmatpush1.bf16.msra.mxu0 0
  %2193 = vmatprep.subr.bf16.mxu0 0
  %2194 = vmatpush1.bf16.msra.mxu0 0
  %2195 = vmatprep.subr.bf16.mxu0 0
  %2196 = vmatpush1.bf16.msra.mxu0 0
  %2197 = vmatprep.subr.bf16.mxu0 0
  %2198 = vmatpush1.bf16.msra.mxu0 0
  %2199 = vmatprep.mubr.bf16.mxu0 0
  %2200 = vmatmul.mubr.bf16.gmra.mrb[0].mxu0 %v2165
  %v2201 = vpop.f32.mrb[0].mxu0
  %v2202 = vadd.f32 0.0, %v2201
  %v2203 = vpop.f32.mrb[0].mxu0
  %v2204 = vpop.f32.mrb[0].mxu0
  %v2205 = vpop.f32.mrb[0].mxu0
  %2206 = vdwg.mxu0
  %v2207 = vrot.slane %v1953, 4
  %2208 = vrot.lane.b32.xlu0 %v1134, 96
  %v2209 = vpop.permute.xlu0 %2208
  %2210 = vrot.lane.b32.xlu0 %v1135, 96
  %v2211 = vpop.permute.xlu0 %2210
  %v2215 = vsel %vm778, %v2207, 0
  %2217 = vmatprep.subr.bf16.mxu0 0
  %2218 = vmatpush1.bf16.msra.mxu0 %v2209
  %2219 = vmatprep.subr.bf16.mxu0 0
  %2220 = vmatpush1.bf16.msra.mxu0 %v2211
  %2221 = vmatprep.subr.bf16.mxu0 0
  %2222 = vmatpush1.bf16.msra.mxu0 0
  %2223 = vmatprep.subr.bf16.mxu0 0
  %2224 = vmatpush1.bf16.msra.mxu0 0
  %2225 = vmatprep.subr.bf16.mxu0 0
  %2226 = vmatpush1.bf16.msra.mxu0 0
  %2227 = vmatprep.subr.bf16.mxu0 0
  %2228 = vmatpush1.bf16.msra.mxu0 0
  %2229 = vmatprep.subr.bf16.mxu0 0
  %2230 = vmatpush1.bf16.msra.mxu0 0
  %2231 = vmatprep.subr.bf16.mxu0 0
  %2232 = vmatpush1.bf16.msra.mxu0 0
  %2233 = vmatprep.subr.bf16.mxu0 0
  %2234 = vmatpush1.bf16.msra.mxu0 0
  %2235 = vmatprep.subr.bf16.mxu0 0
  %2236 = vmatpush1.bf16.msra.mxu0 0
  %2237 = vmatprep.subr.bf16.mxu0 0
  %2238 = vmatpush1.bf16.msra.mxu0 0
  %2239 = vmatprep.subr.bf16.mxu0 0
  %2240 = vmatpush1.bf16.msra.mxu0 0
  %2241 = vmatprep.subr.bf16.mxu0 0
  %2242 = vmatpush1.bf16.msra.mxu0 0
  %2243 = vmatprep.subr.bf16.mxu0 0
  %2244 = vmatpush1.bf16.msra.mxu0 0
  %2245 = vmatprep.subr.bf16.mxu0 0
  %2246 = vmatpush1.bf16.msra.mxu0 0
  %2247 = vmatprep.subr.bf16.mxu0 0
  %2248 = vmatpush1.bf16.msra.mxu0 0
  %2249 = vmatprep.mubr.bf16.mxu0 0
  %2250 = vmatmul.mubr.bf16.gmra.mrb[0].mxu0 %v2215
  %v2251 = vpop.f32.mrb[0].mxu0
  %v2252 = vadd.f32 %v2202, %v2251
  %v2253 = vpop.f32.mrb[0].mxu0
  %v2254 = vpop.f32.mrb[0].mxu0
  %v2255 = vpop.f32.mrb[0].mxu0
  %2256 = vdwg.mxu0
  %v2257 = vrot.slane %v1953, 6
  %2258 = vrot.lane.b32.xlu0 %v1205, 96
  %v2259 = vpop.permute.xlu0 %2258
  %2260 = vrot.lane.b32.xlu0 %v1206, 96
  %v2261 = vpop.permute.xlu0 %2260
  %v2265 = vsel %vm778, %v2257, 0
  %2267 = vmatprep.subr.bf16.mxu0 0
  %2268 = vmatpush1.bf16.msra.mxu0 %v2259
  %2269 = vmatprep.subr.bf16.mxu0 0
  %2270 = vmatpush1.bf16.msra.mxu0 %v2261
  %2271 = vmatprep.subr.bf16.mxu0 0
  %2272 = vmatpush1.bf16.msra.mxu0 0
  %2273 = vmatprep.subr.bf16.mxu0 0
  %2274 = vmatpush1.bf16.msra.mxu0 0
  %2275 = vmatprep.subr.bf16.mxu0 0
  %2276 = vmatpush1.bf16.msra.mxu0 0
  %2277 = vmatprep.subr.bf16.mxu0 0
  %2278 = vmatpush1.bf16.msra.mxu0 0
  %2279 = vmatprep.subr.bf16.mxu0 0
  %2280 = vmatpush1.bf16.msra.mxu0 0
  %2281 = vmatprep.subr.bf16.mxu0 0
  %2282 = vmatpush1.bf16.msra.mxu0 0
  %2283 = vmatprep.subr.bf16.mxu0 0
  %2284 = vmatpush1.bf16.msra.mxu0 0
  %2285 = vmatprep.subr.bf16.mxu0 0
  %2286 = vmatpush1.bf16.msra.mxu0 0
  %2287 = vmatprep.subr.bf16.mxu0 0
  %2288 = vmatpush1.bf16.msra.mxu0 0
  %2289 = vmatprep.subr.bf16.mxu0 0
  %2290 = vmatpush1.bf16.msra.mxu0 0
  %2291 = vmatprep.subr.bf16.mxu0 0
  %2292 = vmatpush1.bf16.msra.mxu0 0
  %2293 = vmatprep.subr.bf16.mxu0 0
  %2294 = vmatpush1.bf16.msra.mxu0 0
  %2295 = vmatprep.subr.bf16.mxu0 0
  %2296 = vmatpush1.bf16.msra.mxu0 0
  %2297 = vmatprep.subr.bf16.mxu0 0
  %2298 = vmatpush1.bf16.msra.mxu0 0
  %2299 = vmatprep.mubr.bf16.mxu0 0
  %2300 = vmatmul.mubr.bf16.gmra.mrb[0].mxu0 %v2265
  %v2301 = vpop.f32.mrb[0].mxu0
  %v2302 = vadd.f32 0.0, %v2301
  %v2303 = vpop.f32.mrb[0].mxu0
  %v2304 = vpop.f32.mrb[0].mxu0
  %v2305 = vpop.f32.mrb[0].mxu0
  %2306 = vdwg.mxu0
  %v2307 = vadd.f32 %v2252, %v2302
  %v2308 = vrot.slane %v1953, 7
  %2309 = vrot.lane.b32.xlu0 %v1280, 96
  %v2310 = vpop.permute.xlu0 %2309
  %2311 = vrot.lane.b32.xlu0 %v1281, 96
  %v2312 = vpop.permute.xlu0 %2311
  %v2316 = vsel %vm778, %v2308, 0
  %2318 = vmatprep.subr.bf16.mxu0 0
  %2319 = vmatpush1.bf16.msra.mxu0 %v2310
  %2320 = vmatprep.subr.bf16.mxu0 0
  %2321 = vmatpush1.bf16.msra.mxu0 %v2312
  %2322 = vmatprep.subr.bf16.mxu0 0
  %2323 = vmatpush1.bf16.msra.mxu0 0
  %2324 = vmatprep.subr.bf16.mxu0 0
  %2325 = vmatpush1.bf16.msra.mxu0 0
  %2326 = vmatprep.subr.bf16.mxu0 0
  %2327 = vmatpush1.bf16.msra.mxu0 0
  %2328 = vmatprep.subr.bf16.mxu0 0
  %2329 = vmatpush1.bf16.msra.mxu0 0
  %2330 = vmatprep.subr.bf16.mxu0 0
  %2331 = vmatpush1.bf16.msra.mxu0 0
  %2332 = vmatprep.subr.bf16.mxu0 0
  %2333 = vmatpush1.bf16.msra.mxu0 0
  %2334 = vmatprep.subr.bf16.mxu0 0
  %2335 = vmatpush1.bf16.msra.mxu0 0
  %2336 = vmatprep.subr.bf16.mxu0 0
  %2337 = vmatpush1.bf16.msra.mxu0 0
  %2338 = vmatprep.subr.bf16.mxu0 0
  %2339 = vmatpush1.bf16.msra.mxu0 0
  %2340 = vmatprep.subr.bf16.mxu0 0
  %2341 = vmatpush1.bf16.msra.mxu0 0
  %2342 = vmatprep.subr.bf16.mxu0 0
  %2343 = vmatpush1.bf16.msra.mxu0 0
  %2344 = vmatprep.subr.bf16.mxu0 0
  %2345 = vmatpush1.bf16.msra.mxu0 0
  %2346 = vmatprep.subr.bf16.mxu0 0
  %2347 = vmatpush1.bf16.msra.mxu0 0
  %2348 = vmatprep.subr.bf16.mxu0 0
  %2349 = vmatpush1.bf16.msra.mxu0 0
  %2350 = vmatprep.mubr.bf16.mxu0 0
  %2351 = vmatmul.mubr.bf16.gmra.mrb[0].mxu0 %v2316
  %v2352 = vpop.f32.mrb[0].mxu0
  %v2353 = vadd.f32 0.0, %v2352
  %v2354 = vpop.f32.mrb[0].mxu0
  %v2355 = vpop.f32.mrb[0].mxu0
  %v2356 = vpop.f32.mrb[0].mxu0
  %2357 = vdwg.mxu0
  %v2358 = vadd.f32 %v2307, %v2353
  %v2360 = vrot.slane %v1954, 1
  %2361 = vrot.lane.b32.xlu0 %v1359, 96
  %v2362 = vpop.permute.xlu0 %2361
  %2363 = vrot.lane.b32.xlu0 %v1360, 96
  %v2364 = vpop.permute.xlu0 %2363
  %v2368 = vsel %vm778, %v2360, 0
  %2370 = vmatprep.subr.bf16.mxu0 0
  %2371 = vmatpush1.bf16.msra.mxu0 %v2362
  %2372 = vmatprep.subr.bf16.mxu0 0
  %2373 = vmatpush1.bf16.msra.mxu0 %v2364
  %2374 = vmatprep.subr.bf16.mxu0 0
  %2375 = vmatpush1.bf16.msra.mxu0 0
  %2376 = vmatprep.subr.bf16.mxu0 0
  %2377 = vmatpush1.bf16.msra.mxu0 0
  %2378 = vmatprep.subr.bf16.mxu0 0
  %2379 = vmatpush1.bf16.msra.mxu0 0
  %2380 = vmatprep.subr.bf16.mxu0 0
  %2381 = vmatpush1.bf16.msra.mxu0 0
  %2382 = vmatprep.subr.bf16.mxu0 0
  %2383 = vmatpush1.bf16.msra.mxu0 0
  %2384 = vmatprep.subr.bf16.mxu0 0
  %2385 = vmatpush1.bf16.msra.mxu0 0
  %2386 = vmatprep.subr.bf16.mxu0 0
  %2387 = vmatpush1.bf16.msra.mxu0 0
  %2388 = vmatprep.subr.bf16.mxu0 0
  %2389 = vmatpush1.bf16.msra.mxu0 0
  %2390 = vmatprep.subr.bf16.mxu0 0
  %2391 = vmatpush1.bf16.msra.mxu0 0
  %2392 = vmatprep.subr.bf16.mxu0 0
  %2393 = vmatpush1.bf16.msra.mxu0 0
  %2394 = vmatprep.subr.bf16.mxu0 0
  %2395 = vmatpush1.bf16.msra.mxu0 0
  %2396 = vmatprep.subr.bf16.mxu0 0
  %2397 = vmatpush1.bf16.msra.mxu0 0
  %2398 = vmatprep.subr.bf16.mxu0 0
  %2399 = vmatpush1.bf16.msra.mxu0 0
  %2400 = vmatprep.subr.bf16.mxu0 0
  %2401 = vmatpush1.bf16.msra.mxu0 0
  %2402 = vmatprep.mubr.bf16.mxu0 0
  %2403 = vmatmul.mubr.bf16.gmra.mrb[0].mxu0 %v2368
  %v2404 = vpop.f32.mrb[0].mxu0
  %v2405 = vadd.f32 0.0, %v2404
  %v2406 = vpop.f32.mrb[0].mxu0
  %v2407 = vpop.f32.mrb[0].mxu0
  %v2408 = vpop.f32.mrb[0].mxu0
  %2409 = vdwg.mxu0
  %2410 = vrot.lane.b32.xlu0 %v1426, 96
  %v2411 = vpop.permute.xlu0 %2410
  %2412 = vrot.lane.b32.xlu0 %v1427, 96
  %v2413 = vpop.permute.xlu0 %2412
  %v2417 = vsel %vm778, %v1954, 0
  %2419 = vmatprep.subr.bf16.mxu0 0
  %2420 = vmatpush1.bf16.msra.mxu0 %v2411
  %2421 = vmatprep.subr.bf16.mxu0 0
  %2422 = vmatpush1.bf16.msra.mxu0 %v2413
  %2423 = vmatprep.subr.bf16.mxu0 0
  %2424 = vmatpush1.bf16.msra.mxu0 0
  %2425 = vmatprep.subr.bf16.mxu0 0
  %2426 = vmatpush1.bf16.msra.mxu0 0
  %2427 = vmatprep.subr.bf16.mxu0 0
  %2428 = vmatpush1.bf16.msra.mxu0 0
  %2429 = vmatprep.subr.bf16.mxu0 0
  %2430 = vmatpush1.bf16.msra.mxu0 0
  %2431 = vmatprep.subr.bf16.mxu0 0
  %2432 = vmatpush1.bf16.msra.mxu0 0
  %2433 = vmatprep.subr.bf16.mxu0 0
  %2434 = vmatpush1.bf16.msra.mxu0 0
  %2435 = vmatprep.subr.bf16.mxu0 0
  %2436 = vmatpush1.bf16.msra.mxu0 0
  %2437 = vmatprep.subr.bf16.mxu0 0
  %2438 = vmatpush1.bf16.msra.mxu0 0
  %2439 = vmatprep.subr.bf16.mxu0 0
  %2440 = vmatpush1.bf16.msra.mxu0 0
  %2441 = vmatprep.subr.bf16.mxu0 0
  %2442 = vmatpush1.bf16.msra.mxu0 0
  %2443 = vmatprep.subr.bf16.mxu0 0
  %2444 = vmatpush1.bf16.msra.mxu0 0
  %2445 = vmatprep.subr.bf16.mxu0 0
  %2446 = vmatpush1.bf16.msra.mxu0 0
  %2447 = vmatprep.subr.bf16.mxu0 0
  %2448 = vmatpush1.bf16.msra.mxu0 0
  %2449 = vmatprep.subr.bf16.mxu0 0
  %2450 = vmatpush1.bf16.msra.mxu0 0
  %2451 = vmatprep.mubr.bf16.mxu0 0
  %2452 = vmatmul.mubr.bf16.gmra.mrb[0].mxu0 %v2417
  %v2453 = vpop.f32.mrb[0].mxu0
  %v2454 = vadd.f32 %v2405, %v2453
  %v2455 = vpop.f32.mrb[0].mxu0
  %v2456 = vpop.f32.mrb[0].mxu0
  %v2457 = vpop.f32.mrb[0].mxu0
  %2458 = vdwg.mxu0
  %v2459 = vrot.slane %v1954, 2
  %2460 = vrot.lane.b32.xlu0 %v1497, 96
  %v2461 = vpop.permute.xlu0 %2460
  %2462 = vrot.lane.b32.xlu0 %v1498, 96
  %v2463 = vpop.permute.xlu0 %2462
  %v2467 = vsel %vm778, %v2459, 0
  %2469 = vmatprep.subr.bf16.mxu0 0
  %2470 = vmatpush1.bf16.msra.mxu0 %v2461
  %2471 = vmatprep.subr.bf16.mxu0 0
  %2472 = vmatpush1.bf16.msra.mxu0 %v2463
  %2473 = vmatprep.subr.bf16.mxu0 0
  %2474 = vmatpush1.bf16.msra.mxu0 0
  %2475 = vmatprep.subr.bf16.mxu0 0
  %2476 = vmatpush1.bf16.msra.mxu0 0
  %2477 = vmatprep.subr.bf16.mxu0 0
  %2478 = vmatpush1.bf16.msra.mxu0 0
  %2479 = vmatprep.subr.bf16.mxu0 0
  %2480 = vmatpush1.bf16.msra.mxu0 0
  %2481 = vmatprep.subr.bf16.mxu0 0
  %2482 = vmatpush1.bf16.msra.mxu0 0
  %2483 = vmatprep.subr.bf16.mxu0 0
  %2484 = vmatpush1.bf16.msra.mxu0 0
  %2485 = vmatprep.subr.bf16.mxu0 0
  %2486 = vmatpush1.bf16.msra.mxu0 0
  %2487 = vmatprep.subr.bf16.mxu0 0
  %2488 = vmatpush1.bf16.msra.mxu0 0
  %2489 = vmatprep.subr.bf16.mxu0 0
  %2490 = vmatpush1.bf16.msra.mxu0 0
  %2491 = vmatprep.subr.bf16.mxu0 0
  %2492 = vmatpush1.bf16.msra.mxu0 0
  %2493 = vmatprep.subr.bf16.mxu0 0
  %2494 = vmatpush1.bf16.msra.mxu0 0
  %2495 = vmatprep.subr.bf16.mxu0 0
  %2496 = vmatpush1.bf16.msra.mxu0 0
  %2497 = vmatprep.subr.bf16.mxu0 0
  %2498 = vmatpush1.bf16.msra.mxu0 0
  %2499 = vmatprep.subr.bf16.mxu0 0
  %2500 = vmatpush1.bf16.msra.mxu0 0
  %2501 = vmatprep.mubr.bf16.mxu0 0
  %2502 = vmatmul.mubr.bf16.gmra.mrb[0].mxu0 %v2467
  %v2503 = vpop.f32.mrb[0].mxu0
  %v2504 = vadd.f32 0.0, %v2503
  %v2505 = vpop.f32.mrb[0].mxu0
  %v2506 = vpop.f32.mrb[0].mxu0
  %v2507 = vpop.f32.mrb[0].mxu0
  %2508 = vdwg.mxu0
  %v2509 = vadd.f32 %v2454, %v2504
  %v2510 = vrot.slane %v1954, 3
  %2511 = vrot.lane.b32.xlu0 %v1572, 96
  %v2512 = vpop.permute.xlu0 %2511
  %2513 = vrot.lane.b32.xlu0 %v1573, 96
  %v2514 = vpop.permute.xlu0 %2513
  %v2518 = vsel %vm778, %v2510, 0
  %2520 = vmatprep.subr.bf16.mxu0 0
  %2521 = vmatpush1.bf16.msra.mxu0 %v2512
  %2522 = vmatprep.subr.bf16.mxu0 0
  %2523 = vmatpush1.bf16.msra.mxu0 %v2514
  %2524 = vmatprep.subr.bf16.mxu0 0
  %2525 = vmatpush1.bf16.msra.mxu0 0
  %2526 = vmatprep.subr.bf16.mxu0 0
  %2527 = vmatpush1.bf16.msra.mxu0 0
  %2528 = vmatprep.subr.bf16.mxu0 0
  %2529 = vmatpush1.bf16.msra.mxu0 0
  %2530 = vmatprep.subr.bf16.mxu0 0
  %2531 = vmatpush1.bf16.msra.mxu0 0
  %2532 = vmatprep.subr.bf16.mxu0 0
  %2533 = vmatpush1.bf16.msra.mxu0 0
  %2534 = vmatprep.subr.bf16.mxu0 0
  %2535 = vmatpush1.bf16.msra.mxu0 0
  %2536 = vmatprep.subr.bf16.mxu0 0
  %2537 = vmatpush1.bf16.msra.mxu0 0
  %2538 = vmatprep.subr.bf16.mxu0 0
  %2539 = vmatpush1.bf16.msra.mxu0 0
  %2540 = vmatprep.subr.bf16.mxu0 0
  %2541 = vmatpush1.bf16.msra.mxu0 0
  %2542 = vmatprep.subr.bf16.mxu0 0
  %2543 = vmatpush1.bf16.msra.mxu0 0
  %2544 = vmatprep.subr.bf16.mxu0 0
  %2545 = vmatpush1.bf16.msra.mxu0 0
  %2546 = vmatprep.subr.bf16.mxu0 0
  %2547 = vmatpush1.bf16.msra.mxu0 0
  %2548 = vmatprep.subr.bf16.mxu0 0
  %2549 = vmatpush1.bf16.msra.mxu0 0
  %2550 = vmatprep.subr.bf16.mxu0 0
  %2551 = vmatpush1.bf16.msra.mxu0 0
  %2552 = vmatprep.mubr.bf16.mxu0 0
  %2553 = vmatmul.mubr.bf16.gmra.mrb[0].mxu0 %v2518
  %v2554 = vpop.f32.mrb[0].mxu0
  %v2555 = vadd.f32 0.0, %v2554
  %v2556 = vpop.f32.mrb[0].mxu0
  %v2557 = vpop.f32.mrb[0].mxu0
  %v2558 = vpop.f32.mrb[0].mxu0
  %2559 = vdwg.mxu0
  %v2560 = vadd.f32 %v2509, %v2555
  %v2561 = vrot.slane %v1954, 5
  %2562 = vrot.lane.b32.xlu0 %v1651, 96
  %v2563 = vpop.permute.xlu0 %2562
  %2564 = vrot.lane.b32.xlu0 %v1652, 96
  %v2565 = vpop.permute.xlu0 %2564
  %v2569 = vsel %vm778, %v2561, 0
  %2571 = vmatprep.subr.bf16.mxu0 0
  %2572 = vmatpush1.bf16.msra.mxu0 %v2563
  %2573 = vmatprep.subr.bf16.mxu0 0
  %2574 = vmatpush1.bf16.msra.mxu0 %v2565
  %2575 = vmatprep.subr.bf16.mxu0 0
  %2576 = vmatpush1.bf16.msra.mxu0 0
  %2577 = vmatprep.subr.bf16.mxu0 0
  %2578 = vmatpush1.bf16.msra.mxu0 0
  %2579 = vmatprep.subr.bf16.mxu0 0
  %2580 = vmatpush1.bf16.msra.mxu0 0
  %2581 = vmatprep.subr.bf16.mxu0 0
  %2582 = vmatpush1.bf16.msra.mxu0 0
  %2583 = vmatprep.subr.bf16.mxu0 0
  %2584 = vmatpush1.bf16.msra.mxu0 0
  %2585 = vmatprep.subr.bf16.mxu0 0
  %2586 = vmatpush1.bf16.msra.mxu0 0
  %2587 = vmatprep.subr.bf16.mxu0 0
  %2588 = vmatpush1.bf16.msra.mxu0 0
  %2589 = vmatprep.subr.bf16.mxu0 0
  %2590 = vmatpush1.bf16.msra.mxu0 0
  %2591 = vmatprep.subr.bf16.mxu0 0
  %2592 = vmatpush1.bf16.msra.mxu0 0
  %2593 = vmatprep.subr.bf16.mxu0 0
  %2594 = vmatpush1.bf16.msra.mxu0 0
  %2595 = vmatprep.subr.bf16.mxu0 0
  %2596 = vmatpush1.bf16.msra.mxu0 0
  %2597 = vmatprep.subr.bf16.mxu0 0
  %2598 = vmatpush1.bf16.msra.mxu0 0
  %2599 = vmatprep.subr.bf16.mxu0 0
  %2600 = vmatpush1.bf16.msra.mxu0 0
  %2601 = vmatprep.subr.bf16.mxu0 0
  %2602 = vmatpush1.bf16.msra.mxu0 0
  %2603 = vmatprep.mubr.bf16.mxu0 0
  %2604 = vmatmul.mubr.bf16.gmra.mrb[0].mxu0 %v2569
  %v2605 = vpop.f32.mrb[0].mxu0
  %v2606 = vadd.f32 0.0, %v2605
  %v2607 = vpop.f32.mrb[0].mxu0
  %v2608 = vpop.f32.mrb[0].mxu0
  %v2609 = vpop.f32.mrb[0].mxu0
  %2610 = vdwg.mxu0
  %v2611 = vrot.slane %v1954, 4
  %2612 = vrot.lane.b32.xlu0 %v1718, 96
  %v2613 = vpop.permute.xlu0 %2612
  %2614 = vrot.lane.b32.xlu0 %v1719, 96
  %v2615 = vpop.permute.xlu0 %2614
  %v2619 = vsel %vm778, %v2611, 0
  %2621 = vmatprep.subr.bf16.mxu0 0
  %2622 = vmatpush1.bf16.msra.mxu0 %v2613
  %2623 = vmatprep.subr.bf16.mxu0 0
  %2624 = vmatpush1.bf16.msra.mxu0 %v2615
  %2625 = vmatprep.subr.bf16.mxu0 0
  %2626 = vmatpush1.bf16.msra.mxu0 0
  %2627 = vmatprep.subr.bf16.mxu0 0
  %2628 = vmatpush1.bf16.msra.mxu0 0
  %2629 = vmatprep.subr.bf16.mxu0 0
  %2630 = vmatpush1.bf16.msra.mxu0 0
  %2631 = vmatprep.subr.bf16.mxu0 0
  %2632 = vmatpush1.bf16.msra.mxu0 0
  %2633 = vmatprep.subr.bf16.mxu0 0
  %2634 = vmatpush1.bf16.msra.mxu0 0
  %2635 = vmatprep.subr.bf16.mxu0 0
  %2636 = vmatpush1.bf16.msra.mxu0 0
  %2637 = vmatprep.subr.bf16.mxu0 0
  %2638 = vmatpush1.bf16.msra.mxu0 0
  %2639 = vmatprep.subr.bf16.mxu0 0
  %2640 = vmatpush1.bf16.msra.mxu0 0
  %2641 = vmatprep.subr.bf16.mxu0 0
  %2642 = vmatpush1.bf16.msra.mxu0 0
  %2643 = vmatprep.subr.bf16.mxu0 0
  %2644 = vmatpush1.bf16.msra.mxu0 0
  %2645 = vmatprep.subr.bf16.mxu0 0
  %2646 = vmatpush1.bf16.msra.mxu0 0
  %2647 = vmatprep.subr.bf16.mxu0 0
  %2648 = vmatpush1.bf16.msra.mxu0 0
  %2649 = vmatprep.subr.bf16.mxu0 0
  %2650 = vmatpush1.bf16.msra.mxu0 0
  %2651 = vmatprep.subr.bf16.mxu0 0
  %2652 = vmatpush1.bf16.msra.mxu0 0
  %2653 = vmatprep.mubr.bf16.mxu0 0
  %2654 = vmatmul.mubr.bf16.gmra.mrb[0].mxu0 %v2619
  %v2655 = vpop.f32.mrb[0].mxu0
  %v2656 = vadd.f32 %v2606, %v2655
  %v2657 = vpop.f32.mrb[0].mxu0
  %v2658 = vpop.f32.mrb[0].mxu0
  %v2659 = vpop.f32.mrb[0].mxu0
  %2660 = vdwg.mxu0
  %v2661 = vrot.slane %v1954, 6
  %2662 = vrot.lane.b32.xlu0 %v1789, 96
  %v2663 = vpop.permute.xlu0 %2662
  %2664 = vrot.lane.b32.xlu0 %v1790, 96
  %v2665 = vpop.permute.xlu0 %2664
  %v2669 = vsel %vm778, %v2661, 0
  %2671 = vmatprep.subr.bf16.mxu0 0
  %2672 = vmatpush1.bf16.msra.mxu0 %v2663
  %2673 = vmatprep.subr.bf16.mxu0 0
  %2674 = vmatpush1.bf16.msra.mxu0 %v2665
  %2675 = vmatprep.subr.bf16.mxu0 0
  %2676 = vmatpush1.bf16.msra.mxu0 0
  %2677 = vmatprep.subr.bf16.mxu0 0
  %2678 = vmatpush1.bf16.msra.mxu0 0
  %2679 = vmatprep.subr.bf16.mxu0 0
  %2680 = vmatpush1.bf16.msra.mxu0 0
  %2681 = vmatprep.subr.bf16.mxu0 0
  %2682 = vmatpush1.bf16.msra.mxu0 0
  %2683 = vmatprep.subr.bf16.mxu0 0
  %2684 = vmatpush1.bf16.msra.mxu0 0
  %2685 = vmatprep.subr.bf16.mxu0 0
  %2686 = vmatpush1.bf16.msra.mxu0 0
  %2687 = vmatprep.subr.bf16.mxu0 0
  %2688 = vmatpush1.bf16.msra.mxu0 0
  %2689 = vmatprep.subr.bf16.mxu0 0
  %2690 = vmatpush1.bf16.msra.mxu0 0
  %2691 = vmatprep.subr.bf16.mxu0 0
  %2692 = vmatpush1.bf16.msra.mxu0 0
  %2693 = vmatprep.subr.bf16.mxu0 0
  %2694 = vmatpush1.bf16.msra.mxu0 0
  %2695 = vmatprep.subr.bf16.mxu0 0
  %2696 = vmatpush1.bf16.msra.mxu0 0
  %2697 = vmatprep.subr.bf16.mxu0 0
  %2698 = vmatpush1.bf16.msra.mxu0 0
  %2699 = vmatprep.subr.bf16.mxu0 0
  %2700 = vmatpush1.bf16.msra.mxu0 0
  %2701 = vmatprep.subr.bf16.mxu0 0
  %2702 = vmatpush1.bf16.msra.mxu0 0
  %2703 = vmatprep.mubr.bf16.mxu0 0
  %2704 = vmatmul.mubr.bf16.gmra.mrb[0].mxu0 %v2669
  %v2705 = vpop.f32.mrb[0].mxu0
  %v2706 = vadd.f32 0.0, %v2705
  %v2707 = vpop.f32.mrb[0].mxu0
  %v2708 = vpop.f32.mrb[0].mxu0
  %v2709 = vpop.f32.mrb[0].mxu0
  %2710 = vdwg.mxu0
  %v2711 = vadd.f32 %v2656, %v2706
  %v2712 = vrot.slane %v1954, 7
  %2713 = vrot.lane.b32.xlu0 %v1864, 96
  %v2714 = vpop.permute.xlu0 %2713
  %2715 = vrot.lane.b32.xlu0 %v1865, 96
  %v2716 = vpop.permute.xlu0 %2715
  %v2720 = vsel %vm778, %v2712, 0
  %2722 = vmatprep.subr.bf16.mxu0 0
  %2723 = vmatpush1.bf16.msra.mxu0 %v2714
  %2724 = vmatprep.subr.bf16.mxu0 0
  %2725 = vmatpush1.bf16.msra.mxu0 %v2716
  %2726 = vmatprep.subr.bf16.mxu0 0
  %2727 = vmatpush1.bf16.msra.mxu0 0
  %2728 = vmatprep.subr.bf16.mxu0 0
  %2729 = vmatpush1.bf16.msra.mxu0 0
  %2730 = vmatprep.subr.bf16.mxu0 0
  %2731 = vmatpush1.bf16.msra.mxu0 0
  %2732 = vmatprep.subr.bf16.mxu0 0
  %2733 = vmatpush1.bf16.msra.mxu0 0
  %2734 = vmatprep.subr.bf16.mxu0 0
  %2735 = vmatpush1.bf16.msra.mxu0 0
  %2736 = vmatprep.subr.bf16.mxu0 0
  %2737 = vmatpush1.bf16.msra.mxu0 0
  %2738 = vmatprep.subr.bf16.mxu0 0
  %2739 = vmatpush1.bf16.msra.mxu0 0
  %2740 = vmatprep.subr.bf16.mxu0 0
  %2741 = vmatpush1.bf16.msra.mxu0 0
  %2742 = vmatprep.subr.bf16.mxu0 0
  %2743 = vmatpush1.bf16.msra.mxu0 0
  %2744 = vmatprep.subr.bf16.mxu0 0
  %2745 = vmatpush1.bf16.msra.mxu0 0
  %2746 = vmatprep.subr.bf16.mxu0 0
  %2747 = vmatpush1.bf16.msra.mxu0 0
  %2748 = vmatprep.subr.bf16.mxu0 0
  %2749 = vmatpush1.bf16.msra.mxu0 0
  %2750 = vmatprep.subr.bf16.mxu0 0
  %2751 = vmatpush1.bf16.msra.mxu0 0
  %2752 = vmatprep.subr.bf16.mxu0 0
  %2753 = vmatpush1.bf16.msra.mxu0 0
  %2754 = vmatprep.mubr.bf16.mxu0 0
  %2755 = vmatmul.mubr.bf16.gmra.mrb[0].mxu0 %v2720
  %v2756 = vpop.f32.mrb[0].mxu0
  %v2757 = vadd.f32 0.0, %v2756
  %v2758 = vpop.f32.mrb[0].mxu0
  %v2759 = vpop.f32.mrb[0].mxu0
  %v2760 = vpop.f32.mrb[0].mxu0
  %2761 = vdwg.mxu0
  %v2762 = vadd.f32 %v2711, %v2757
  %v2763 = vadd.f32 %v2156, %v2358
  %v2764 = vadd.f32 %v2560, %v2762
  %v2765 = vadd.f32 %v2763, %v2764
  %v2766 = vlaneseq
  %v2767 = vshrl.u32 %v2766, 7
  %v2768 = vsub.s32 1, %v2767
  %v2769 = vrot.slane %v1940, %v2768
  %v2770 = vadd.f32 %v2765, %v2769
  %v2771 = vmax.f32 %v2770, 0.0
  %v2772 = vpack.c.bf16 %v2771, %v2771
  %v2773 = vld [vmem:[%s2 + $0x38] sm:$0xf]
  %v2774 = vld [vmem:[%s2 + $0x3c] sm:$0xf]
  %v2775 = vld [vmem:[%s2 + $0x40] sm:$0xf]
  %v2776 = vld [vmem:[%s2 + $0x44] sm:$0xf]
  %v2777 = vld [vmem:[%s2 + $0x58] sm:$0x4]
  %v2778 = vunpack.c.l.bf16 %v2777
  %v2779 = vlaneseq
  %v2780 = vshrl.u32 %v2779, 7
  %v2781 = vsub.s32 4, %v2780
  %v2782 = vrot.slane %v2778, %v2781
  %v2787 = vunpack.c.l.b16 %v2773
  %v2788 = vunpack.c.l.b16 %v2774
  %v2789 = vunpack.c.l.b16 %v2775
  %v2790 = vunpack.c.l.b16 %v2776
  %v2791 = vpack.c.b16 %v2788, %v2787
  %v2792 = vpack.c.b16 %v2790, %v2789
  %v2796 = vsel %vm778, %v2772, 0
  %2798 = vmatprep.subr.bf16.mxu0 0
  %2799 = vmatpush1.bf16.msra.mxu0 %v2791
  %2800 = vmatprep.subr.bf16.mxu0 0
  %2801 = vmatpush1.bf16.msra.mxu0 %v2792
  %2802 = vmatprep.subr.bf16.mxu0 0
  %2803 = vmatpush1.bf16.msra.mxu0 0
  %2804 = vmatprep.subr.bf16.mxu0 0
  %2805 = vmatpush1.bf16.msra.mxu0 0
  %2806 = vmatprep.subr.bf16.mxu0 0
  %2807 = vmatpush1.bf16.msra.mxu0 0
  %2808 = vmatprep.subr.bf16.mxu0 0
  %2809 = vmatpush1.bf16.msra.mxu0 0
  %2810 = vmatprep.subr.bf16.mxu0 0
  %2811 = vmatpush1.bf16.msra.mxu0 0
  %2812 = vmatprep.subr.bf16.mxu0 0
  %2813 = vmatpush1.bf16.msra.mxu0 0
  %2814 = vmatprep.subr.bf16.mxu0 0
  %2815 = vmatpush1.bf16.msra.mxu0 0
  %2816 = vmatprep.subr.bf16.mxu0 0
  %2817 = vmatpush1.bf16.msra.mxu0 0
  %2818 = vmatprep.subr.bf16.mxu0 0
  %2819 = vmatpush1.bf16.msra.mxu0 0
  %2820 = vmatprep.subr.bf16.mxu0 0
  %2821 = vmatpush1.bf16.msra.mxu0 0
  %2822 = vmatprep.subr.bf16.mxu0 0
  %2823 = vmatpush1.bf16.msra.mxu0 0
  %2824 = vmatprep.subr.bf16.mxu0 0
  %2825 = vmatpush1.bf16.msra.mxu0 0
  %2826 = vmatprep.subr.bf16.mxu0 0
  %2827 = vmatpush1.bf16.msra.mxu0 0
  %2828 = vmatprep.subr.bf16.mxu0 0
  %2829 = vmatpush1.bf16.msra.mxu0 0
  %2830 = vmatprep.mubr.bf16.mxu0 0
  %2831 = vmatmul.mubr.bf16.gmra.mrb[0].mxu0 %v2796
  %v2832 = vpop.f32.mrb[0].mxu0
  %v2833 = vadd.f32 %v2782, %v2832
  %v2834 = vpop.f32.mrb[0].mxu0
  %v2835 = vpop.f32.mrb[0].mxu0
  %v2836 = vpop.f32.mrb[0].mxu0
  %2837 = vdwg.mxu0
  %v2838 = vld [vmem:[%s3] sm:$0x3]
  %v2839 = vpack.c.bf16 %v2838, %v2838
  %v2840 = vld [vmem:[%s2 + $0x30] sm:$0xf]
  %v2841 = vld [vmem:[%s2 + $0x58] sm:$0x2]
  %v2842 = vunpack.c.l.bf16 %v2841
  %v2843 = vlaneseq
  %v2844 = vshrl.u32 %v2843, 7
  %v2845 = vsub.s32 2, %v2844
  %v2846 = vrot.slane %v2842, %v2845
  %vm2847 = vcmask 64512
  %v2849 = vsel %vm2847, %v2839, 0
  %vm2851 = vcmask 1043456
  %v2853 = vsel %vm2851, %v2840, 0
  %2855 = vmatprep.subr.bf16.mxu0 0
  %2856 = vmatpush1.bf16.msra.mxu0 %v2853
  %2857 = vmatprep.subr.bf16.mxu0 0
  %2858 = vmatpush1.bf16.msra.mxu0 0
  %2859 = vmatprep.subr.bf16.mxu0 0
  %2860 = vmatpush1.bf16.msra.mxu0 0
  %2861 = vmatprep.subr.bf16.mxu0 0
  %2862 = vmatpush1.bf16.msra.mxu0 0
  %2863 = vmatprep.subr.bf16.mxu0 0
  %2864 = vmatpush1.bf16.msra.mxu0 0
  %2865 = vmatprep.subr.bf16.mxu0 0
  %2866 = vmatpush1.bf16.msra.mxu0 0
  %2867 = vmatprep.subr.bf16.mxu0 0
  %2868 = vmatpush1.bf16.msra.mxu0 0
  %2869 = vmatprep.subr.bf16.mxu0 0
  %2870 = vmatpush1.bf16.msra.mxu0 0
  %2871 = vmatprep.subr.bf16.mxu0 0
  %2872 = vmatpush1.bf16.msra.mxu0 0
  %2873 = vmatprep.subr.bf16.mxu0 0
  %2874 = vmatpush1.bf16.msra.mxu0 0
  %2875 = vmatprep.subr.bf16.mxu0 0
  %2876 = vmatpush1.bf16.msra.mxu0 0
  %2877 = vmatprep.subr.bf16.mxu0 0
  %2878 = vmatpush1.bf16.msra.mxu0 0
  %2879 = vmatprep.subr.bf16.mxu0 0
  %2880 = vmatpush1.bf16.msra.mxu0 0
  %2881 = vmatprep.subr.bf16.mxu0 0
  %2882 = vmatpush1.bf16.msra.mxu0 0
  %2883 = vmatprep.subr.bf16.mxu0 0
  %2884 = vmatpush1.bf16.msra.mxu0 0
  %2885 = vmatprep.subr.bf16.mxu0 0
  %2886 = vmatpush1.bf16.msra.mxu0 0
  %2887 = vmatprep.mubr.bf16.mxu0 0
  %2888 = vmatmul.mubr.bf16.gmra.mrb[0].mxu0 %v2849
  %v2889 = vpop.f32.mrb[0].mxu0
  %v2890 = vadd.f32 %v2846, %v2889
  %v2891 = vpop.f32.mrb[0].mxu0
  %v2892 = vpop.f32.mrb[0].mxu0
  %v2893 = vpop.f32.mrb[0].mxu0
  %2894 = vdwg.mxu0
  %v2895 = vmax.f32 %v2890, 0.0
  %v2896 = vpack.c.bf16 %v2895, %v2895
  %v2897 = vld [vmem:[%s2 + $0x20] sm:$0xf]
  %v2898 = vld [vmem:[%s2 + $0x24] sm:$0xf]
  %v2899 = vld [vmem:[%s2 + $0x28] sm:$0xf]
  %v2900 = vld [vmem:[%s2 + $0x2c] sm:$0xf]
  %v2901 = vlaneseq
  %v2902 = vshrl.u32 %v2901, 7
  %v2903 = vsub.s32 3, %v2902
  %v2904 = vrot.slane %v2842, %v2903
  %v2909 = vunpack.c.l.b16 %v2897
  %v2910 = vunpack.c.l.b16 %v2898
  %v2911 = vunpack.c.l.b16 %v2899
  %v2912 = vunpack.c.l.b16 %v2900
  %v2913 = vpack.c.b16 %v2910, %v2909
  %v2914 = vpack.c.b16 %v2912, %v2911
  %v2918 = vsel %vm778, %v2896, 0
  %2920 = vmatprep.subr.bf16.mxu0 0
  %2921 = vmatpush1.bf16.msra.mxu0 %v2913
  %2922 = vmatprep.subr.bf16.mxu0 0
  %2923 = vmatpush1.bf16.msra.mxu0 %v2914
  %2924 = vmatprep.subr.bf16.mxu0 0
  %2925 = vmatpush1.bf16.msra.mxu0 0
  %2926 = vmatprep.subr.bf16.mxu0 0
  %2927 = vmatpush1.bf16.msra.mxu0 0
  %2928 = vmatprep.subr.bf16.mxu0 0
  %2929 = vmatpush1.bf16.msra.mxu0 0
  %2930 = vmatprep.subr.bf16.mxu0 0
  %2931 = vmatpush1.bf16.msra.mxu0 0
  %2932 = vmatprep.subr.bf16.mxu0 0
  %2933 = vmatpush1.bf16.msra.mxu0 0
  %2934 = vmatprep.subr.bf16.mxu0 0
  %2935 = vmatpush1.bf16.msra.mxu0 0
  %2936 = vmatprep.subr.bf16.mxu0 0
  %2937 = vmatpush1.bf16.msra.mxu0 0
  %2938 = vmatprep.subr.bf16.mxu0 0
  %2939 = vmatpush1.bf16.msra.mxu0 0
  %2940 = vmatprep.subr.bf16.mxu0 0
  %2941 = vmatpush1.bf16.msra.mxu0 0
  %2942 = vmatprep.subr.bf16.mxu0 0
  %2943 = vmatpush1.bf16.msra.mxu0 0
  %2944 = vmatprep.subr.bf16.mxu0 0
  %2945 = vmatpush1.bf16.msra.mxu0 0
  %2946 = vmatprep.subr.bf16.mxu0 0
  %2947 = vmatpush1.bf16.msra.mxu0 0
  %2948 = vmatprep.subr.bf16.mxu0 0
  %2949 = vmatpush1.bf16.msra.mxu0 0
  %2950 = vmatprep.subr.bf16.mxu0 0
  %2951 = vmatpush1.bf16.msra.mxu0 0
  %2952 = vmatprep.mubr.bf16.mxu0 0
  %2953 = vmatmul.mubr.bf16.gmra.mrb[0].mxu0 %v2918
  %v2954 = vpop.f32.mrb[0].mxu0
  %v2955 = vadd.f32 %v2904, %v2954
  %v2956 = vpop.f32.mrb[0].mxu0
  %v2957 = vpop.f32.mrb[0].mxu0
  %v2958 = vpop.f32.mrb[0].mxu0
  %2959 = vdwg.mxu0
  %v2960 = vmax.f32 %v2955, 0.0
  %v2961 = vpack.c.bf16 %v2960, %v2960
  %v2962 = vld [vmem:[%s2 + $0x48] sm:$0xf]
  %v2963 = vld [vmem:[%s2 + $0x4c] sm:$0xf]
  %v2964 = vld [vmem:[%s2 + $0x50] sm:$0xf]
  %v2965 = vld [vmem:[%s2 + $0x54] sm:$0xf]
  %v2966 = vlaneseq
  %v2967 = vshrl.u32 %v2966, 7
  %v2968 = vsub.s32 5, %v2967
  %v2969 = vrot.slane %v2778, %v2968
  %v2974 = vunpack.c.l.b16 %v2962
  %v2975 = vunpack.c.l.b16 %v2963
  %v2976 = vunpack.c.l.b16 %v2964
  %v2977 = vunpack.c.l.b16 %v2965
  %v2978 = vpack.c.b16 %v2975, %v2974
  %v2979 = vpack.c.b16 %v2977, %v2976
  %v2983 = vsel %vm778, %v2961, 0
  %2985 = vmatprep.subr.bf16.mxu0 0
  %2986 = vmatpush1.bf16.msra.mxu0 %v2978
  %2987 = vmatprep.subr.bf16.mxu0 0
  %2988 = vmatpush1.bf16.msra.mxu0 %v2979
  %2989 = vmatprep.subr.bf16.mxu0 0
  %2990 = vmatpush1.bf16.msra.mxu0 0
  %2991 = vmatprep.subr.bf16.mxu0 0
  %2992 = vmatpush1.bf16.msra.mxu0 0
  %2993 = vmatprep.subr.bf16.mxu0 0
  %2994 = vmatpush1.bf16.msra.mxu0 0
  %2995 = vmatprep.subr.bf16.mxu0 0
  %2996 = vmatpush1.bf16.msra.mxu0 0
  %2997 = vmatprep.subr.bf16.mxu0 0
  %2998 = vmatpush1.bf16.msra.mxu0 0
  %2999 = vmatprep.subr.bf16.mxu0 0
  %3000 = vmatpush1.bf16.msra.mxu0 0
  %3001 = vmatprep.subr.bf16.mxu0 0
  %3002 = vmatpush1.bf16.msra.mxu0 0
  %3003 = vmatprep.subr.bf16.mxu0 0
  %3004 = vmatpush1.bf16.msra.mxu0 0
  %3005 = vmatprep.subr.bf16.mxu0 0
  %3006 = vmatpush1.bf16.msra.mxu0 0
  %3007 = vmatprep.subr.bf16.mxu0 0
  %3008 = vmatpush1.bf16.msra.mxu0 0
  %3009 = vmatprep.subr.bf16.mxu0 0
  %3010 = vmatpush1.bf16.msra.mxu0 0
  %3011 = vmatprep.subr.bf16.mxu0 0
  %3012 = vmatpush1.bf16.msra.mxu0 0
  %3013 = vmatprep.subr.bf16.mxu0 0
  %3014 = vmatpush1.bf16.msra.mxu0 0
  %3015 = vmatprep.subr.bf16.mxu0 0
  %3016 = vmatpush1.bf16.msra.mxu0 0
  %3017 = vmatprep.mubr.bf16.mxu0 0
  %3018 = vmatmul.mubr.bf16.gmra.mrb[0].mxu0 %v2983
  %v3019 = vpop.f32.mrb[0].mxu0
  %v3020 = vadd.f32 %v2969, %v3019
  %v3021 = vpop.f32.mrb[0].mxu0
  %v3022 = vpop.f32.mrb[0].mxu0
  %v3023 = vpop.f32.mrb[0].mxu0
  %3024 = vdwg.mxu0
  %v3025 = vlaneseq
  %v3026 = vand.u32 %v3025, 127
  %vm3027 = vcmp.lt.s32.totalorder %v3026, 2
  %vm3028 = vcmp.ge.s32.totalorder %v3026, 2
  %vm3029 = vcmp.lt.s32.totalorder %v3026, 4
  %vm3030 = vmand %vm3028, %vm3029
  %vm3031 = vcmp.ge.s32.totalorder %v3026, 4
  %vm3032 = vcmp.lt.s32.totalorder %v3026, 6
  %vm3033 = vmand %vm3031, %vm3032
  %v3034 = vmax.f32 %v2833, 0.0
  %v3035 = vand.u32 2147483647, %v2833
  %v3036 = vsub.f32 0.0, %v3035
  %v3037 = vmul.f32 %v3036, 1.442695
  %v3038 = vpow.pop %v3037
  %v3039 = vadd.f32 %v3038, 1.0
  %v3040 = vlog2.pop %v3039
  %v3041 = vmul.f32 %v3040, 0.6931472
  %v3042 = vadd.f32 %v3034, %v3041
  %v3043 = vmax.f32 %v3020, 0.0
  %v3044 = vand.u32 2147483647, %v3020
  %v3045 = vsub.f32 0.0, %v3044
  %v3046 = vmul.f32 %v3045, 1.442695
  %v3047 = vpow.pop %v3046
  %v3048 = vadd.f32 %v3047, 1.0
  %v3049 = vlog2.pop %v3048
  %v3050 = vmul.f32 %v3049, 0.6931472
  %v3051 = vadd.f32 %v3043, %v3050
  %v3052 = vsel %vm3030, %v3042, -inf
  %vm3053 = vcmask 1041408
  %v3054 = vsel %vm3053, %v3052, -inf
  %3055 = vmax.xlane.f32.xlu0 %v3054
  %v3056 = vpop.xlane.xlu0 %3055
  %v3057 = vsel %vm3033, %v3051, -inf
  %v3058 = vsel %vm3053, %v3057, -inf
  %3059 = vmax.xlane.f32.xlu0 %v3058
  %v3060 = vpop.xlane.xlu0 %3059
  %vm3061 = vcmp.gt.f32.partialorder %v3056, %v3060
  %v3062 = vsel %vm3061, 1, 0
  %vm3063 = vcmp.eq.s32.totalorder %v3062, 1
  %v3064 = vsel %vm3063, %v3020, %v2833
  %v3065 = vsel %vm3027, %v3064, 0.0
  %v3066 = vsel %vm3030, %v3042, 0.0
  %v3067 = vadd.f32 %v3065, %v3066
  %v3068 = vsel %vm3033, %v3051, 0.0
  %v3069 = vadd.f32 %v3067, %v3068
  %3070 = vst [vmem:[%s4] sm:$0x3] %v3069
  // Predicated region
  $region18: #{forward.1} parent=0 // pred_check
    _
  $region19: #{forward.1} parent=0 // pred_check_branch
    %3072 = sbr.rel (0) target = $region21
  $region20: #{forward.1} parent=0 // pred_region
    _
  $region21: #{forward.1} parent=0 // pred_fallthru
    _
  // Predicated region
  $region22: #{forward.1} parent=0 // pred_check
    _
  $region23: #{forward.1} parent=0 // pred_check_branch
    %3074 = sbr.rel (0) target = $region25
  $region24: #{forward.1} parent=0 // pred_region
    _
  $region25: #{forward.1} parent=0 // pred_fallthru
    _

</llo_original>
